<compile_context>
chip_gen: v5e
topology: v5e:2x2
jax: 0.10.0
libtpu: 0.0.40
codegen_flags: <defaults>
</compile_context>

<pallas_src>
import math

import jax
import jax.numpy as jnp
from jax import lax
from jax.experimental import pallas as pl
from jax.experimental.pallas import tpu as pltpu


# ----------------------------- fused Pallas kernel -------------------------

def _feature_kernel(p_ref, w1_ref, s1_ref, a1_ref, w2_ref, s2_ref, a2_ref,
                    o_ref, xflat_ref, x4_ref):
    """One image per grid step.

    p_ref:   (1, 896, 16) bf16  conv1 im2col patches.
                                row r = dj*448 + oi*16 + pj  (dj = output-col
                                parity, oi in [0,28), pj in [0,16) wide),
                                col t = ki*4 + kj.
    w1_ref:  (16, 64)     bf16  conv1 weight, BN scale folded in.
    s1/a1:   (1, 64)      f32   conv1 shift (bias*scale+beta) / PReLU slope.
    w2_ref:  (4, 256, 64) bf16  conv2 weight grouped (ki, kj*64+cin, cout).
    s2/a2:   (1, 64)      f32
    o_ref:   (1, 104, 128) f32  lane-dense output: lanes [0:64) = wide rows
                                0..103, lanes [64:128) = wide rows 104..207.
    xflat_ref: (272, 64)  f32   scratch: zero-padded pooled act, row l = i*16+j.
    x4_ref:    (256, 256) bf16  scratch: kj-grouped conv2 operand (K = 256).
    """
    # ---- Stage 1: conv1 + BN + PReLU as ONE MXU matmul over all 16 taps ----
    y = jnp.dot(p_ref[0], w1_ref[...], preferred_element_type=jnp.float32)
    y = y + s1_ref[...]
    y = jnp.where(y >= 0.0, y, a1_ref[...] * y)            # (896, 64) f32

    # ---- MaxPool2d(2): aligned slices + leading reshapes only --------------
    y = jnp.maximum(y[:448, :], y[448:, :])                 # column-pair max
    y = y.reshape(14, 2, 16, 64)                            # free reshape
    pooled = jnp.maximum(y[:, 0], y[:, 1])                  # row-pair max -> (14,16,64)

    # zero the 2 junk wide columns (pj = 14,15) so they double as conv2's
    # zero padding when the slab is stored contiguously below.
    col = lax.broadcasted_iota(jnp.int32, (14, 16, 64), 1)
    pooled = jnp.where(col < 14, pooled, 0.0)
    # TODO(synk): Dropout2d(0.1) is identity in eval mode; training-mode channel
    # masking not implemented.

    # ---- hand off through VMEM scratch (no HBM round trip) -----------------
    # xflat row l = i*16 + j of the (16,16) zero-padded pooled map; the pooled
    # slab lands contiguously at offset 17 because wide width == padded width.
    xflat_ref[...] = jnp.zeros_like(xflat_ref)
    xflat_ref[pl.ds(17, 224), :] = pooled.reshape(224, 64)

    # ---- Stage 2: conv2 + BN + PReLU with kj taps grouped into K = 256 ------
    # x4[r, kj*64+cin] = xflat[r+kj, cin]; built in two 128-lane halves so the
    # scratch stores are whole-vreg lane-aligned.
    for h in range(2):
        left = xflat_ref[pl.ds(2 * h, 256), :].astype(jnp.bfloat16)
        right = xflat_ref[pl.ds(2 * h + 1, 256), :].astype(jnp.bfloat16)
        x4_ref[:, h * 128:(h + 1) * 128] = jnp.concatenate([left, right], axis=-1)

    # 4 matmuls (208,256)x(256,64); slice offsets 0/16/32/48 are sublane- and
    # bf16-packing-aligned.  Only 4 unrolled taps -> small live ranges.
    acc = jnp.zeros((208, 64), jnp.float32)
    for ki in range(4):
        acc = acc + jnp.dot(x4_ref[pl.ds(16 * ki, 208), :], w2_ref[ki],
                            preferred_element_type=jnp.float32)
    y2 = acc + s2_ref[...]
    y2 = jnp.where(y2 >= 0.0, y2, a2_ref[...] * y2)         # (208, 64) f32
    # TODO(synk): Dropout2d(0.3) is identity in eval mode.

    # ---- lane-dense (128-wide) store ----------------------------------------
    o_ref[0] = jnp.concatenate([y2[:104, :], y2[104:, :]], axis=-1)


# ----------------------------- JAX wrapper ---------------------------------

def feature_forward(x_nchw, p):
    b = x_nchw.shape[0]
    x = x_nchw[:, 0, :, :].astype(jnp.float32)               # (B, 28, 28), Cin==1

    # conv1 im2col (host-side, see header).  Row order: even output columns
    # first (dj=0), then odd (dj=1), so in-kernel pooling is a pair of aligned
    # half-slab maxes.  Padded image: rows +2/+2, cols +2/+6 (strided slices
    # need indices up to 34).
    xp = jnp.pad(x, ((0, 0), (2, 2), (2, 6)))                # (B, 32, 36)
    halves = []
    for dj in range(2):
        taps = [xp[:, ki:ki + 28, kj + dj:kj + dj + 32:2]    # (B, 28, 16)
                for ki in range(4) for kj in range(4)]
        halves.append(jnp.stack(taps, axis=-1))              # (B, 28, 16, 16)
    patches = jnp.stack(halves, axis=1).reshape(b, 896, 16).astype(jnp.bfloat16)

    flops = b * (2 * 896 * 16 * 64 + 2 * 4 * 208 * 256 * 64)
    bytes_accessed = (patches.size * 2 + p["w1"].size * 2 + p["w2"].size * 2
                      + 4 * 64 * 4 + b * 104 * 128 * 4)

    out = pl.pallas_call(
        _feature_kernel,
        out_shape=jax.ShapeDtypeStruct((b, 104, 128), jnp.float32),
        grid_spec=pltpu.PrefetchScalarGridSpec(
            num_scalar_prefetch=0,
            grid=(b,),                                       # 1 image / step
            in_specs=[
                pl.BlockSpec((1, 896, 16), lambda i: (i, 0, 0)),
                pl.BlockSpec((16, 64), lambda i: (0, 0)),        # resident weights
                pl.BlockSpec((1, 64), lambda i: (0, 0)),
                pl.BlockSpec((1, 64), lambda i: (0, 0)),
                pl.BlockSpec((4, 256, 64), lambda i: (0, 0, 0)), # resident weights
                pl.BlockSpec((1, 64), lambda i: (0, 0)),
                pl.BlockSpec((1, 64), lambda i: (0, 0)),
            ],
            out_specs=pl.BlockSpec((1, 104, 128), lambda i: (i, 0, 0)),
            scratch_shapes=[
                pltpu.VMEM((272, 64), jnp.float32),          # padded pooled act
                pltpu.VMEM((256, 256), jnp.bfloat16),        # kj-grouped operand
            ],
        ),
        compiler_params=pltpu.CompilerParams(
            # With B>=2 both v7x TensorCores get an image each; harmless on
            # single-TC v5e/v6e.
            dimension_semantics=("parallel",),
        ),
        cost_estimate=pl.CostEstimate(flops=flops, transcendentals=0,
                                      bytes_accessed=bytes_accessed),
    )(patches, p["w1"], p["shift1"], p["alpha1"],
      p["w2"], p["shift2"], p["alpha2"])

    # Unpack lane-dense output -> wide rows -> (B, 13, 13, 64) -> NCHW.
    y = jnp.concatenate([out[..., :64], out[..., 64:]], axis=1)   # (B, 208, 64)
    y = y.reshape(b, 13, 16, 64)[:, :, :13, :]                    # drop junk cols
    return jnp.transpose(y, (0, 3, 1, 2))                         # (B, 64, 13, 13)


# ----------------------------- parameters ----------------------------------

def init_params(key):
    ks = jax.random.split(key, 8)
    eps = 1e-5

    def u(k, shape, fan_in):
        lim = 1.0 / math.sqrt(fan_in)
        return jax.random.uniform(k, shape, jnp.float32, -lim, lim)

    p = {}
    # conv1: Conv2d(1,64,k=4,p=2).  Weight stored as (ki*4+kj, Cout).  NOTE:
    # real PyTorch weights (Cout,Cin,kh,kw) must be permuted to (kh,kw,Cin,Cout)
    # then reshaped to match this layout.  BN fold below assumes running
    # stats (0, 1); for trained stats use scale = gamma/sqrt(var+eps),
    # shift = (bias - mean)*scale + beta.
    w1 = u(ks[0], (16, 64), 16)
    b1 = u(ks[1], (64,), 16)
    g1 = 1.0 + 0.1 * jax.random.normal(ks[2], (64,), jnp.float32)
    be1 = 0.1 * jax.random.normal(ks[3], (64,), jnp.float32)
    s1 = g1 / jnp.sqrt(1.0 + eps)
    p["w1"] = (w1 * s1[None, :]).astype(jnp.bfloat16)
    p["shift1"] = (b1 * s1 + be1).reshape(1, 64)
    p["alpha1"] = jnp.full((1, 64), 0.25, jnp.float32)     # nn.PReLU() default

    # conv2: Conv2d(64,64,k=4,p=1).  Weight (ki,kj,cin,cout) -> (4, 256, 64)
    # so the contraction index is kj*64 + cin (matches the kernel's x4 layout).
    w2 = u(ks[4], (4, 4, 64, 64), 4 * 4 * 64)
    b2 = u(ks[5], (64,), 4 * 4 * 64)
    g2 = 1.0 + 0.1 * jax.random.normal(ks[6], (64,), jnp.float32)
    be2 = 0.1 * jax.random.normal(ks[7], (64,), jnp.float32)
    s2 = g2 / jnp.sqrt(1.0 + eps)
    p["w2"] = (w2 * s2[None, None, None, :]).reshape(4, 256, 64).astype(jnp.bfloat16)
    p["shift2"] = (b2 * s2 + be2).reshape(1, 64)
    p["alpha2"] = jnp.full((1, 64), 0.25, jnp.float32)
    return p


# ----------------------------- pure-JAX reference --------------------------

def feature_reference(x_nchw, p):
    """Eval-mode reference with the same folded params and bf16 casts."""
    x = x_nchw[:, 0, :, :].astype(jnp.float32)
    xb = x.astype(jnp.bfloat16).astype(jnp.float32)[..., None]      # (B,28,28,1)
    w1 = p["w1"].astype(jnp.float32).reshape(4, 4, 1, 64)           # HWIO
    y = lax.conv_general_dilated(xb, w1, (1, 1), ((2, 2), (2, 2)),
                                 dimension_numbers=("NHWC", "HWIO", "NHWC"),
                                 precision=lax.Precision.HIGHEST,
                                 preferred_element_type=jnp.float32)  # (B,29,29,64)
    y = y + p["shift1"].reshape(1, 1, 1, 64)
    y = jnp.where(y >= 0, y, p["alpha1"].reshape(1, 1, 1, 64) * y)
    y = y[:, :28, :28, :]
    b = y.shape[0]
    pooled = jnp.max(y.reshape(b, 14, 2, 14, 2, 64), axis=(2, 4))    # (B,14,14,64)
    pb = pooled.astype(jnp.bfloat16).astype(jnp.float32)
    w2 = p["w2"].astype(jnp.float32).reshape(4, 4, 64, 64)           # HWIO
    y2 = lax.conv_general_dilated(pb, w2, (1, 1), ((1, 1), (1, 1)),
                                  dimension_numbers=("NHWC", "HWIO", "NHWC"),
                                  precision=lax.Precision.HIGHEST,
                                  preferred_element_type=jnp.float32)  # (B,13,13,64)
    y2 = y2 + p["shift2"].reshape(1, 1, 1, 64)
    y2 = jnp.where(y2 >= 0, y2, p["alpha2"].reshape(1, 1, 1, 64) * y2)
    return jnp.transpose(y2, (0, 3, 1, 2))                           # (B,64,13,13)


if __name__ == "__main__":
    key = jax.random.PRNGKey(0)
    kx, kp = jax.random.split(key)
    x = jax.random.normal(kx, (2, 1, 28, 28), jnp.float32)   # MNIST-sized input
    params = init_params(kp)

    out = jax.block_until_ready(jax.jit(feature_forward)(x, params))
    assert out.shape == (2, 64, 13, 13), out.shape
    assert bool(jnp.all(jnp.isfinite(out)))

    ref = jax.block_until_ready(jax.jit(feature_reference)(x, params))
    err = float(jnp.max(jnp.abs(out - ref)))
    assert err < 5e-2, f"max abs err vs reference: {err}"

    print("KERNEL_OK")
</pallas_src>

<mosaic_0001>
module attributes {stable_mosaic.version = 11 : i64} {
  func.func @_feature_kernel(%arg0: i32, %arg1: memref<1x896x16xbf16, #tpu.memory_space<vmem>>, %arg2: memref<16x64xbf16, #tpu.memory_space<vmem>>, %arg3: memref<1x64xf32, #tpu.memory_space<vmem>>, %arg4: memref<1x64xf32, #tpu.memory_space<vmem>>, %arg5: memref<4x256x64xbf16, #tpu.memory_space<vmem>>, %arg6: memref<1x64xf32, #tpu.memory_space<vmem>>, %arg7: memref<1x64xf32, #tpu.memory_space<vmem>>, %arg8: memref<1x104x128xf32, #tpu.memory_space<vmem>>, %arg9: memref<272x64xf32, #tpu.memory_space<vmem>>, %arg10: memref<256x256xbf16, #tpu.memory_space<vmem>>) attributes {dimension_semantics = [#tpu.dimension_semantics<parallel>], iteration_bounds = array<i64: 2>, scalar_prefetch = 0 : i64, scratch_operands = 2 : i64, tpu.core_type = #tpu.core_type<tc>, window_params = [{transform_indices = @transform_0, window_bounds = array<i64: 1, 896, 16>}, {pipeline_mode = #tpu.pipeline_mode<synchronous>, transform_indices = @transform_1, window_bounds = array<i64: 16, 64>}, {pipeline_mode = #tpu.pipeline_mode<synchronous>, transform_indices = @transform_2, window_bounds = array<i64: 1, 64>}, {pipeline_mode = #tpu.pipeline_mode<synchronous>, transform_indices = @transform_3, window_bounds = array<i64: 1, 64>}, {pipeline_mode = #tpu.pipeline_mode<synchronous>, transform_indices = @transform_4, window_bounds = array<i64: 4, 256, 64>}, {pipeline_mode = #tpu.pipeline_mode<synchronous>, transform_indices = @transform_5, window_bounds = array<i64: 1, 64>}, {pipeline_mode = #tpu.pipeline_mode<synchronous>, transform_indices = @transform_6, window_bounds = array<i64: 1, 64>}, {transform_indices = @transform_7, window_bounds = array<i64: 1, 104, 128>}]} {
    %c0 = arith.constant 0 : index
    %c0_0 = arith.constant 0 : index
    %c0_1 = arith.constant 0 : index
    %0 = vector.load %arg1[%c0, %c0_0, %c0_1] : memref<1x896x16xbf16, #tpu.memory_space<vmem>>, vector<1x896x16xbf16>
    %1 = vector.shape_cast %0 : vector<1x896x16xbf16> to vector<896x16xbf16>
    %c0_2 = arith.constant 0 : index
    %c0_3 = arith.constant 0 : index
    %2 = vector.load %arg2[%c0_2, %c0_3] : memref<16x64xbf16, #tpu.memory_space<vmem>>, vector<16x64xbf16>
    %cst = arith.constant dense<0.000000e+00> : vector<896x64xf32>
    %3 = tpu.matmul %1, %2, %cst {dimension_numbers = #tpu.dot_dimension_numbers<[1], [0], [0], [1], [0, 0, 1, 1], [], []>} : vector<896x16xbf16>, vector<16x64xbf16>, vector<896x64xf32> -> vector<896x64xf32>
    %c0_4 = arith.constant 0 : index
    %c0_5 = arith.constant 0 : index
    %4 = vector.load %arg3[%c0_4, %c0_5] : memref<1x64xf32, #tpu.memory_space<vmem>>, vector<1x64xf32>
    %5 = vector.broadcast %4 : vector<1x64xf32> to vector<896x64xf32>
    %6 = arith.addf %3, %5 : vector<896x64xf32>
    %cst_6 = arith.constant 0.000000e+00 : f32
    %7 = vector.broadcast %cst_6 : f32 to vector<896x64xf32>
    %8 = arith.cmpf oge, %6, %7 : vector<896x64xf32>
    %c0_7 = arith.constant 0 : index
    %c0_8 = arith.constant 0 : index
    %9 = vector.load %arg4[%c0_7, %c0_8] : memref<1x64xf32, #tpu.memory_space<vmem>>, vector<1x64xf32>
    %10 = vector.broadcast %9 : vector<1x64xf32> to vector<896x64xf32>
    %11 = arith.mulf %10, %6 : vector<896x64xf32>
    %12 = arith.select %8, %6, %11 : vector<896x64xi1>, vector<896x64xf32>
    %13 = vector.extract_strided_slice %12 {offsets = [0, 0], sizes = [448, 64], strides = [1, 1]} : vector<896x64xf32> to vector<448x64xf32>
    %14 = vector.extract_strided_slice %12 {offsets = [448, 0], sizes = [448, 64], strides = [1, 1]} : vector<896x64xf32> to vector<448x64xf32>
    %15 = arith.maximumf %13, %14 : vector<448x64xf32>
    %16 = vector.shape_cast %15 : vector<448x64xf32> to vector<14x2x16x64xf32>
    %17 = vector.extract_strided_slice %16 {offsets = [0, 0, 0, 0], sizes = [14, 1, 16, 64], strides = [1, 1, 1, 1]} : vector<14x2x16x64xf32> to vector<14x1x16x64xf32>
    %18 = vector.shape_cast %17 : vector<14x1x16x64xf32> to vector<14x16x64xf32>
    %19 = vector.extract_strided_slice %16 {offsets = [0, 1, 0, 0], sizes = [14, 1, 16, 64], strides = [1, 1, 1, 1]} : vector<14x2x16x64xf32> to vector<14x1x16x64xf32>
    %20 = vector.shape_cast %19 : vector<14x1x16x64xf32> to vector<14x16x64xf32>
    %21 = arith.maximumf %18, %20 : vector<14x16x64xf32>
    %22 = tpu.iota {dimensions = array<i32: 1>} : vector<14x16x64xi32>
    %c14_i32 = arith.constant 14 : i32
    %23 = vector.broadcast %c14_i32 : i32 to vector<14x16x64xi32>
    %24 = arith.cmpi slt, %22, %23 : vector<14x16x64xi32>
    %cst_9 = arith.constant 0.000000e+00 : f32
    %25 = vector.broadcast %cst_9 : f32 to vector<14x16x64xf32>
    %26 = arith.select %24, %21, %25 : vector<14x16x64xi1>, vector<14x16x64xf32>
    %cst_10 = arith.constant 0.000000e+00 : f32
    %27 = vector.broadcast %cst_10 : f32 to vector<272x64xf32>
    %c0_11 = arith.constant 0 : index
    %c0_12 = arith.constant 0 : index
    %28 = vector.load %arg9[%c0_11, %c0_12] : memref<272x64xf32, #tpu.memory_space<vmem>>, vector<272x64xf32>
    tpu.vector_store %arg9[%c0_11, %c0_12], %27 {strides = array<i32>} : memref<272x64xf32, #tpu.memory_space<vmem>>, vector<272x64xf32>,
    %29 = vector.shape_cast %26 : vector<14x16x64xf32> to vector<224x64xf32>
    %c17 = arith.constant 17 : index
    %c0_13 = arith.constant 0 : index
    %30 = vector.load %arg9[%c17, %c0_13] : memref<272x64xf32, #tpu.memory_space<vmem>>, vector<224x64xf32>
    tpu.vector_store %arg9[%c17, %c0_13], %29 {strides = array<i32>} : memref<272x64xf32, #tpu.memory_space<vmem>>, vector<224x64xf32>,
    %c0_14 = arith.constant 0 : index
    %c0_15 = arith.constant 0 : index
    %31 = vector.load %arg9[%c0_14, %c0_15] : memref<272x64xf32, #tpu.memory_space<vmem>>, vector<256x64xf32>
    %32 = arith.truncf %31 : vector<256x64xf32> to vector<256x64xbf16>
    %c1 = arith.constant 1 : index
    %c0_16 = arith.constant 0 : index
    %33 = vector.load %arg9[%c1, %c0_16] : memref<272x64xf32, #tpu.memory_space<vmem>>, vector<256x64xf32>
    %34 = arith.truncf %33 : vector<256x64xf32> to vector<256x64xbf16>
    %35 = tpu.concatenate %32, %34 in 1 : vector<256x64xbf16>, vector<256x64xbf16> -> vector<256x128xbf16>
    %c0_17 = arith.constant 0 : index
    %c0_18 = arith.constant 0 : index
    %36 = vector.load %arg10[%c0_17, %c0_18] : memref<256x256xbf16, #tpu.memory_space<vmem>>, vector<256x128xbf16>
    tpu.vector_store %arg10[%c0_17, %c0_18], %35 {strides = array<i32>} : memref<256x256xbf16, #tpu.memory_space<vmem>>, vector<256x128xbf16>,
    %c2 = arith.constant 2 : index
    %c0_19 = arith.constant 0 : index
    %37 = vector.load %arg9[%c2, %c0_19] : memref<272x64xf32, #tpu.memory_space<vmem>>, vector<256x64xf32>
    %38 = arith.truncf %37 : vector<256x64xf32> to vector<256x64xbf16>
    %c3 = arith.constant 3 : index
    %c0_20 = arith.constant 0 : index
    %39 = vector.load %arg9[%c3, %c0_20] : memref<272x64xf32, #tpu.memory_space<vmem>>, vector<256x64xf32>
    %40 = arith.truncf %39 : vector<256x64xf32> to vector<256x64xbf16>
    %41 = tpu.concatenate %38, %40 in 1 : vector<256x64xbf16>, vector<256x64xbf16> -> vector<256x128xbf16>
    %c0_21 = arith.constant 0 : index
    %c128 = arith.constant 128 : index
    %42 = vector.load %arg10[%c0_21, %c128] : memref<256x256xbf16, #tpu.memory_space<vmem>>, vector<256x128xbf16>
    tpu.vector_store %arg10[%c0_21, %c128], %41 {strides = array<i32>} : memref<256x256xbf16, #tpu.memory_space<vmem>>, vector<256x128xbf16>,
    %cst_22 = arith.constant 0.000000e+00 : f32
    %43 = vector.broadcast %cst_22 : f32 to vector<208x64xf32>
    %c0_23 = arith.constant 0 : index
    %c0_24 = arith.constant 0 : index
    %44 = vector.load %arg10[%c0_23, %c0_24] : memref<256x256xbf16, #tpu.memory_space<vmem>>, vector<208x256xbf16>
    %c0_25 = arith.constant 0 : index
    %c0_26 = arith.constant 0 : index
    %c0_27 = arith.constant 0 : index
    %45 = vector.load %arg5[%c0_25, %c0_26, %c0_27] : memref<4x256x64xbf16, #tpu.memory_space<vmem>>, vector<1x256x64xbf16>
    %46 = vector.shape_cast %45 : vector<1x256x64xbf16> to vector<256x64xbf16>
    %cst_28 = arith.constant dense<0.000000e+00> : vector<208x64xf32>
    %47 = tpu.matmul %44, %46, %cst_28 {dimension_numbers = #tpu.dot_dimension_numbers<[1], [0], [0], [1], [0, 0, 1, 1], [], []>} : vector<208x256xbf16>, vector<256x64xbf16>, vector<208x64xf32> -> vector<208x64xf32>
    %48 = arith.addf %43, %47 : vector<208x64xf32>
    %c16 = arith.constant 16 : index
    %c0_29 = arith.constant 0 : index
    %49 = vector.load %arg10[%c16, %c0_29] : memref<256x256xbf16, #tpu.memory_space<vmem>>, vector<208x256xbf16>
    %c1_30 = arith.constant 1 : index
    %c0_31 = arith.constant 0 : index
    %c0_32 = arith.constant 0 : index
    %50 = vector.load %arg5[%c1_30, %c0_31, %c0_32] : memref<4x256x64xbf16, #tpu.memory_space<vmem>>, vector<1x256x64xbf16>
    %51 = vector.shape_cast %50 : vector<1x256x64xbf16> to vector<256x64xbf16>
    %cst_33 = arith.constant dense<0.000000e+00> : vector<208x64xf32>
    %52 = tpu.matmul %49, %51, %cst_33 {dimension_numbers = #tpu.dot_dimension_numbers<[1], [0], [0], [1], [0, 0, 1, 1], [], []>} : vector<208x256xbf16>, vector<256x64xbf16>, vector<208x64xf32> -> vector<208x64xf32>
    %53 = arith.addf %48, %52 : vector<208x64xf32>
    %c32 = arith.constant 32 : index
    %c0_34 = arith.constant 0 : index
    %54 = vector.load %arg10[%c32, %c0_34] : memref<256x256xbf16, #tpu.memory_space<vmem>>, vector<208x256xbf16>
    %c2_35 = arith.constant 2 : index
    %c0_36 = arith.constant 0 : index
    %c0_37 = arith.constant 0 : index
    %55 = vector.load %arg5[%c2_35, %c0_36, %c0_37] : memref<4x256x64xbf16, #tpu.memory_space<vmem>>, vector<1x256x64xbf16>
    %56 = vector.shape_cast %55 : vector<1x256x64xbf16> to vector<256x64xbf16>
    %cst_38 = arith.constant dense<0.000000e+00> : vector<208x64xf32>
    %57 = tpu.matmul %54, %56, %cst_38 {dimension_numbers = #tpu.dot_dimension_numbers<[1], [0], [0], [1], [0, 0, 1, 1], [], []>} : vector<208x256xbf16>, vector<256x64xbf16>, vector<208x64xf32> -> vector<208x64xf32>
    %58 = arith.addf %53, %57 : vector<208x64xf32>
    %c48 = arith.constant 48 : index
    %c0_39 = arith.constant 0 : index
    %59 = vector.load %arg10[%c48, %c0_39] : memref<256x256xbf16, #tpu.memory_space<vmem>>, vector<208x256xbf16>
    %c3_40 = arith.constant 3 : index
    %c0_41 = arith.constant 0 : index
    %c0_42 = arith.constant 0 : index
    %60 = vector.load %arg5[%c3_40, %c0_41, %c0_42] : memref<4x256x64xbf16, #tpu.memory_space<vmem>>, vector<1x256x64xbf16>
    %61 = vector.shape_cast %60 : vector<1x256x64xbf16> to vector<256x64xbf16>
    %cst_43 = arith.constant dense<0.000000e+00> : vector<208x64xf32>
    %62 = tpu.matmul %59, %61, %cst_43 {dimension_numbers = #tpu.dot_dimension_numbers<[1], [0], [0], [1], [0, 0, 1, 1], [], []>} : vector<208x256xbf16>, vector<256x64xbf16>, vector<208x64xf32> -> vector<208x64xf32>
    %63 = arith.addf %58, %62 : vector<208x64xf32>
    %c0_44 = arith.constant 0 : index
    %c0_45 = arith.constant 0 : index
    %64 = vector.load %arg6[%c0_44, %c0_45] : memref<1x64xf32, #tpu.memory_space<vmem>>, vector<1x64xf32>
    %65 = vector.broadcast %64 : vector<1x64xf32> to vector<208x64xf32>
    %66 = arith.addf %63, %65 : vector<208x64xf32>
    %cst_46 = arith.constant 0.000000e+00 : f32
    %67 = vector.broadcast %cst_46 : f32 to vector<208x64xf32>
    %68 = arith.cmpf oge, %66, %67 : vector<208x64xf32>
    %c0_47 = arith.constant 0 : index
    %c0_48 = arith.constant 0 : index
    %69 = vector.load %arg7[%c0_47, %c0_48] : memref<1x64xf32, #tpu.memory_space<vmem>>, vector<1x64xf32>
    %70 = vector.broadcast %69 : vector<1x64xf32> to vector<208x64xf32>
    %71 = arith.mulf %70, %66 : vector<208x64xf32>
    %72 = arith.select %68, %66, %71 : vector<208x64xi1>, vector<208x64xf32>
    %73 = vector.extract_strided_slice %72 {offsets = [0, 0], sizes = [104, 64], strides = [1, 1]} : vector<208x64xf32> to vector<104x64xf32>
    %74 = vector.extract_strided_slice %72 {offsets = [104, 0], sizes = [104, 64], strides = [1, 1]} : vector<208x64xf32> to vector<104x64xf32>
    %75 = tpu.concatenate %73, %74 in 1 : vector<104x64xf32>, vector<104x64xf32> -> vector<104x128xf32>
    %c0_49 = arith.constant 0 : index
    %c0_50 = arith.constant 0 : index
    %c0_51 = arith.constant 0 : index
    %76 = vector.load %arg8[%c0_49, %c0_50, %c0_51] : memref<1x104x128xf32, #tpu.memory_space<vmem>>, vector<1x104x128xf32>
    %77 = vector.shape_cast %76 : vector<1x104x128xf32> to vector<104x128xf32>
    %78 = vector.shape_cast %75 : vector<104x128xf32> to vector<1x104x128xf32>
    tpu.vector_store %arg8[%c0_49, %c0_50, %c0_51], %78 {strides = array<i32>} : memref<1x104x128xf32, #tpu.memory_space<vmem>>, vector<1x104x128xf32>,
    return
  }
  func.func @transform_0(%arg0: i32) -> (i32, i32, i32) {
    %c0_i32 = arith.constant 0 : i32
    %c0_i32_0 = arith.constant 0 : i32
    %c0_i32_1 = arith.constant 0 : i32
    return %arg0, %c0_i32, %c0_i32_0 : i32, i32, i32
  }
  func.func @transform_1(%arg0: i32) -> (i32, i32) {
    %c0_i32 = arith.constant 0 : i32
    %c0_i32_0 = arith.constant 0 : i32
    %c0_i32_1 = arith.constant 0 : i32
    return %c0_i32, %c0_i32_0 : i32, i32
  }
  func.func @transform_2(%arg0: i32) -> (i32, i32) {
    %c0_i32 = arith.constant 0 : i32
    %c0_i32_0 = arith.constant 0 : i32
    %c0_i32_1 = arith.constant 0 : i32
    return %c0_i32, %c0_i32_0 : i32, i32
  }
  func.func @transform_3(%arg0: i32) -> (i32, i32) {
    %c0_i32 = arith.constant 0 : i32
    %c0_i32_0 = arith.constant 0 : i32
    %c0_i32_1 = arith.constant 0 : i32
    return %c0_i32, %c0_i32_0 : i32, i32
  }
  func.func @transform_4(%arg0: i32) -> (i32, i32, i32) {
    %c0_i32 = arith.constant 0 : i32
    %c0_i32_0 = arith.constant 0 : i32
    %c0_i32_1 = arith.constant 0 : i32
    %c0_i32_2 = arith.constant 0 : i32
    return %c0_i32, %c0_i32_0, %c0_i32_1 : i32, i32, i32
  }
  func.func @transform_5(%arg0: i32) -> (i32, i32) {
    %c0_i32 = arith.constant 0 : i32
    %c0_i32_0 = arith.constant 0 : i32
    %c0_i32_1 = arith.constant 0 : i32
    return %c0_i32, %c0_i32_0 : i32, i32
  }
  func.func @transform_6(%arg0: i32) -> (i32, i32) {
    %c0_i32 = arith.constant 0 : i32
    %c0_i32_0 = arith.constant 0 : i32
    %c0_i32_1 = arith.constant 0 : i32
    return %c0_i32, %c0_i32_0 : i32, i32
  }
  func.func @transform_7(%arg0: i32) -> (i32, i32, i32) {
    %c0_i32 = arith.constant 0 : i32
    %c0_i32_0 = arith.constant 0 : i32
    %c0_i32_1 = arith.constant 0 : i32
    return %arg0, %c0_i32, %c0_i32_0 : i32, i32, i32
  }
}

</mosaic_0001>

<llo_original>
// kernel: feature_forward.1
$region0: #{feature_forward.1}
  #allocation0 [shape = 'u32[]', space=smem, size = 0x4, offset = 0x4, fixed_abs, tag = 'smem constant byte address 0x4 - core index']
  #allocation1 [shape = 'u32[72,128]{1,0:T(1,128)}', space=vmem, size = 0x9000, scoped, tag = 'internal scratch']
  #allocation2 [shape = 'f32[272,64]{1,0:T(8,128)}', space=vmem, size = 0x22000, scoped, tag = 'scratch operand']
  #allocation3 [shape = 'bf16[256,256]{1,0:T(8,128)(2,1)}', space=vmem, size = 0x20000, scoped, tag = 'scratch operand']
  %s0 = inlined_call_operand.vmem [shape: bf16[2,896,16], index: 0, kind: input, shape index: {}]
  %s1 = inlined_call_operand.vmem [shape: bf16[16,64], index: 1, kind: input, shape index: {}]
  %s2 = inlined_call_operand.vmem [shape: f32[1,64], index: 2, kind: input, shape index: {}]
  %s3 = inlined_call_operand.vmem [shape: f32[1,64], index: 3, kind: input, shape index: {}]
  %s4 = inlined_call_operand.vmem [shape: bf16[4,256,64], index: 4, kind: input, shape index: {}]
  %s5 = inlined_call_operand.vmem [shape: f32[1,64], index: 5, kind: input, shape index: {}]
  %s6 = inlined_call_operand.vmem [shape: f32[1,64], index: 6, kind: input, shape index: {}]
  %s7 = inlined_call_operand.vmem [shape: f32[2,104,128], index: 7, kind: output, shape index: {}]
  %s8 = sld [smem:[#allocation0]]
  $region61: #{feature_forward.1} parent=0
    _
  %s10 = ssub.s32 1, %s8
  %s11 = scalar_select 0, %s10, %s8
  loop: start=0, step=1, limit=4
  $region2: #{feature_forward.1} parent=0 // loop_pre_header
    _
  $region3: #{feature_forward.1} parent=0 // loop_header
    %s13 = sphi 0, %s17
    %p14 = scmp.ge.s32.totalorder %s13, 4
    %s23 = sphi 0, %s25
    %s26 = sphi 0, %s23
    %s27 = sphi 0, %s26
    %s43 = sphi 0, %s27
    %s47 = sphi 0, %s47
    %s49 = sphi 0, %s47
    %s50 = sphi 0, %s49
    %s64 = sphi 0, %s50
    %s68 = sphi 0, %s68
    %s70 = sphi 0, %s68
    %s71 = sphi 0, %s70
    %s85 = sphi 0, %s71
    %s89 = sphi 0, %s89
    %s91 = sphi 0, %s89
    %s92 = sphi 0, %s91
    %s106 = sphi 0, %s92
    %s110 = sphi 0, %s110
    %s112 = sphi 0, %s110
    %s113 = sphi 0, %s112
    %s127 = sphi 0, %s113
    %s131 = sphi 0, %s131
    %s133 = sphi 0, %s131
    %s134 = sphi 0, %s133
    %s148 = sphi 0, %s134
    %s152 = sphi 0, %s152
    %s154 = sphi 0, %s152
    %s155 = sphi 0, %s154
    %s169 = sphi 0, %s155
    %s175 = sphi 0, %s177
    %s178 = sphi 0, %s175
    %s179 = sphi 0, %s178
    %s195 = sphi 0, %s179
  $region4: #{feature_forward.1} parent=0 // loop_header_branch
    %16 = sbr.rel (%p14) target = $region8
  $region5: #{feature_forward.1} parent=0 // loop_body
    %s18 = ssub.s32 %s13, 1
    %s19 = ssub.s32 %s13, 2
    %s20 = sadd.s32 %s13, 1
    %s21 = ssub.s32 %s13, %s20
    %p22 = scmp.eq.s32.totalorder %s21, 0
    %s24 = sadd.s32 %s23, 1
    %s25 = scalar_select %p22, %s23, %s24
    %p28 = pneg %p22
    %p29 = scmp.eq.s32.totalorder %s13, 1
    %p30 = por %p28, %p29
    %p31 = scmp.ne.s32.totalorder %s23, %s26
    %p32 = scmp.eq.s32.totalorder %s13, 0
    %p33 = por %p31, %p32
    %p34 = scmp.ne.s32.totalorder %s23, %s26
    %p35 = scmp.eq.s32.totalorder %s18, 1
    %p36 = por %p34, %p35
    %p37 = scmp.ne.s32.totalorder %s26, %s27
    %p38 = scmp.eq.s32.totalorder %s18, 0
    %p39 = por %p37, %p38
    %p40 = scmp.ne.s32.totalorder %s26, %s27
    %p41 = scmp.eq.s32.totalorder %s19, 1
    %p42 = por %p40, %p41
    %p44 = scmp.ne.s32.totalorder %s27, %s43
    %p45 = scmp.eq.s32.totalorder %s19, 0
    %p46 = por %p44, %p45
    %s48 = sadd.s32 %s47, 1
    %p51 = scmp.eq.s32.totalorder %s13, 1
    %p52 = scmp.ne.s32.totalorder %s47, %s49
    %p53 = scmp.eq.s32.totalorder %s13, 0
    %p54 = por %p52, %p53
    %p55 = scmp.ne.s32.totalorder %s47, %s49
    %p56 = scmp.eq.s32.totalorder %s18, 1
    %p57 = por %p55, %p56
    %p58 = scmp.ne.s32.totalorder %s49, %s50
    %p59 = scmp.eq.s32.totalorder %s18, 0
    %p60 = por %p58, %p59
    %p61 = scmp.ne.s32.totalorder %s49, %s50
    %p62 = scmp.eq.s32.totalorder %s19, 1
    %p63 = por %p61, %p62
    %p65 = scmp.ne.s32.totalorder %s50, %s64
    %p66 = scmp.eq.s32.totalorder %s19, 0
    %p67 = por %p65, %p66
    %s69 = sadd.s32 %s68, 1
    %p72 = scmp.eq.s32.totalorder %s13, 1
    %p73 = scmp.ne.s32.totalorder %s68, %s70
    %p74 = scmp.eq.s32.totalorder %s13, 0
    %p75 = por %p73, %p74
    %p76 = scmp.ne.s32.totalorder %s68, %s70
    %p77 = scmp.eq.s32.totalorder %s18, 1
    %p78 = por %p76, %p77
    %p79 = scmp.ne.s32.totalorder %s70, %s71
    %p80 = scmp.eq.s32.totalorder %s18, 0
    %p81 = por %p79, %p80
    %p82 = scmp.ne.s32.totalorder %s70, %s71
    %p83 = scmp.eq.s32.totalorder %s19, 1
    %p84 = por %p82, %p83
    %p86 = scmp.ne.s32.totalorder %s71, %s85
    %p87 = scmp.eq.s32.totalorder %s19, 0
    %p88 = por %p86, %p87
    %s90 = sadd.s32 %s89, 1
    %p93 = scmp.eq.s32.totalorder %s13, 1
    %p94 = scmp.ne.s32.totalorder %s89, %s91
    %p95 = scmp.eq.s32.totalorder %s13, 0
    %p96 = por %p94, %p95
    %p97 = scmp.ne.s32.totalorder %s89, %s91
    %p98 = scmp.eq.s32.totalorder %s18, 1
    %p99 = por %p97, %p98
    %p100 = scmp.ne.s32.totalorder %s91, %s92
    %p101 = scmp.eq.s32.totalorder %s18, 0
    %p102 = por %p100, %p101
    %p103 = scmp.ne.s32.totalorder %s91, %s92
    %p104 = scmp.eq.s32.totalorder %s19, 1
    %p105 = por %p103, %p104
    %p107 = scmp.ne.s32.totalorder %s92, %s106
    %p108 = scmp.eq.s32.totalorder %s19, 0
    %p109 = por %p107, %p108
    %s111 = sadd.s32 %s110, 1
    %p114 = scmp.eq.s32.totalorder %s13, 1
    %p115 = scmp.ne.s32.totalorder %s110, %s112
    %p116 = scmp.eq.s32.totalorder %s13, 0
    %p117 = por %p115, %p116
    %p118 = scmp.ne.s32.totalorder %s110, %s112
    %p119 = scmp.eq.s32.totalorder %s18, 1
    %p120 = por %p118, %p119
    %p121 = scmp.ne.s32.totalorder %s112, %s113
    %p122 = scmp.eq.s32.totalorder %s18, 0
    %p123 = por %p121, %p122
    %p124 = scmp.ne.s32.totalorder %s112, %s113
    %p125 = scmp.eq.s32.totalorder %s19, 1
    %p126 = por %p124, %p125
    %p128 = scmp.ne.s32.totalorder %s113, %s127
    %p129 = scmp.eq.s32.totalorder %s19, 0
    %p130 = por %p128, %p129
    %s132 = sadd.s32 %s131, 1
    %p135 = scmp.eq.s32.totalorder %s13, 1
    %p136 = scmp.ne.s32.totalorder %s131, %s133
    %p137 = scmp.eq.s32.totalorder %s13, 0
    %p138 = por %p136, %p137
    %p139 = scmp.ne.s32.totalorder %s131, %s133
    %p140 = scmp.eq.s32.totalorder %s18, 1
    %p141 = por %p139, %p140
    %p142 = scmp.ne.s32.totalorder %s133, %s134
    %p143 = scmp.eq.s32.totalorder %s18, 0
    %p144 = por %p142, %p143
    %p145 = scmp.ne.s32.totalorder %s133, %s134
    %p146 = scmp.eq.s32.totalorder %s19, 1
    %p147 = por %p145, %p146
    %p149 = scmp.ne.s32.totalorder %s134, %s148
    %p150 = scmp.eq.s32.totalorder %s19, 0
    %p151 = por %p149, %p150
    %s153 = sadd.s32 %s152, 1
    %p156 = scmp.eq.s32.totalorder %s13, 1
    %p157 = scmp.ne.s32.totalorder %s152, %s154
    %p158 = scmp.eq.s32.totalorder %s13, 0
    %p159 = por %p157, %p158
    %p160 = scmp.ne.s32.totalorder %s152, %s154
    %p161 = scmp.eq.s32.totalorder %s18, 1
    %p162 = por %p160, %p161
    %p163 = scmp.ne.s32.totalorder %s154, %s155
    %p164 = scmp.eq.s32.totalorder %s18, 0
    %p165 = por %p163, %p164
    %p166 = scmp.ne.s32.totalorder %s154, %s155
    %p167 = scmp.eq.s32.totalorder %s19, 1
    %p168 = por %p166, %p167
    %p170 = scmp.ne.s32.totalorder %s155, %s169
    %p171 = scmp.eq.s32.totalorder %s19, 0
    %p172 = por %p170, %p171
    %s173 = ssub.s32 %s13, %s20
    %p174 = scmp.eq.s32.totalorder %s173, 0
    %s176 = sadd.s32 %s175, 1
    %s177 = scalar_select %p174, %s175, %s176
    %p180 = pneg %p174
    %p181 = scmp.eq.s32.totalorder %s13, 1
    %p182 = por %p180, %p181
    %p183 = scmp.ne.s32.totalorder %s175, %s178
    %p184 = scmp.eq.s32.totalorder %s13, 0
    %p185 = por %p183, %p184
    %p186 = scmp.ne.s32.totalorder %s175, %s178
    %p187 = scmp.eq.s32.totalorder %s18, 1
    %p188 = por %p186, %p187
    %p189 = scmp.ne.s32.totalorder %s178, %s179
    %p190 = scmp.eq.s32.totalorder %s18, 0
    %p191 = por %p189, %p190
    %p192 = scmp.ne.s32.totalorder %s178, %s179
    %p193 = scmp.eq.s32.totalorder %s19, 1
    %p194 = por %p192, %p193
    %p196 = scmp.ne.s32.totalorder %s179, %s195
    %p197 = scmp.eq.s32.totalorder %s19, 0
    %p198 = por %p196, %p197
    %p199 = scmp.le.s32.totalorder 1, %s13
    %p200 = scmp.lt.s32.totalorder %s13, 3
    %p201 = pnand %p199, %p200
    %p202 = pneg %p201
    // Predicated region
    $region9: #{feature_forward.1} parent=5 // pred_check
      _
    $region10: #{feature_forward.1} parent=5 // pred_check_branch
      %204 = sbr.rel (%p201) target = $region12
    $region11: #{feature_forward.1} parent=5 // pred_region
      %s205 = ssub.s32 %s13, 1
      // Predicated region
      $region13: #{feature_forward.1} parent=11 // pred_check
        %p206 = pneg %p60
      $region14: #{feature_forward.1} parent=11 // pred_check_branch
        %208 = sbr.rel (%p206) target = $region16
      $region15: #{feature_forward.1} parent=11 // pred_region
        _
      $region16: #{feature_forward.1} parent=11 // pred_fallthru
        _
      // Predicated region
      $region17: #{feature_forward.1} parent=11 // pred_check
        %p209 = pneg %p81
      $region18: #{feature_forward.1} parent=11 // pred_check_branch
        %211 = sbr.rel (%p209) target = $region20
      $region19: #{feature_forward.1} parent=11 // pred_region
        _
      $region20: #{feature_forward.1} parent=11 // pred_fallthru
        _
      // Predicated region
      $region21: #{feature_forward.1} parent=11 // pred_check
        %p212 = pneg %p102
      $region22: #{feature_forward.1} parent=11 // pred_check_branch
        %214 = sbr.rel (%p212) target = $region24
      $region23: #{feature_forward.1} parent=11 // pred_region
        _
      $region24: #{feature_forward.1} parent=11 // pred_fallthru
        _
      // Predicated region
      $region25: #{feature_forward.1} parent=11 // pred_check
        %p215 = pneg %p123
      $region26: #{feature_forward.1} parent=11 // pred_check_branch
        %217 = sbr.rel (%p215) target = $region28
      $region27: #{feature_forward.1} parent=11 // pred_region
        _
      $region28: #{feature_forward.1} parent=11 // pred_fallthru
        _
      // Predicated region
      $region29: #{feature_forward.1} parent=11 // pred_check
        %p218 = pneg %p144
      $region30: #{feature_forward.1} parent=11 // pred_check_branch
        %220 = sbr.rel (%p218) target = $region32
      $region31: #{feature_forward.1} parent=11 // pred_region
        _
      $region32: #{feature_forward.1} parent=11 // pred_fallthru
        _
      // Predicated region
      $region33: #{feature_forward.1} parent=11 // pred_check
        %p221 = pneg %p165
      $region34: #{feature_forward.1} parent=11 // pred_check_branch
        %223 = sbr.rel (%p221) target = $region36
      $region35: #{feature_forward.1} parent=11 // pred_region
        _
      $region36: #{feature_forward.1} parent=11 // pred_fallthru
        _
    $region12: #{feature_forward.1} parent=5 // pred_fallthru
      _
    %p224 = scmp.lt.s32.totalorder %s13, 2
    // Predicated region
    $region37: #{feature_forward.1} parent=5 // pred_check
      %p225 = pneg %p224
    $region38: #{feature_forward.1} parent=5 // pred_check_branch
      %227 = sbr.rel (%p225) target = $region40
    $region39: #{feature_forward.1} parent=5 // pred_region
      // Predicated region
      $region41: #{feature_forward.1} parent=39 // pred_check
        %p228 = pneg %p33
      $region42: #{feature_forward.1} parent=39 // pred_check_branch
        %230 = sbr.rel (%p228) target = $region44
      $region43: #{feature_forward.1} parent=39 // pred_region
        %p231 = scmp.lt.s32.totalorder %s13, 1
        %s232 = scalar_select %p231, %s13, 1
        %s233 = smul.addr %s232, 112
        %s234 = smul.addr %s233, 4
        %s235 = scalar_lea.vmem %s0, %s234
      $region44: #{feature_forward.1} parent=39 // pred_fallthru
        _
    $region40: #{feature_forward.1} parent=5 // pred_fallthru
      _
    %p236 = scmp.le.s32.totalorder 1, %s13
    %p237 = scmp.lt.s32.totalorder %s13, 3
    %p238 = pnand %p236, %p237
    %p239 = pneg %p238
    // Predicated region
    $region45: #{feature_forward.1} parent=5 // pred_check
      _
    $region46: #{feature_forward.1} parent=5 // pred_check_branch
      %241 = sbr.rel (%p238) target = $region48
    $region47: #{feature_forward.1} parent=5 // pred_region
      %s242 = ssub.s32 %s13, 1
      %p243 = scmp.lt.s32.totalorder %s18, 1
      %s244 = scalar_select %p243, %s18, 1
      %s245 = smul.addr %s244, 112
      %s246 = smul.addr %s245, 4
      %s247 = scalar_lea.vmem %s0, %s246
      %p248 = pneg %p39
      %p249 = pneg %p36
      %p250 = pneg %p60
      %p251 = pneg %p57
      %p252 = pneg %p81
      %p253 = pneg %p78
      %p254 = pneg %p102
      %p255 = pneg %p99
      %p256 = pneg %p123
      %p257 = pneg %p120
      %p258 = pneg %p144
      %p259 = pneg %p141
      %p260 = pneg %p165
      %p261 = pneg %p162
      %p262 = pneg %p191
      %p263 = pneg %p188
      %p264 = scmp.lt.s32.totalorder %s18, 1
      %s265 = scalar_select %p264, %s18, 1
      %s266 = smul.addr %s265, 13
      %s267 = smul.addr %s266, 8
      %s268 = scalar_lea.vmem %s7, %s267
      %p269 = scmp.lt.s32.totalorder %s18, 1
      %s270 = scalar_select %p269, %s18, 1
      %s271 = smul.addr %s270, 112
      %s272 = smul.addr %s271, 4
      %s273 = scalar_lea.vmem %s0, %s272
      %p274 = scmp.lt.s32.totalorder %s18, 1
      %s275 = scalar_select %p274, %s18, 1
      %s276 = smul.addr %s275, 13
      %s277 = smul.addr %s276, 8
      %s278 = scalar_lea.vmem %s7, %s277
      %v280 = vld [vmem:[%s273] sm:$0xf]
      %v281 = vld [vmem:[%s273 + $0x4] sm:$0xf]
      %v282 = vld [vmem:[%s273 + $0x8] sm:$0xf]
      %v283 = vld [vmem:[%s273 + $0xc] sm:$0xf]
      %v284 = vld [vmem:[%s273 + $0x10] sm:$0xf]
      %v285 = vld [vmem:[%s273 + $0x14] sm:$0xf]
      %v286 = vld [vmem:[%s273 + $0x18] sm:$0xf]
      %v287 = vld [vmem:[%s273 + $0x1c] sm:$0xf]
      %v288 = vld [vmem:[%s273 + $0x20] sm:$0xf]
      %v289 = vld [vmem:[%s273 + $0x24] sm:$0xf]
      %v290 = vld [vmem:[%s273 + $0x28] sm:$0xf]
      %v291 = vld [vmem:[%s273 + $0x2c] sm:$0xf]
      %v292 = vld [vmem:[%s273 + $0x30] sm:$0xf]
      %v293 = vld [vmem:[%s273 + $0x34] sm:$0xf]
      %v294 = vld [vmem:[%s273 + $0x38] sm:$0xf]
      %v295 = vld [vmem:[%s273 + $0x3c] sm:$0xf]
      %v296 = vld [vmem:[%s273 + $0x40] sm:$0xf]
      %v297 = vld [vmem:[%s273 + $0x44] sm:$0xf]
      %v298 = vld [vmem:[%s273 + $0x48] sm:$0xf]
      %v299 = vld [vmem:[%s273 + $0x4c] sm:$0xf]
      %v300 = vld [vmem:[%s273 + $0x50] sm:$0xf]
      %v301 = vld [vmem:[%s273 + $0x54] sm:$0xf]
      %v302 = vld [vmem:[%s273 + $0x58] sm:$0xf]
      %v303 = vld [vmem:[%s273 + $0x5c] sm:$0xf]
      %v304 = vld [vmem:[%s273 + $0x60] sm:$0xf]
      %v305 = vld [vmem:[%s273 + $0x64] sm:$0xf]
      %v306 = vld [vmem:[%s273 + $0x68] sm:$0xf]
      %v307 = vld [vmem:[%s273 + $0x6c] sm:$0xf]
      %v308 = vld [vmem:[%s273 + $0x70] sm:$0xf]
      %v309 = vld [vmem:[%s273 + $0x74] sm:$0xf]
      %v310 = vld [vmem:[%s273 + $0x78] sm:$0xf]
      %v311 = vld [vmem:[%s273 + $0x7c] sm:$0xf]
      %v312 = vld [vmem:[%s273 + $0x80] sm:$0xf]
      %v313 = vld [vmem:[%s273 + $0x84] sm:$0xf]
      %v314 = vld [vmem:[%s273 + $0x88] sm:$0xf]
      %v315 = vld [vmem:[%s273 + $0x8c] sm:$0xf]
      %v316 = vld [vmem:[%s273 + $0x90] sm:$0xf]
      %v317 = vld [vmem:[%s273 + $0x94] sm:$0xf]
      %v318 = vld [vmem:[%s273 + $0x98] sm:$0xf]
      %v319 = vld [vmem:[%s273 + $0x9c] sm:$0xf]
      %v320 = vld [vmem:[%s273 + $0xa0] sm:$0xf]
      %v321 = vld [vmem:[%s273 + $0xa4] sm:$0xf]
      %v322 = vld [vmem:[%s273 + $0xa8] sm:$0xf]
      %v323 = vld [vmem:[%s273 + $0xac] sm:$0xf]
      %v324 = vld [vmem:[%s273 + $0xb0] sm:$0xf]
      %v325 = vld [vmem:[%s273 + $0xb4] sm:$0xf]
      %v326 = vld [vmem:[%s273 + $0xb8] sm:$0xf]
      %v327 = vld [vmem:[%s273 + $0xbc] sm:$0xf]
      %v328 = vld [vmem:[%s273 + $0xc0] sm:$0xf]
      %v329 = vld [vmem:[%s273 + $0xc4] sm:$0xf]
      %v330 = vld [vmem:[%s273 + $0xc8] sm:$0xf]
      %v331 = vld [vmem:[%s273 + $0xcc] sm:$0xf]
      %v332 = vld [vmem:[%s273 + $0xd0] sm:$0xf]
      %v333 = vld [vmem:[%s273 + $0xd4] sm:$0xf]
      %v334 = vld [vmem:[%s273 + $0xd8] sm:$0xf]
      %v335 = vld [vmem:[%s273 + $0xdc] sm:$0xf]
      %v336 = vld [vmem:[%s273 + $0xe0] sm:$0xf]
      %v337 = vld [vmem:[%s273 + $0xe4] sm:$0xf]
      %v338 = vld [vmem:[%s273 + $0xe8] sm:$0xf]
      %v339 = vld [vmem:[%s273 + $0xec] sm:$0xf]
      %v340 = vld [vmem:[%s273 + $0xf0] sm:$0xf]
      %v341 = vld [vmem:[%s273 + $0xf4] sm:$0xf]
      %v342 = vld [vmem:[%s273 + $0xf8] sm:$0xf]
      %v343 = vld [vmem:[%s273 + $0xfc] sm:$0xf]
      %v344 = vld [vmem:[%s273 + $0x100] sm:$0xf]
      %v345 = vld [vmem:[%s273 + $0x104] sm:$0xf]
      %v346 = vld [vmem:[%s273 + $0x108] sm:$0xf]
      %v347 = vld [vmem:[%s273 + $0x10c] sm:$0xf]
      %v348 = vld [vmem:[%s273 + $0x110] sm:$0xf]
      %v349 = vld [vmem:[%s273 + $0x114] sm:$0xf]
      %v350 = vld [vmem:[%s273 + $0x118] sm:$0xf]
      %v351 = vld [vmem:[%s273 + $0x11c] sm:$0xf]
      %v352 = vld [vmem:[%s273 + $0x120] sm:$0xf]
      %v353 = vld [vmem:[%s273 + $0x124] sm:$0xf]
      %v354 = vld [vmem:[%s273 + $0x128] sm:$0xf]
      %v355 = vld [vmem:[%s273 + $0x12c] sm:$0xf]
      %v356 = vld [vmem:[%s273 + $0x130] sm:$0xf]
      %v357 = vld [vmem:[%s273 + $0x134] sm:$0xf]
      %v358 = vld [vmem:[%s273 + $0x138] sm:$0xf]
      %v359 = vld [vmem:[%s273 + $0x13c] sm:$0xf]
      %v360 = vld [vmem:[%s273 + $0x140] sm:$0xf]
      %v361 = vld [vmem:[%s273 + $0x144] sm:$0xf]
      %v362 = vld [vmem:[%s273 + $0x148] sm:$0xf]
      %v363 = vld [vmem:[%s273 + $0x14c] sm:$0xf]
      %v364 = vld [vmem:[%s273 + $0x150] sm:$0xf]
      %v365 = vld [vmem:[%s273 + $0x154] sm:$0xf]
      %v366 = vld [vmem:[%s273 + $0x158] sm:$0xf]
      %v367 = vld [vmem:[%s273 + $0x15c] sm:$0xf]
      %v368 = vld [vmem:[%s273 + $0x160] sm:$0xf]
      %v369 = vld [vmem:[%s273 + $0x164] sm:$0xf]
      %v370 = vld [vmem:[%s273 + $0x168] sm:$0xf]
      %v371 = vld [vmem:[%s273 + $0x16c] sm:$0xf]
      %v372 = vld [vmem:[%s273 + $0x170] sm:$0xf]
      %v373 = vld [vmem:[%s273 + $0x174] sm:$0xf]
      %v374 = vld [vmem:[%s273 + $0x178] sm:$0xf]
      %v375 = vld [vmem:[%s273 + $0x17c] sm:$0xf]
      %v376 = vld [vmem:[%s273 + $0x180] sm:$0xf]
      %v377 = vld [vmem:[%s273 + $0x184] sm:$0xf]
      %v378 = vld [vmem:[%s273 + $0x188] sm:$0xf]
      %v379 = vld [vmem:[%s273 + $0x18c] sm:$0xf]
      %v380 = vld [vmem:[%s273 + $0x190] sm:$0xf]
      %v381 = vld [vmem:[%s273 + $0x194] sm:$0xf]
      %v382 = vld [vmem:[%s273 + $0x198] sm:$0xf]
      %v383 = vld [vmem:[%s273 + $0x19c] sm:$0xf]
      %v384 = vld [vmem:[%s273 + $0x1a0] sm:$0xf]
      %v385 = vld [vmem:[%s273 + $0x1a4] sm:$0xf]
      %v386 = vld [vmem:[%s273 + $0x1a8] sm:$0xf]
      %v387 = vld [vmem:[%s273 + $0x1ac] sm:$0xf]
      %v388 = vld [vmem:[%s273 + $0x1b0] sm:$0xf]
      %v389 = vld [vmem:[%s273 + $0x1b4] sm:$0xf]
      %v390 = vld [vmem:[%s273 + $0x1b8] sm:$0xf]
      %v391 = vld [vmem:[%s273 + $0x1bc] sm:$0xf]
      %v392 = vld [vmem:[%s1] sm:$0xf]
      %v393 = vld [vmem:[%s1 + $0x4] sm:$0xf]
      %v394 = vld [vmem:[%s2] sm:$0x1]
      %v396 = vperm.slane %v394, 0
      %v510 = vunpack.c.l.b16 %v280
      %v511 = vunpack.c.l.b16 %v281
      %v512 = vunpack.c.l.b16 %v282
      %v513 = vunpack.c.l.b16 %v283
      %v514 = vunpack.c.l.b16 %v284
      %v515 = vunpack.c.l.b16 %v285
      %v516 = vunpack.c.l.b16 %v286
      %v517 = vunpack.c.l.b16 %v287
      %v518 = vunpack.c.l.b16 %v288
      %v519 = vunpack.c.l.b16 %v289
      %v520 = vunpack.c.l.b16 %v290
      %v521 = vunpack.c.l.b16 %v291
      %v522 = vunpack.c.l.b16 %v292
      %v523 = vunpack.c.l.b16 %v293
      %v524 = vunpack.c.l.b16 %v294
      %v525 = vunpack.c.l.b16 %v295
      %v526 = vunpack.c.l.b16 %v296
      %v527 = vunpack.c.l.b16 %v297
      %v528 = vunpack.c.l.b16 %v298
      %v529 = vunpack.c.l.b16 %v299
      %v530 = vunpack.c.l.b16 %v300
      %v531 = vunpack.c.l.b16 %v301
      %v532 = vunpack.c.l.b16 %v302
      %v533 = vunpack.c.l.b16 %v303
      %v534 = vunpack.c.l.b16 %v304
      %v535 = vunpack.c.l.b16 %v305
      %v536 = vunpack.c.l.b16 %v306
      %v537 = vunpack.c.l.b16 %v307
      %v538 = vunpack.c.l.b16 %v308
      %v539 = vunpack.c.l.b16 %v309
      %v540 = vunpack.c.l.b16 %v310
      %v541 = vunpack.c.l.b16 %v311
      %v542 = vunpack.c.l.b16 %v312
      %v543 = vunpack.c.l.b16 %v313
      %v544 = vunpack.c.l.b16 %v314
      %v545 = vunpack.c.l.b16 %v315
      %v546 = vunpack.c.l.b16 %v316
      %v547 = vunpack.c.l.b16 %v317
      %v548 = vunpack.c.l.b16 %v318
      %v549 = vunpack.c.l.b16 %v319
      %v550 = vunpack.c.l.b16 %v320
      %v551 = vunpack.c.l.b16 %v321
      %v552 = vunpack.c.l.b16 %v322
      %v553 = vunpack.c.l.b16 %v323
      %v554 = vunpack.c.l.b16 %v324
      %v555 = vunpack.c.l.b16 %v325
      %v556 = vunpack.c.l.b16 %v326
      %v557 = vunpack.c.l.b16 %v327
      %v558 = vunpack.c.l.b16 %v328
      %v559 = vunpack.c.l.b16 %v329
      %v560 = vunpack.c.l.b16 %v330
      %v561 = vunpack.c.l.b16 %v331
      %v562 = vunpack.c.l.b16 %v332
      %v563 = vunpack.c.l.b16 %v333
      %v564 = vunpack.c.l.b16 %v334
      %v565 = vunpack.c.l.b16 %v335
      %v566 = vunpack.c.l.b16 %v336
      %v567 = vunpack.c.l.b16 %v337
      %v568 = vunpack.c.l.b16 %v338
      %v569 = vunpack.c.l.b16 %v339
      %v570 = vunpack.c.l.b16 %v340
      %v571 = vunpack.c.l.b16 %v341
      %v572 = vunpack.c.l.b16 %v342
      %v573 = vunpack.c.l.b16 %v343
      %v574 = vunpack.c.l.b16 %v344
      %v575 = vunpack.c.l.b16 %v345
      %v576 = vunpack.c.l.b16 %v346
      %v577 = vunpack.c.l.b16 %v347
      %v578 = vunpack.c.l.b16 %v348
      %v579 = vunpack.c.l.b16 %v349
      %v580 = vunpack.c.l.b16 %v350
      %v581 = vunpack.c.l.b16 %v351
      %v582 = vunpack.c.l.b16 %v352
      %v583 = vunpack.c.l.b16 %v353
      %v584 = vunpack.c.l.b16 %v354
      %v585 = vunpack.c.l.b16 %v355
      %v586 = vunpack.c.l.b16 %v356
      %v587 = vunpack.c.l.b16 %v357
      %v588 = vunpack.c.l.b16 %v358
      %v589 = vunpack.c.l.b16 %v359
      %v590 = vunpack.c.l.b16 %v360
      %v591 = vunpack.c.l.b16 %v361
      %v592 = vunpack.c.l.b16 %v362
      %v593 = vunpack.c.l.b16 %v363
      %v594 = vunpack.c.l.b16 %v364
      %v595 = vunpack.c.l.b16 %v365
      %v596 = vunpack.c.l.b16 %v366
      %v597 = vunpack.c.l.b16 %v367
      %v598 = vunpack.c.l.b16 %v368
      %v599 = vunpack.c.l.b16 %v369
      %v600 = vunpack.c.l.b16 %v370
      %v601 = vunpack.c.l.b16 %v371
      %v602 = vunpack.c.l.b16 %v372
      %v603 = vunpack.c.l.b16 %v373
      %v604 = vunpack.c.l.b16 %v374
      %v605 = vunpack.c.l.b16 %v375
      %v606 = vunpack.c.l.b16 %v376
      %v607 = vunpack.c.l.b16 %v377
      %v608 = vunpack.c.l.b16 %v378
      %v609 = vunpack.c.l.b16 %v379
      %v610 = vunpack.c.l.b16 %v380
      %v611 = vunpack.c.l.b16 %v381
      %v612 = vunpack.c.l.b16 %v382
      %v613 = vunpack.c.l.b16 %v383
      %v614 = vunpack.c.l.b16 %v384
      %v615 = vunpack.c.l.b16 %v385
      %v616 = vunpack.c.l.b16 %v386
      %v617 = vunpack.c.l.b16 %v387
      %v618 = vunpack.c.l.b16 %v388
      %v619 = vunpack.c.l.b16 %v389
      %v620 = vunpack.c.l.b16 %v390
      %v621 = vunpack.c.l.b16 %v391
      %v622 = vpack.c.b16 %v511, %v510
      %v623 = vpack.c.b16 %v513, %v512
      %v624 = vpack.c.b16 %v515, %v514
      %v625 = vpack.c.b16 %v517, %v516
      %v626 = vpack.c.b16 %v519, %v518
      %v627 = vpack.c.b16 %v521, %v520
      %v628 = vpack.c.b16 %v523, %v522
      %v629 = vpack.c.b16 %v525, %v524
      %v630 = vpack.c.b16 %v527, %v526
      %v631 = vpack.c.b16 %v529, %v528
      %v632 = vpack.c.b16 %v531, %v530
      %v633 = vpack.c.b16 %v533, %v532
      %v634 = vpack.c.b16 %v535, %v534
      %v635 = vpack.c.b16 %v537, %v536
      %v636 = vpack.c.b16 %v539, %v538
      %v637 = vpack.c.b16 %v541, %v540
      %v638 = vpack.c.b16 %v543, %v542
      %v639 = vpack.c.b16 %v545, %v544
      %v640 = vpack.c.b16 %v547, %v546
      %v641 = vpack.c.b16 %v549, %v548
      %v642 = vpack.c.b16 %v551, %v550
      %v643 = vpack.c.b16 %v553, %v552
      %v644 = vpack.c.b16 %v555, %v554
      %v645 = vpack.c.b16 %v557, %v556
      %v646 = vpack.c.b16 %v559, %v558
      %v647 = vpack.c.b16 %v561, %v560
      %v648 = vpack.c.b16 %v563, %v562
      %v649 = vpack.c.b16 %v565, %v564
      %v650 = vpack.c.b16 %v567, %v566
      %v651 = vpack.c.b16 %v569, %v568
      %v652 = vpack.c.b16 %v571, %v570
      %v653 = vpack.c.b16 %v573, %v572
      %v654 = vpack.c.b16 %v575, %v574
      %v655 = vpack.c.b16 %v577, %v576
      %v656 = vpack.c.b16 %v579, %v578
      %v657 = vpack.c.b16 %v581, %v580
      %v658 = vpack.c.b16 %v583, %v582
      %v659 = vpack.c.b16 %v585, %v584
      %v660 = vpack.c.b16 %v587, %v586
      %v661 = vpack.c.b16 %v589, %v588
      %v662 = vpack.c.b16 %v591, %v590
      %v663 = vpack.c.b16 %v593, %v592
      %v664 = vpack.c.b16 %v595, %v594
      %v665 = vpack.c.b16 %v597, %v596
      %v666 = vpack.c.b16 %v599, %v598
      %v667 = vpack.c.b16 %v601, %v600
      %v668 = vpack.c.b16 %v603, %v602
      %v669 = vpack.c.b16 %v605, %v604
      %v670 = vpack.c.b16 %v607, %v606
      %v671 = vpack.c.b16 %v609, %v608
      %v672 = vpack.c.b16 %v611, %v610
      %v673 = vpack.c.b16 %v613, %v612
      %v674 = vpack.c.b16 %v615, %v614
      %v675 = vpack.c.b16 %v617, %v616
      %v676 = vpack.c.b16 %v619, %v618
      %v677 = vpack.c.b16 %v621, %v620
      %v680 = vunpack.c.l.b16 %v392
      %v681 = vunpack.c.l.b16 %v393
      %v682 = vpack.c.b16 %v681, %v680
      %vm684 = vcmask 130048
      %v686 = vsel %vm684, %v622, 0
      %v689 = vsel %vm684, %v623, 0
      %v692 = vsel %vm684, %v624, 0
      %v695 = vsel %vm684, %v625, 0
      %v698 = vsel %vm684, %v626, 0
      %v701 = vsel %vm684, %v627, 0
      %v704 = vsel %vm684, %v628, 0
      %v707 = vsel %vm684, %v629, 0
      %v710 = vsel %vm684, %v630, 0
      %v713 = vsel %vm684, %v631, 0
      %v716 = vsel %vm684, %v632, 0
      %v719 = vsel %vm684, %v633, 0
      %v722 = vsel %vm684, %v634, 0
      %v725 = vsel %vm684, %v635, 0
      %v728 = vsel %vm684, %v636, 0
      %v731 = vsel %vm684, %v637, 0
      %v734 = vsel %vm684, %v638, 0
      %v737 = vsel %vm684, %v639, 0
      %v740 = vsel %vm684, %v640, 0
      %v743 = vsel %vm684, %v641, 0
      %v746 = vsel %vm684, %v642, 0
      %v749 = vsel %vm684, %v643, 0
      %v752 = vsel %vm684, %v644, 0
      %v755 = vsel %vm684, %v645, 0
      %v758 = vsel %vm684, %v646, 0
      %v761 = vsel %vm684, %v647, 0
      %v764 = vsel %vm684, %v648, 0
      %v767 = vsel %vm684, %v649, 0
      %v770 = vsel %vm684, %v650, 0
      %v773 = vsel %vm684, %v651, 0
      %v776 = vsel %vm684, %v652, 0
      %v779 = vsel %vm684, %v653, 0
      %v782 = vsel %vm684, %v654, 0
      %v785 = vsel %vm684, %v655, 0
      %v788 = vsel %vm684, %v656, 0
      %v791 = vsel %vm684, %v657, 0
      %v794 = vsel %vm684, %v658, 0
      %v797 = vsel %vm684, %v659, 0
      %v800 = vsel %vm684, %v660, 0
      %v803 = vsel %vm684, %v661, 0
      %v806 = vsel %vm684, %v662, 0
      %v809 = vsel %vm684, %v663, 0
      %v812 = vsel %vm684, %v664, 0
      %v815 = vsel %vm684, %v665, 0
      %v818 = vsel %vm684, %v666, 0
      %v821 = vsel %vm684, %v667, 0
      %v824 = vsel %vm684, %v668, 0
      %v827 = vsel %vm684, %v669, 0
      %v830 = vsel %vm684, %v670, 0
      %v833 = vsel %vm684, %v671, 0
      %v836 = vsel %vm684, %v672, 0
      %v839 = vsel %vm684, %v673, 0
      %v842 = vsel %vm684, %v674, 0
      %v845 = vsel %vm684, %v675, 0
      %v848 = vsel %vm684, %v676, 0
      %v851 = vsel %vm684, %v677, 0
      %853 = vmatpush.bf16.msra.mxu0 0
      %854 = vmatpush.bf16.msra.mxu0 0
      %855 = vmatpush.bf16.msra.mxu0 0
      %856 = vmatpush.bf16.msra.mxu0 0
      %857 = vmatpush.bf16.msra.mxu0 0
      %858 = vmatpush.bf16.msra.mxu0 0
      %859 = vmatpush.bf16.msra.mxu0 0
      %860 = vmatpush.bf16.msra.mxu0 %v682
      %861 = vmatmul.bf16.gmra.mxu0 %v686
      %v862 = vpop.f32.mrf.mxu0
      %v863 = vadd.f32 %v396, %v862
      %v864 = vpop.f32.mrf.mxu0
      %v865 = vadd.f32 %v396, %v864
      %866 = vmatmul.bf16.gmra.mxu0 %v689
      %v867 = vpop.f32.mrf.mxu0
      %v868 = vadd.f32 %v396, %v867
      %v869 = vpop.f32.mrf.mxu0
      %v870 = vadd.f32 %v396, %v869
      %871 = vmatmul.bf16.gmra.mxu0 %v692
      %v872 = vpop.f32.mrf.mxu0
      %v873 = vadd.f32 %v396, %v872
      %v874 = vpop.f32.mrf.mxu0
      %v875 = vadd.f32 %v396, %v874
      %876 = vmatmul.bf16.gmra.mxu0 %v695
      %v877 = vpop.f32.mrf.mxu0
      %v878 = vadd.f32 %v396, %v877
      %v879 = vpop.f32.mrf.mxu0
      %v880 = vadd.f32 %v396, %v879
      %881 = vmatmul.bf16.gmra.mxu0 %v698
      %v882 = vpop.f32.mrf.mxu0
      %v883 = vadd.f32 %v396, %v882
      %v884 = vpop.f32.mrf.mxu0
      %v885 = vadd.f32 %v396, %v884
      %886 = vmatmul.bf16.gmra.mxu0 %v701
      %v887 = vpop.f32.mrf.mxu0
      %v888 = vadd.f32 %v396, %v887
      %v889 = vpop.f32.mrf.mxu0
      %v890 = vadd.f32 %v396, %v889
      %891 = vmatmul.bf16.gmra.mxu0 %v704
      %v892 = vpop.f32.mrf.mxu0
      %v893 = vadd.f32 %v396, %v892
      %v894 = vpop.f32.mrf.mxu0
      %v895 = vadd.f32 %v396, %v894
      %896 = vmatmul.bf16.gmra.mxu0 %v707
      %v897 = vpop.f32.mrf.mxu0
      %v898 = vadd.f32 %v396, %v897
      %v899 = vpop.f32.mrf.mxu0
      %v900 = vadd.f32 %v396, %v899
      %901 = vmatmul.bf16.gmra.mxu0 %v710
      %v902 = vpop.f32.mrf.mxu0
      %v903 = vadd.f32 %v396, %v902
      %v904 = vpop.f32.mrf.mxu0
      %v905 = vadd.f32 %v396, %v904
      %906 = vmatmul.bf16.gmra.mxu0 %v713
      %v907 = vpop.f32.mrf.mxu0
      %v908 = vadd.f32 %v396, %v907
      %v909 = vpop.f32.mrf.mxu0
      %v910 = vadd.f32 %v396, %v909
      %911 = vmatmul.bf16.gmra.mxu0 %v716
      %v912 = vpop.f32.mrf.mxu0
      %v913 = vadd.f32 %v396, %v912
      %v914 = vpop.f32.mrf.mxu0
      %v915 = vadd.f32 %v396, %v914
      %916 = vmatmul.bf16.gmra.mxu0 %v719
      %v917 = vpop.f32.mrf.mxu0
      %v918 = vadd.f32 %v396, %v917
      %v919 = vpop.f32.mrf.mxu0
      %v920 = vadd.f32 %v396, %v919
      %921 = vmatmul.bf16.gmra.mxu0 %v722
      %v922 = vpop.f32.mrf.mxu0
      %v923 = vadd.f32 %v396, %v922
      %v924 = vpop.f32.mrf.mxu0
      %v925 = vadd.f32 %v396, %v924
      %926 = vmatmul.bf16.gmra.mxu0 %v725
      %v927 = vpop.f32.mrf.mxu0
      %v928 = vadd.f32 %v396, %v927
      %v929 = vpop.f32.mrf.mxu0
      %v930 = vadd.f32 %v396, %v929
      %931 = vmatmul.bf16.gmra.mxu0 %v728
      %v932 = vpop.f32.mrf.mxu0
      %v933 = vadd.f32 %v396, %v932
      %v934 = vpop.f32.mrf.mxu0
      %v935 = vadd.f32 %v396, %v934
      %936 = vmatmul.bf16.gmra.mxu0 %v731
      %v937 = vpop.f32.mrf.mxu0
      %v938 = vadd.f32 %v396, %v937
      %v939 = vpop.f32.mrf.mxu0
      %v940 = vadd.f32 %v396, %v939
      %941 = vmatmul.bf16.gmra.mxu0 %v734
      %v942 = vpop.f32.mrf.mxu0
      %v943 = vadd.f32 %v396, %v942
      %v944 = vpop.f32.mrf.mxu0
      %v945 = vadd.f32 %v396, %v944
      %946 = vmatmul.bf16.gmra.mxu0 %v737
      %v947 = vpop.f32.mrf.mxu0
      %v948 = vadd.f32 %v396, %v947
      %v949 = vpop.f32.mrf.mxu0
      %v950 = vadd.f32 %v396, %v949
      %951 = vmatmul.bf16.gmra.mxu0 %v740
      %v952 = vpop.f32.mrf.mxu0
      %v953 = vadd.f32 %v396, %v952
      %v954 = vpop.f32.mrf.mxu0
      %v955 = vadd.f32 %v396, %v954
      %956 = vmatmul.bf16.gmra.mxu0 %v743
      %v957 = vpop.f32.mrf.mxu0
      %v958 = vadd.f32 %v396, %v957
      %v959 = vpop.f32.mrf.mxu0
      %v960 = vadd.f32 %v396, %v959
      %961 = vmatmul.bf16.gmra.mxu0 %v746
      %v962 = vpop.f32.mrf.mxu0
      %v963 = vadd.f32 %v396, %v962
      %v964 = vpop.f32.mrf.mxu0
      %v965 = vadd.f32 %v396, %v964
      %966 = vmatmul.bf16.gmra.mxu0 %v749
      %v967 = vpop.f32.mrf.mxu0
      %v968 = vadd.f32 %v396, %v967
      %v969 = vpop.f32.mrf.mxu0
      %v970 = vadd.f32 %v396, %v969
      %971 = vmatmul.bf16.gmra.mxu0 %v752
      %v972 = vpop.f32.mrf.mxu0
      %v973 = vadd.f32 %v396, %v972
      %v974 = vpop.f32.mrf.mxu0
      %v975 = vadd.f32 %v396, %v974
      %976 = vmatmul.bf16.gmra.mxu0 %v755
      %v977 = vpop.f32.mrf.mxu0
      %v978 = vadd.f32 %v396, %v977
      %v979 = vpop.f32.mrf.mxu0
      %v980 = vadd.f32 %v396, %v979
      %981 = vmatmul.bf16.gmra.mxu0 %v758
      %v982 = vpop.f32.mrf.mxu0
      %v983 = vadd.f32 %v396, %v982
      %v984 = vpop.f32.mrf.mxu0
      %v985 = vadd.f32 %v396, %v984
      %986 = vmatmul.bf16.gmra.mxu0 %v761
      %v987 = vpop.f32.mrf.mxu0
      %v988 = vadd.f32 %v396, %v987
      %v989 = vpop.f32.mrf.mxu0
      %v990 = vadd.f32 %v396, %v989
      %991 = vmatmul.bf16.gmra.mxu0 %v764
      %v992 = vpop.f32.mrf.mxu0
      %v993 = vadd.f32 %v396, %v992
      %v994 = vpop.f32.mrf.mxu0
      %v995 = vadd.f32 %v396, %v994
      %996 = vmatmul.bf16.gmra.mxu0 %v767
      %v997 = vpop.f32.mrf.mxu0
      %v998 = vadd.f32 %v396, %v997
      %v999 = vpop.f32.mrf.mxu0
      %v1000 = vadd.f32 %v396, %v999
      %1001 = vmatmul.bf16.gmra.mxu0 %v770
      %v1002 = vpop.f32.mrf.mxu0
      %v1003 = vadd.f32 %v396, %v1002
      %v1004 = vpop.f32.mrf.mxu0
      %v1005 = vadd.f32 %v396, %v1004
      %1006 = vmatmul.bf16.gmra.mxu0 %v773
      %v1007 = vpop.f32.mrf.mxu0
      %v1008 = vadd.f32 %v396, %v1007
      %v1009 = vpop.f32.mrf.mxu0
      %v1010 = vadd.f32 %v396, %v1009
      %1011 = vmatmul.bf16.gmra.mxu0 %v776
      %v1012 = vpop.f32.mrf.mxu0
      %v1013 = vadd.f32 %v396, %v1012
      %v1014 = vpop.f32.mrf.mxu0
      %v1015 = vadd.f32 %v396, %v1014
      %1016 = vmatmul.bf16.gmra.mxu0 %v779
      %v1017 = vpop.f32.mrf.mxu0
      %v1018 = vadd.f32 %v396, %v1017
      %v1019 = vpop.f32.mrf.mxu0
      %v1020 = vadd.f32 %v396, %v1019
      %1021 = vmatmul.bf16.gmra.mxu0 %v782
      %v1022 = vpop.f32.mrf.mxu0
      %v1023 = vadd.f32 %v396, %v1022
      %v1024 = vpop.f32.mrf.mxu0
      %v1025 = vadd.f32 %v396, %v1024
      %1026 = vmatmul.bf16.gmra.mxu0 %v785
      %v1027 = vpop.f32.mrf.mxu0
      %v1028 = vadd.f32 %v396, %v1027
      %v1029 = vpop.f32.mrf.mxu0
      %v1030 = vadd.f32 %v396, %v1029
      %1031 = vmatmul.bf16.gmra.mxu0 %v788
      %v1032 = vpop.f32.mrf.mxu0
      %v1033 = vadd.f32 %v396, %v1032
      %v1034 = vpop.f32.mrf.mxu0
      %v1035 = vadd.f32 %v396, %v1034
      %1036 = vmatmul.bf16.gmra.mxu0 %v791
      %v1037 = vpop.f32.mrf.mxu0
      %v1038 = vadd.f32 %v396, %v1037
      %v1039 = vpop.f32.mrf.mxu0
      %v1040 = vadd.f32 %v396, %v1039
      %1041 = vmatmul.bf16.gmra.mxu0 %v794
      %v1042 = vpop.f32.mrf.mxu0
      %v1043 = vadd.f32 %v396, %v1042
      %v1044 = vpop.f32.mrf.mxu0
      %v1045 = vadd.f32 %v396, %v1044
      %1046 = vmatmul.bf16.gmra.mxu0 %v797
      %v1047 = vpop.f32.mrf.mxu0
      %v1048 = vadd.f32 %v396, %v1047
      %v1049 = vpop.f32.mrf.mxu0
      %v1050 = vadd.f32 %v396, %v1049
      %1051 = vmatmul.bf16.gmra.mxu0 %v800
      %v1052 = vpop.f32.mrf.mxu0
      %v1053 = vadd.f32 %v396, %v1052
      %v1054 = vpop.f32.mrf.mxu0
      %v1055 = vadd.f32 %v396, %v1054
      %1056 = vmatmul.bf16.gmra.mxu0 %v803
      %v1057 = vpop.f32.mrf.mxu0
      %v1058 = vadd.f32 %v396, %v1057
      %v1059 = vpop.f32.mrf.mxu0
      %v1060 = vadd.f32 %v396, %v1059
      %1061 = vmatmul.bf16.gmra.mxu0 %v806
      %v1062 = vpop.f32.mrf.mxu0
      %v1063 = vadd.f32 %v396, %v1062
      %v1064 = vpop.f32.mrf.mxu0
      %v1065 = vadd.f32 %v396, %v1064
      %1066 = vmatmul.bf16.gmra.mxu0 %v809
      %v1067 = vpop.f32.mrf.mxu0
      %v1068 = vadd.f32 %v396, %v1067
      %v1069 = vpop.f32.mrf.mxu0
      %v1070 = vadd.f32 %v396, %v1069
      %1071 = vmatmul.bf16.gmra.mxu0 %v812
      %v1072 = vpop.f32.mrf.mxu0
      %v1073 = vadd.f32 %v396, %v1072
      %v1074 = vpop.f32.mrf.mxu0
      %v1075 = vadd.f32 %v396, %v1074
      %1076 = vmatmul.bf16.gmra.mxu0 %v815
      %v1077 = vpop.f32.mrf.mxu0
      %v1078 = vadd.f32 %v396, %v1077
      %v1079 = vpop.f32.mrf.mxu0
      %v1080 = vadd.f32 %v396, %v1079
      %1081 = vmatmul.bf16.gmra.mxu0 %v818
      %v1082 = vpop.f32.mrf.mxu0
      %v1083 = vadd.f32 %v396, %v1082
      %v1084 = vpop.f32.mrf.mxu0
      %v1085 = vadd.f32 %v396, %v1084
      %1086 = vmatmul.bf16.gmra.mxu0 %v821
      %v1087 = vpop.f32.mrf.mxu0
      %v1088 = vadd.f32 %v396, %v1087
      %v1089 = vpop.f32.mrf.mxu0
      %v1090 = vadd.f32 %v396, %v1089
      %1091 = vmatmul.bf16.gmra.mxu0 %v824
      %v1092 = vpop.f32.mrf.mxu0
      %v1093 = vadd.f32 %v396, %v1092
      %v1094 = vpop.f32.mrf.mxu0
      %v1095 = vadd.f32 %v396, %v1094
      %1096 = vmatmul.bf16.gmra.mxu0 %v827
      %v1097 = vpop.f32.mrf.mxu0
      %v1098 = vadd.f32 %v396, %v1097
      %v1099 = vpop.f32.mrf.mxu0
      %v1100 = vadd.f32 %v396, %v1099
      %1101 = vmatmul.bf16.gmra.mxu0 %v830
      %v1102 = vpop.f32.mrf.mxu0
      %v1103 = vadd.f32 %v396, %v1102
      %v1104 = vpop.f32.mrf.mxu0
      %v1105 = vadd.f32 %v396, %v1104
      %1106 = vmatmul.bf16.gmra.mxu0 %v833
      %v1107 = vpop.f32.mrf.mxu0
      %v1108 = vadd.f32 %v396, %v1107
      %v1109 = vpop.f32.mrf.mxu0
      %v1110 = vadd.f32 %v396, %v1109
      %1111 = vmatmul.bf16.gmra.mxu0 %v836
      %v1112 = vpop.f32.mrf.mxu0
      %v1113 = vadd.f32 %v396, %v1112
      %v1114 = vpop.f32.mrf.mxu0
      %v1115 = vadd.f32 %v396, %v1114
      %1116 = vmatmul.bf16.gmra.mxu0 %v839
      %v1117 = vpop.f32.mrf.mxu0
      %v1118 = vadd.f32 %v396, %v1117
      %v1119 = vpop.f32.mrf.mxu0
      %v1120 = vadd.f32 %v396, %v1119
      %1121 = vmatmul.bf16.gmra.mxu0 %v842
      %v1122 = vpop.f32.mrf.mxu0
      %v1123 = vadd.f32 %v396, %v1122
      %v1124 = vpop.f32.mrf.mxu0
      %v1125 = vadd.f32 %v396, %v1124
      %1126 = vmatmul.bf16.gmra.mxu0 %v845
      %v1127 = vpop.f32.mrf.mxu0
      %v1128 = vadd.f32 %v396, %v1127
      %v1129 = vpop.f32.mrf.mxu0
      %v1130 = vadd.f32 %v396, %v1129
      %1131 = vmatmul.bf16.gmra.mxu0 %v848
      %v1132 = vpop.f32.mrf.mxu0
      %v1133 = vadd.f32 %v396, %v1132
      %v1134 = vpop.f32.mrf.mxu0
      %v1135 = vadd.f32 %v396, %v1134
      %1136 = vmatmul.bf16.gmra.mxu0 %v851
      %v1137 = vpop.f32.mrf.mxu0
      %v1138 = vadd.f32 %v396, %v1137
      %v1139 = vpop.f32.mrf.mxu0
      %v1140 = vadd.f32 %v396, %v1139
      %1141 = vdwg.mxu0
      %vm1142 = vcmp.ge.f32.partialorder %v863, 0.0
      %vm1143 = vcmp.ge.f32.partialorder %v865, 0.0
      %vm1144 = vcmp.ge.f32.partialorder %v868, 0.0
      %vm1145 = vcmp.ge.f32.partialorder %v870, 0.0
      %vm1146 = vcmp.ge.f32.partialorder %v873, 0.0
      %vm1147 = vcmp.ge.f32.partialorder %v875, 0.0
      %vm1148 = vcmp.ge.f32.partialorder %v878, 0.0
      %vm1149 = vcmp.ge.f32.partialorder %v880, 0.0
      %vm1150 = vcmp.ge.f32.partialorder %v883, 0.0
      %vm1151 = vcmp.ge.f32.partialorder %v885, 0.0
      %vm1152 = vcmp.ge.f32.partialorder %v888, 0.0
      %vm1153 = vcmp.ge.f32.partialorder %v890, 0.0
      %vm1154 = vcmp.ge.f32.partialorder %v893, 0.0
      %vm1155 = vcmp.ge.f32.partialorder %v895, 0.0
      %vm1156 = vcmp.ge.f32.partialorder %v898, 0.0
      %vm1157 = vcmp.ge.f32.partialorder %v900, 0.0
      %vm1158 = vcmp.ge.f32.partialorder %v903, 0.0
      %vm1159 = vcmp.ge.f32.partialorder %v905, 0.0
      %vm1160 = vcmp.ge.f32.partialorder %v908, 0.0
      %vm1161 = vcmp.ge.f32.partialorder %v910, 0.0
      %vm1162 = vcmp.ge.f32.partialorder %v913, 0.0
      %vm1163 = vcmp.ge.f32.partialorder %v915, 0.0
      %vm1164 = vcmp.ge.f32.partialorder %v918, 0.0
      %vm1165 = vcmp.ge.f32.partialorder %v920, 0.0
      %vm1166 = vcmp.ge.f32.partialorder %v923, 0.0
      %vm1167 = vcmp.ge.f32.partialorder %v925, 0.0
      %vm1168 = vcmp.ge.f32.partialorder %v928, 0.0
      %vm1169 = vcmp.ge.f32.partialorder %v930, 0.0
      %vm1170 = vcmp.ge.f32.partialorder %v933, 0.0
      %vm1171 = vcmp.ge.f32.partialorder %v935, 0.0
      %vm1172 = vcmp.ge.f32.partialorder %v938, 0.0
      %vm1173 = vcmp.ge.f32.partialorder %v940, 0.0
      %vm1174 = vcmp.ge.f32.partialorder %v943, 0.0
      %vm1175 = vcmp.ge.f32.partialorder %v945, 0.0
      %vm1176 = vcmp.ge.f32.partialorder %v948, 0.0
      %vm1177 = vcmp.ge.f32.partialorder %v950, 0.0
      %vm1178 = vcmp.ge.f32.partialorder %v953, 0.0
      %vm1179 = vcmp.ge.f32.partialorder %v955, 0.0
      %vm1180 = vcmp.ge.f32.partialorder %v958, 0.0
      %vm1181 = vcmp.ge.f32.partialorder %v960, 0.0
      %vm1182 = vcmp.ge.f32.partialorder %v963, 0.0
      %vm1183 = vcmp.ge.f32.partialorder %v965, 0.0
      %vm1184 = vcmp.ge.f32.partialorder %v968, 0.0
      %vm1185 = vcmp.ge.f32.partialorder %v970, 0.0
      %vm1186 = vcmp.ge.f32.partialorder %v973, 0.0
      %vm1187 = vcmp.ge.f32.partialorder %v975, 0.0
      %vm1188 = vcmp.ge.f32.partialorder %v978, 0.0
      %vm1189 = vcmp.ge.f32.partialorder %v980, 0.0
      %vm1190 = vcmp.ge.f32.partialorder %v983, 0.0
      %vm1191 = vcmp.ge.f32.partialorder %v985, 0.0
      %vm1192 = vcmp.ge.f32.partialorder %v988, 0.0
      %vm1193 = vcmp.ge.f32.partialorder %v990, 0.0
      %vm1194 = vcmp.ge.f32.partialorder %v993, 0.0
      %vm1195 = vcmp.ge.f32.partialorder %v995, 0.0
      %vm1196 = vcmp.ge.f32.partialorder %v998, 0.0
      %vm1197 = vcmp.ge.f32.partialorder %v1000, 0.0
      %vm1198 = vcmp.ge.f32.partialorder %v1003, 0.0
      %vm1199 = vcmp.ge.f32.partialorder %v1005, 0.0
      %vm1200 = vcmp.ge.f32.partialorder %v1008, 0.0
      %vm1201 = vcmp.ge.f32.partialorder %v1010, 0.0
      %vm1202 = vcmp.ge.f32.partialorder %v1013, 0.0
      %vm1203 = vcmp.ge.f32.partialorder %v1015, 0.0
      %vm1204 = vcmp.ge.f32.partialorder %v1018, 0.0
      %vm1205 = vcmp.ge.f32.partialorder %v1020, 0.0
      %vm1206 = vcmp.ge.f32.partialorder %v1023, 0.0
      %vm1207 = vcmp.ge.f32.partialorder %v1025, 0.0
      %vm1208 = vcmp.ge.f32.partialorder %v1028, 0.0
      %vm1209 = vcmp.ge.f32.partialorder %v1030, 0.0
      %vm1210 = vcmp.ge.f32.partialorder %v1033, 0.0
      %vm1211 = vcmp.ge.f32.partialorder %v1035, 0.0
      %vm1212 = vcmp.ge.f32.partialorder %v1038, 0.0
      %vm1213 = vcmp.ge.f32.partialorder %v1040, 0.0
      %vm1214 = vcmp.ge.f32.partialorder %v1043, 0.0
      %vm1215 = vcmp.ge.f32.partialorder %v1045, 0.0
      %vm1216 = vcmp.ge.f32.partialorder %v1048, 0.0
      %vm1217 = vcmp.ge.f32.partialorder %v1050, 0.0
      %vm1218 = vcmp.ge.f32.partialorder %v1053, 0.0
      %vm1219 = vcmp.ge.f32.partialorder %v1055, 0.0
      %vm1220 = vcmp.ge.f32.partialorder %v1058, 0.0
      %vm1221 = vcmp.ge.f32.partialorder %v1060, 0.0
      %vm1222 = vcmp.ge.f32.partialorder %v1063, 0.0
      %vm1223 = vcmp.ge.f32.partialorder %v1065, 0.0
      %vm1224 = vcmp.ge.f32.partialorder %v1068, 0.0
      %vm1225 = vcmp.ge.f32.partialorder %v1070, 0.0
      %vm1226 = vcmp.ge.f32.partialorder %v1073, 0.0
      %vm1227 = vcmp.ge.f32.partialorder %v1075, 0.0
      %vm1228 = vcmp.ge.f32.partialorder %v1078, 0.0
      %vm1229 = vcmp.ge.f32.partialorder %v1080, 0.0
      %vm1230 = vcmp.ge.f32.partialorder %v1083, 0.0
      %vm1231 = vcmp.ge.f32.partialorder %v1085, 0.0
      %vm1232 = vcmp.ge.f32.partialorder %v1088, 0.0
      %vm1233 = vcmp.ge.f32.partialorder %v1090, 0.0
      %vm1234 = vcmp.ge.f32.partialorder %v1093, 0.0
      %vm1235 = vcmp.ge.f32.partialorder %v1095, 0.0
      %vm1236 = vcmp.ge.f32.partialorder %v1098, 0.0
      %vm1237 = vcmp.ge.f32.partialorder %v1100, 0.0
      %vm1238 = vcmp.ge.f32.partialorder %v1103, 0.0
      %vm1239 = vcmp.ge.f32.partialorder %v1105, 0.0
      %vm1240 = vcmp.ge.f32.partialorder %v1108, 0.0
      %vm1241 = vcmp.ge.f32.partialorder %v1110, 0.0
      %vm1242 = vcmp.ge.f32.partialorder %v1113, 0.0
      %vm1243 = vcmp.ge.f32.partialorder %v1115, 0.0
      %vm1244 = vcmp.ge.f32.partialorder %v1118, 0.0
      %vm1245 = vcmp.ge.f32.partialorder %v1120, 0.0
      %vm1246 = vcmp.ge.f32.partialorder %v1123, 0.0
      %vm1247 = vcmp.ge.f32.partialorder %v1125, 0.0
      %vm1248 = vcmp.ge.f32.partialorder %v1128, 0.0
      %vm1249 = vcmp.ge.f32.partialorder %v1130, 0.0
      %vm1250 = vcmp.ge.f32.partialorder %v1133, 0.0
      %vm1251 = vcmp.ge.f32.partialorder %v1135, 0.0
      %vm1252 = vcmp.ge.f32.partialorder %v1138, 0.0
      %vm1253 = vcmp.ge.f32.partialorder %v1140, 0.0
      %v1254 = vld [vmem:[%s3] sm:$0x1]
      %v1256 = vperm.slane %v1254, 0
      %v1258 = vmul.f32 %v1256, %v863
      %v1259 = vmul.f32 %v1256, %v865
      %v1260 = vmul.f32 %v1256, %v868
      %v1261 = vmul.f32 %v1256, %v870
      %v1262 = vmul.f32 %v1256, %v873
      %v1263 = vmul.f32 %v1256, %v875
      %v1264 = vmul.f32 %v1256, %v878
      %v1265 = vmul.f32 %v1256, %v880
      %v1266 = vmul.f32 %v1256, %v883
      %v1267 = vmul.f32 %v1256, %v885
      %v1268 = vmul.f32 %v1256, %v888
      %v1269 = vmul.f32 %v1256, %v890
      %v1270 = vmul.f32 %v1256, %v893
      %v1271 = vmul.f32 %v1256, %v895
      %v1272 = vmul.f32 %v1256, %v898
      %v1273 = vmul.f32 %v1256, %v900
      %v1274 = vmul.f32 %v1256, %v903
      %v1275 = vmul.f32 %v1256, %v905
      %v1276 = vmul.f32 %v1256, %v908
      %v1277 = vmul.f32 %v1256, %v910
      %v1278 = vmul.f32 %v1256, %v913
      %v1279 = vmul.f32 %v1256, %v915
      %v1280 = vmul.f32 %v1256, %v918
      %v1281 = vmul.f32 %v1256, %v920
      %v1282 = vmul.f32 %v1256, %v923
      %v1283 = vmul.f32 %v1256, %v925
      %v1284 = vmul.f32 %v1256, %v928
      %v1285 = vmul.f32 %v1256, %v930
      %v1286 = vmul.f32 %v1256, %v933
      %v1287 = vmul.f32 %v1256, %v935
      %v1288 = vmul.f32 %v1256, %v938
      %v1289 = vmul.f32 %v1256, %v940
      %v1290 = vmul.f32 %v1256, %v943
      %v1291 = vmul.f32 %v1256, %v945
      %v1292 = vmul.f32 %v1256, %v948
      %v1293 = vmul.f32 %v1256, %v950
      %v1294 = vmul.f32 %v1256, %v953
      %v1295 = vmul.f32 %v1256, %v955
      %v1296 = vmul.f32 %v1256, %v958
      %v1297 = vmul.f32 %v1256, %v960
      %v1298 = vmul.f32 %v1256, %v963
      %v1299 = vmul.f32 %v1256, %v965
      %v1300 = vmul.f32 %v1256, %v968
      %v1301 = vmul.f32 %v1256, %v970
      %v1302 = vmul.f32 %v1256, %v973
      %v1303 = vmul.f32 %v1256, %v975
      %v1304 = vmul.f32 %v1256, %v978
      %v1305 = vmul.f32 %v1256, %v980
      %v1306 = vmul.f32 %v1256, %v983
      %v1307 = vmul.f32 %v1256, %v985
      %v1308 = vmul.f32 %v1256, %v988
      %v1309 = vmul.f32 %v1256, %v990
      %v1310 = vmul.f32 %v1256, %v993
      %v1311 = vmul.f32 %v1256, %v995
      %v1312 = vmul.f32 %v1256, %v998
      %v1313 = vmul.f32 %v1256, %v1000
      %v1314 = vmul.f32 %v1256, %v1003
      %v1315 = vmul.f32 %v1256, %v1005
      %v1316 = vmul.f32 %v1256, %v1008
      %v1317 = vmul.f32 %v1256, %v1010
      %v1318 = vmul.f32 %v1256, %v1013
      %v1319 = vmul.f32 %v1256, %v1015
      %v1320 = vmul.f32 %v1256, %v1018
      %v1321 = vmul.f32 %v1256, %v1020
      %v1322 = vmul.f32 %v1256, %v1023
      %v1323 = vmul.f32 %v1256, %v1025
      %v1324 = vmul.f32 %v1256, %v1028
      %v1325 = vmul.f32 %v1256, %v1030
      %v1326 = vmul.f32 %v1256, %v1033
      %v1327 = vmul.f32 %v1256, %v1035
      %v1328 = vmul.f32 %v1256, %v1038
      %v1329 = vmul.f32 %v1256, %v1040
      %v1330 = vmul.f32 %v1256, %v1043
      %v1331 = vmul.f32 %v1256, %v1045
      %v1332 = vmul.f32 %v1256, %v1048
      %v1333 = vmul.f32 %v1256, %v1050
      %v1334 = vmul.f32 %v1256, %v1053
      %v1335 = vmul.f32 %v1256, %v1055
      %v1336 = vmul.f32 %v1256, %v1058
      %v1337 = vmul.f32 %v1256, %v1060
      %v1338 = vmul.f32 %v1256, %v1063
      %v1339 = vmul.f32 %v1256, %v1065
      %v1340 = vmul.f32 %v1256, %v1068
      %v1341 = vmul.f32 %v1256, %v1070
      %v1342 = vmul.f32 %v1256, %v1073
      %v1343 = vmul.f32 %v1256, %v1075
      %v1344 = vmul.f32 %v1256, %v1078
      %v1345 = vmul.f32 %v1256, %v1080
      %v1346 = vmul.f32 %v1256, %v1083
      %v1347 = vmul.f32 %v1256, %v1085
      %v1348 = vmul.f32 %v1256, %v1088
      %v1349 = vmul.f32 %v1256, %v1090
      %v1350 = vmul.f32 %v1256, %v1093
      %v1351 = vmul.f32 %v1256, %v1095
      %v1352 = vmul.f32 %v1256, %v1098
      %v1353 = vmul.f32 %v1256, %v1100
      %v1354 = vmul.f32 %v1256, %v1103
      %v1355 = vmul.f32 %v1256, %v1105
      %v1356 = vmul.f32 %v1256, %v1108
      %v1357 = vmul.f32 %v1256, %v1110
      %v1358 = vmul.f32 %v1256, %v1113
      %v1359 = vmul.f32 %v1256, %v1115
      %v1360 = vmul.f32 %v1256, %v1118
      %v1361 = vmul.f32 %v1256, %v1120
      %v1362 = vmul.f32 %v1256, %v1123
      %v1363 = vmul.f32 %v1256, %v1125
      %v1364 = vmul.f32 %v1256, %v1128
      %v1365 = vmul.f32 %v1256, %v1130
      %v1366 = vmul.f32 %v1256, %v1133
      %v1367 = vmul.f32 %v1256, %v1135
      %v1368 = vmul.f32 %v1256, %v1138
      %v1369 = vmul.f32 %v1256, %v1140
      %v1370 = vsel %vm1142, %v863, %v1258
      %v1371 = vsel %vm1143, %v865, %v1259
      %v1372 = vsel %vm1144, %v868, %v1260
      %v1373 = vsel %vm1145, %v870, %v1261
      %v1374 = vsel %vm1146, %v873, %v1262
      %v1375 = vsel %vm1147, %v875, %v1263
      %v1376 = vsel %vm1148, %v878, %v1264
      %v1377 = vsel %vm1149, %v880, %v1265
      %v1378 = vsel %vm1150, %v883, %v1266
      %v1379 = vsel %vm1151, %v885, %v1267
      %v1380 = vsel %vm1152, %v888, %v1268
      %v1381 = vsel %vm1153, %v890, %v1269
      %v1382 = vsel %vm1154, %v893, %v1270
      %v1383 = vsel %vm1155, %v895, %v1271
      %v1384 = vsel %vm1156, %v898, %v1272
      %v1385 = vsel %vm1157, %v900, %v1273
      %v1386 = vsel %vm1158, %v903, %v1274
      %v1387 = vsel %vm1159, %v905, %v1275
      %v1388 = vsel %vm1160, %v908, %v1276
      %v1389 = vsel %vm1161, %v910, %v1277
      %v1390 = vsel %vm1162, %v913, %v1278
      %v1391 = vsel %vm1163, %v915, %v1279
      %v1392 = vsel %vm1164, %v918, %v1280
      %v1393 = vsel %vm1165, %v920, %v1281
      %v1394 = vsel %vm1166, %v923, %v1282
      %v1395 = vsel %vm1167, %v925, %v1283
      %v1396 = vsel %vm1168, %v928, %v1284
      %v1397 = vsel %vm1169, %v930, %v1285
      %v1398 = vsel %vm1170, %v933, %v1286
      %v1399 = vsel %vm1171, %v935, %v1287
      %v1400 = vsel %vm1172, %v938, %v1288
      %v1401 = vsel %vm1173, %v940, %v1289
      %v1402 = vsel %vm1174, %v943, %v1290
      %v1403 = vsel %vm1175, %v945, %v1291
      %v1404 = vsel %vm1176, %v948, %v1292
      %v1405 = vsel %vm1177, %v950, %v1293
      %v1406 = vsel %vm1178, %v953, %v1294
      %v1407 = vsel %vm1179, %v955, %v1295
      %v1408 = vsel %vm1180, %v958, %v1296
      %v1409 = vsel %vm1181, %v960, %v1297
      %v1410 = vsel %vm1182, %v963, %v1298
      %v1411 = vsel %vm1183, %v965, %v1299
      %v1412 = vsel %vm1184, %v968, %v1300
      %v1413 = vsel %vm1185, %v970, %v1301
      %v1414 = vsel %vm1186, %v973, %v1302
      %v1415 = vsel %vm1187, %v975, %v1303
      %v1416 = vsel %vm1188, %v978, %v1304
      %v1417 = vsel %vm1189, %v980, %v1305
      %v1418 = vsel %vm1190, %v983, %v1306
      %v1419 = vsel %vm1191, %v985, %v1307
      %v1420 = vsel %vm1192, %v988, %v1308
      %v1421 = vsel %vm1193, %v990, %v1309
      %v1422 = vsel %vm1194, %v993, %v1310
      %v1423 = vsel %vm1195, %v995, %v1311
      %v1424 = vsel %vm1196, %v998, %v1312
      %v1425 = vsel %vm1197, %v1000, %v1313
      %v1426 = vsel %vm1198, %v1003, %v1314
      %v1427 = vsel %vm1199, %v1005, %v1315
      %v1428 = vsel %vm1200, %v1008, %v1316
      %v1429 = vsel %vm1201, %v1010, %v1317
      %v1430 = vsel %vm1202, %v1013, %v1318
      %v1431 = vsel %vm1203, %v1015, %v1319
      %v1432 = vsel %vm1204, %v1018, %v1320
      %v1433 = vsel %vm1205, %v1020, %v1321
      %v1434 = vsel %vm1206, %v1023, %v1322
      %v1435 = vsel %vm1207, %v1025, %v1323
      %v1436 = vsel %vm1208, %v1028, %v1324
      %v1437 = vsel %vm1209, %v1030, %v1325
      %v1438 = vsel %vm1210, %v1033, %v1326
      %v1439 = vsel %vm1211, %v1035, %v1327
      %v1440 = vsel %vm1212, %v1038, %v1328
      %v1441 = vsel %vm1213, %v1040, %v1329
      %v1442 = vsel %vm1214, %v1043, %v1330
      %v1443 = vsel %vm1215, %v1045, %v1331
      %v1444 = vsel %vm1216, %v1048, %v1332
      %v1445 = vsel %vm1217, %v1050, %v1333
      %v1446 = vsel %vm1218, %v1053, %v1334
      %v1447 = vsel %vm1219, %v1055, %v1335
      %v1448 = vsel %vm1220, %v1058, %v1336
      %v1449 = vsel %vm1221, %v1060, %v1337
      %v1450 = vsel %vm1222, %v1063, %v1338
      %v1451 = vsel %vm1223, %v1065, %v1339
      %v1452 = vsel %vm1224, %v1068, %v1340
      %v1453 = vsel %vm1225, %v1070, %v1341
      %v1454 = vsel %vm1226, %v1073, %v1342
      %v1455 = vsel %vm1227, %v1075, %v1343
      %v1456 = vsel %vm1228, %v1078, %v1344
      %v1457 = vsel %vm1229, %v1080, %v1345
      %v1458 = vsel %vm1230, %v1083, %v1346
      %v1459 = vsel %vm1231, %v1085, %v1347
      %v1460 = vsel %vm1232, %v1088, %v1348
      %v1461 = vsel %vm1233, %v1090, %v1349
      %v1462 = vsel %vm1234, %v1093, %v1350
      %v1463 = vsel %vm1235, %v1095, %v1351
      %v1464 = vsel %vm1236, %v1098, %v1352
      %v1465 = vsel %vm1237, %v1100, %v1353
      %v1466 = vsel %vm1238, %v1103, %v1354
      %v1467 = vsel %vm1239, %v1105, %v1355
      %v1468 = vsel %vm1240, %v1108, %v1356
      %v1469 = vsel %vm1241, %v1110, %v1357
      %v1470 = vsel %vm1242, %v1113, %v1358
      %v1471 = vsel %vm1243, %v1115, %v1359
      %v1472 = vsel %vm1244, %v1118, %v1360
      %v1473 = vsel %vm1245, %v1120, %v1361
      %v1474 = vsel %vm1246, %v1123, %v1362
      %v1475 = vsel %vm1247, %v1125, %v1363
      %v1476 = vsel %vm1248, %v1128, %v1364
      %v1477 = vsel %vm1249, %v1130, %v1365
      %v1478 = vsel %vm1250, %v1133, %v1366
      %v1479 = vsel %vm1251, %v1135, %v1367
      %v1480 = vsel %vm1252, %v1138, %v1368
      %v1481 = vsel %vm1253, %v1140, %v1369
      %v1482 = vmax.f32 %v1370, %v1426
      %v1483 = vmax.f32 %v1371, %v1427
      %v1484 = vmax.f32 %v1372, %v1428
      %v1485 = vmax.f32 %v1373, %v1429
      %v1486 = vmax.f32 %v1374, %v1430
      %v1487 = vmax.f32 %v1375, %v1431
      %v1488 = vmax.f32 %v1376, %v1432
      %v1489 = vmax.f32 %v1377, %v1433
      %v1490 = vmax.f32 %v1378, %v1434
      %v1491 = vmax.f32 %v1379, %v1435
      %v1492 = vmax.f32 %v1380, %v1436
      %v1493 = vmax.f32 %v1381, %v1437
      %v1494 = vmax.f32 %v1382, %v1438
      %v1495 = vmax.f32 %v1383, %v1439
      %v1496 = vmax.f32 %v1384, %v1440
      %v1497 = vmax.f32 %v1385, %v1441
      %v1498 = vmax.f32 %v1386, %v1442
      %v1499 = vmax.f32 %v1387, %v1443
      %v1500 = vmax.f32 %v1388, %v1444
      %v1501 = vmax.f32 %v1389, %v1445
      %v1502 = vmax.f32 %v1390, %v1446
      %v1503 = vmax.f32 %v1391, %v1447
      %v1504 = vmax.f32 %v1392, %v1448
      %v1505 = vmax.f32 %v1393, %v1449
      %v1506 = vmax.f32 %v1394, %v1450
      %v1507 = vmax.f32 %v1395, %v1451
      %v1508 = vmax.f32 %v1396, %v1452
      %v1509 = vmax.f32 %v1397, %v1453
      %v1510 = vmax.f32 %v1398, %v1454
      %v1511 = vmax.f32 %v1399, %v1455
      %v1512 = vmax.f32 %v1400, %v1456
      %v1513 = vmax.f32 %v1401, %v1457
      %v1514 = vmax.f32 %v1402, %v1458
      %v1515 = vmax.f32 %v1403, %v1459
      %v1516 = vmax.f32 %v1404, %v1460
      %v1517 = vmax.f32 %v1405, %v1461
      %v1518 = vmax.f32 %v1406, %v1462
      %v1519 = vmax.f32 %v1407, %v1463
      %v1520 = vmax.f32 %v1408, %v1464
      %v1521 = vmax.f32 %v1409, %v1465
      %v1522 = vmax.f32 %v1410, %v1466
      %v1523 = vmax.f32 %v1411, %v1467
      %v1524 = vmax.f32 %v1412, %v1468
      %v1525 = vmax.f32 %v1413, %v1469
      %v1526 = vmax.f32 %v1414, %v1470
      %v1527 = vmax.f32 %v1415, %v1471
      %v1528 = vmax.f32 %v1416, %v1472
      %v1529 = vmax.f32 %v1417, %v1473
      %v1530 = vmax.f32 %v1418, %v1474
      %v1531 = vmax.f32 %v1419, %v1475
      %v1532 = vmax.f32 %v1420, %v1476
      %v1533 = vmax.f32 %v1421, %v1477
      %v1534 = vmax.f32 %v1422, %v1478
      %v1535 = vmax.f32 %v1423, %v1479
      %v1536 = vmax.f32 %v1424, %v1480
      %v1537 = vmax.f32 %v1425, %v1481
      %v1538 = vmax.f32 %v1482, %v1484
      %v1539 = vmax.f32 %v1483, %v1485
      %v1540 = vmax.f32 %v1486, %v1488
      %v1541 = vmax.f32 %v1487, %v1489
      %v1542 = vmax.f32 %v1490, %v1492
      %v1543 = vmax.f32 %v1491, %v1493
      %v1544 = vmax.f32 %v1494, %v1496
      %v1545 = vmax.f32 %v1495, %v1497
      %v1546 = vmax.f32 %v1498, %v1500
      %v1547 = vmax.f32 %v1499, %v1501
      %v1548 = vmax.f32 %v1502, %v1504
      %v1549 = vmax.f32 %v1503, %v1505
      %v1550 = vmax.f32 %v1506, %v1508
      %v1551 = vmax.f32 %v1507, %v1509
      %v1552 = vmax.f32 %v1510, %v1512
      %v1553 = vmax.f32 %v1511, %v1513
      %v1554 = vmax.f32 %v1514, %v1516
      %v1555 = vmax.f32 %v1515, %v1517
      %v1556 = vmax.f32 %v1518, %v1520
      %v1557 = vmax.f32 %v1519, %v1521
      %v1558 = vmax.f32 %v1522, %v1524
      %v1559 = vmax.f32 %v1523, %v1525
      %v1560 = vmax.f32 %v1526, %v1528
      %v1561 = vmax.f32 %v1527, %v1529
      %v1562 = vmax.f32 %v1530, %v1532
      %v1563 = vmax.f32 %v1531, %v1533
      %v1564 = vmax.f32 %v1534, %v1536
      %v1565 = vmax.f32 %v1535, %v1537
      %v1566 = vlaneseq
      %v1567 = vshrl.u32 %v1566, 7
      %v1568 = vadd.s32 %v1567, 8
      %vm1569 = vcmp.lt.s32.totalorder %v1567, 14
      %vm1570 = vcmp.lt.s32.totalorder %v1568, 14
      %v1571 = vsel %vm1569, %v1538, 0.0
      %v1572 = vsel %vm1570, %v1539, 0.0
      %v1573 = vsel %vm1569, %v1540, 0.0
      %v1574 = vsel %vm1570, %v1541, 0.0
      %v1575 = vsel %vm1569, %v1542, 0.0
      %v1576 = vsel %vm1570, %v1543, 0.0
      %v1577 = vsel %vm1569, %v1544, 0.0
      %v1578 = vsel %vm1570, %v1545, 0.0
      %v1579 = vsel %vm1569, %v1546, 0.0
      %v1580 = vsel %vm1570, %v1547, 0.0
      %v1581 = vsel %vm1569, %v1548, 0.0
      %v1582 = vsel %vm1570, %v1549, 0.0
      %v1583 = vsel %vm1569, %v1550, 0.0
      %v1584 = vsel %vm1570, %v1551, 0.0
      %v1585 = vsel %vm1569, %v1552, 0.0
      %v1586 = vsel %vm1570, %v1553, 0.0
      %v1587 = vsel %vm1569, %v1554, 0.0
      %v1588 = vsel %vm1570, %v1555, 0.0
      %v1589 = vsel %vm1569, %v1556, 0.0
      %v1590 = vsel %vm1570, %v1557, 0.0
      %v1591 = vsel %vm1569, %v1558, 0.0
      %v1592 = vsel %vm1570, %v1559, 0.0
      %v1593 = vsel %vm1569, %v1560, 0.0
      %v1594 = vsel %vm1570, %v1561, 0.0
      %v1595 = vsel %vm1569, %v1562, 0.0
      %v1596 = vsel %vm1570, %v1563, 0.0
      %v1597 = vsel %vm1569, %v1564, 0.0
      %v1598 = vsel %vm1570, %v1565, 0.0
      %vm1599 = vcmask 523264
      %1600 = vst.msk [vmem:[#allocation2] sm:$0xff] %vm1599, 0.0
      %1601 = vst.msk [vmem:[#allocation2 + $0x8] sm:$0xff] %vm1599, 0.0
      %1602 = vst.msk [vmem:[#allocation2 + $0x10] sm:$0xff] %vm1599, 0.0
      %1603 = vst.msk [vmem:[#allocation2 + $0x18] sm:$0xff] %vm1599, 0.0
      %1604 = vst.msk [vmem:[#allocation2 + $0x20] sm:$0xff] %vm1599, 0.0
      %1605 = vst.msk [vmem:[#allocation2 + $0x28] sm:$0xff] %vm1599, 0.0
      %1606 = vst.msk [vmem:[#allocation2 + $0x30] sm:$0xff] %vm1599, 0.0
      %1607 = vst.msk [vmem:[#allocation2 + $0x38] sm:$0xff] %vm1599, 0.0
      %1608 = vst.msk [vmem:[#allocation2 + $0x40] sm:$0xff] %vm1599, 0.0
      %1609 = vst.msk [vmem:[#allocation2 + $0x48] sm:$0xff] %vm1599, 0.0
      %1610 = vst.msk [vmem:[#allocation2 + $0x50] sm:$0xff] %vm1599, 0.0
      %1611 = vst.msk [vmem:[#allocation2 + $0x58] sm:$0xff] %vm1599, 0.0
      %1612 = vst.msk [vmem:[#allocation2 + $0x60] sm:$0xff] %vm1599, 0.0
      %1613 = vst.msk [vmem:[#allocation2 + $0x68] sm:$0xff] %vm1599, 0.0
      %1614 = vst.msk [vmem:[#allocation2 + $0x70] sm:$0xff] %vm1599, 0.0
      %1615 = vst.msk [vmem:[#allocation2 + $0x78] sm:$0xff] %vm1599, 0.0
      %1616 = vst.msk [vmem:[#allocation2 + $0x80] sm:$0xff] %vm1599, 0.0
      %1617 = vst.msk [vmem:[#allocation2 + $0x88] sm:$0xff] %vm1599, 0.0
      %1618 = vst.msk [vmem:[#allocation2 + $0x90] sm:$0xff] %vm1599, 0.0
      %1619 = vst.msk [vmem:[#allocation2 + $0x98] sm:$0xff] %vm1599, 0.0
      %1620 = vst.msk [vmem:[#allocation2 + $0xa0] sm:$0xff] %vm1599, 0.0
      %1621 = vst.msk [vmem:[#allocation2 + $0xa8] sm:$0xff] %vm1599, 0.0
      %1622 = vst.msk [vmem:[#allocation2 + $0xb0] sm:$0xff] %vm1599, 0.0
      %1623 = vst.msk [vmem:[#allocation2 + $0xb8] sm:$0xff] %vm1599, 0.0
      %1624 = vst.msk [vmem:[#allocation2 + $0xc0] sm:$0xff] %vm1599, 0.0
      %1625 = vst.msk [vmem:[#allocation2 + $0xc8] sm:$0xff] %vm1599, 0.0
      %1626 = vst.msk [vmem:[#allocation2 + $0xd0] sm:$0xff] %vm1599, 0.0
      %1627 = vst.msk [vmem:[#allocation2 + $0xd8] sm:$0xff] %vm1599, 0.0
      %1628 = vst.msk [vmem:[#allocation2 + $0xe0] sm:$0xff] %vm1599, 0.0
      %1629 = vst.msk [vmem:[#allocation2 + $0xe8] sm:$0xff] %vm1599, 0.0
      %1630 = vst.msk [vmem:[#allocation2 + $0xf0] sm:$0xff] %vm1599, 0.0
      %1631 = vst.msk [vmem:[#allocation2 + $0xf8] sm:$0xff] %vm1599, 0.0
      %1632 = vst.msk [vmem:[#allocation2 + $0x100] sm:$0xff] %vm1599, 0.0
      %1633 = vst.msk [vmem:[#allocation2 + $0x108] sm:$0xff] %vm1599, 0.0
      %1634 = vst.msk [vmem:[#allocation2 + $0x11] sm:$0xff] %vm1599, %v1571
      %1635 = vst.msk [vmem:[#allocation2 + $0x19] sm:$0xff] %vm1599, %v1572
      %1636 = vst.msk [vmem:[#allocation2 + $0x21] sm:$0xff] %vm1599, %v1573
      %1637 = vst.msk [vmem:[#allocation2 + $0x29] sm:$0xff] %vm1599, %v1574
      %1638 = vst.msk [vmem:[#allocation2 + $0x31] sm:$0xff] %vm1599, %v1575
      %1639 = vst.msk [vmem:[#allocation2 + $0x39] sm:$0xff] %vm1599, %v1576
      %1640 = vst.msk [vmem:[#allocation2 + $0x41] sm:$0xff] %vm1599, %v1577
      %1641 = vst.msk [vmem:[#allocation2 + $0x49] sm:$0xff] %vm1599, %v1578
      %1642 = vst.msk [vmem:[#allocation2 + $0x51] sm:$0xff] %vm1599, %v1579
      %1643 = vst.msk [vmem:[#allocation2 + $0x59] sm:$0xff] %vm1599, %v1580
      %1644 = vst.msk [vmem:[#allocation2 + $0x61] sm:$0xff] %vm1599, %v1581
      %1645 = vst.msk [vmem:[#allocation2 + $0x69] sm:$0xff] %vm1599, %v1582
      %1646 = vst.msk [vmem:[#allocation2 + $0x71] sm:$0xff] %vm1599, %v1583
      %1647 = vst.msk [vmem:[#allocation2 + $0x79] sm:$0xff] %vm1599, %v1584
      %1648 = vst.msk [vmem:[#allocation2 + $0x81] sm:$0xff] %vm1599, %v1585
      %1649 = vst.msk [vmem:[#allocation2 + $0x89] sm:$0xff] %vm1599, %v1586
      %1650 = vst.msk [vmem:[#allocation2 + $0x91] sm:$0xff] %vm1599, %v1587
      %1651 = vst.msk [vmem:[#allocation2 + $0x99] sm:$0xff] %vm1599, %v1588
      %1652 = vst.msk [vmem:[#allocation2 + $0xa1] sm:$0xff] %vm1599, %v1589
      %1653 = vst.msk [vmem:[#allocation2 + $0xa9] sm:$0xff] %vm1599, %v1590
      %1654 = vst.msk [vmem:[#allocation2 + $0xb1] sm:$0xff] %vm1599, %v1591
      %1655 = vst.msk [vmem:[#allocation2 + $0xb9] sm:$0xff] %vm1599, %v1592
      %1656 = vst.msk [vmem:[#allocation2 + $0xc1] sm:$0xff] %vm1599, %v1593
      %1657 = vst.msk [vmem:[#allocation2 + $0xc9] sm:$0xff] %vm1599, %v1594
      %1658 = vst.msk [vmem:[#allocation2 + $0xd1] sm:$0xff] %vm1599, %v1595
      %1659 = vst.msk [vmem:[#allocation2 + $0xd9] sm:$0xff] %vm1599, %v1596
      %1660 = vst.msk [vmem:[#allocation2 + $0xe1] sm:$0xff] %vm1599, %v1597
      %1661 = vst.msk [vmem:[#allocation2 + $0xe9] sm:$0xff] %vm1599, %v1598
      %v1662 = vld [vmem:[#allocation2] sm:$0xff]
      %v1663 = vld [vmem:[#allocation2 + $0x8] sm:$0xff]
      %v1664 = vld [vmem:[#allocation2 + $0x10] sm:$0xff]
      %v1665 = vld [vmem:[#allocation2 + $0x18] sm:$0xff]
      %v1666 = vld [vmem:[#allocation2 + $0x20] sm:$0xff]
      %v1667 = vld [vmem:[#allocation2 + $0x28] sm:$0xff]
      %v1668 = vld [vmem:[#allocation2 + $0x30] sm:$0xff]
      %v1669 = vld [vmem:[#allocation2 + $0x38] sm:$0xff]
      %v1670 = vld [vmem:[#allocation2 + $0x40] sm:$0xff]
      %v1671 = vld [vmem:[#allocation2 + $0x48] sm:$0xff]
      %v1672 = vld [vmem:[#allocation2 + $0x50] sm:$0xff]
      %v1673 = vld [vmem:[#allocation2 + $0x58] sm:$0xff]
      %v1674 = vld [vmem:[#allocation2 + $0x60] sm:$0xff]
      %v1675 = vld [vmem:[#allocation2 + $0x68] sm:$0xff]
      %v1676 = vld [vmem:[#allocation2 + $0x70] sm:$0xff]
      %v1677 = vld [vmem:[#allocation2 + $0x78] sm:$0xff]
      %v1678 = vld [vmem:[#allocation2 + $0x80] sm:$0xff]
      %v1679 = vld [vmem:[#allocation2 + $0x88] sm:$0xff]
      %v1680 = vld [vmem:[#allocation2 + $0x90] sm:$0xff]
      %v1681 = vld [vmem:[#allocation2 + $0x98] sm:$0xff]
      %v1682 = vld [vmem:[#allocation2 + $0xa0] sm:$0xff]
      %v1683 = vld [vmem:[#allocation2 + $0xa8] sm:$0xff]
      %v1684 = vld [vmem:[#allocation2 + $0xb0] sm:$0xff]
      %v1685 = vld [vmem:[#allocation2 + $0xb8] sm:$0xff]
      %v1686 = vld [vmem:[#allocation2 + $0xc0] sm:$0xff]
      %v1687 = vld [vmem:[#allocation2 + $0xc8] sm:$0xff]
      %v1688 = vld [vmem:[#allocation2 + $0xd0] sm:$0xff]
      %v1689 = vld [vmem:[#allocation2 + $0xd8] sm:$0xff]
      %v1690 = vld [vmem:[#allocation2 + $0xe0] sm:$0xff]
      %v1691 = vld [vmem:[#allocation2 + $0xe8] sm:$0xff]
      %v1692 = vld [vmem:[#allocation2 + $0xf0] sm:$0xff]
      %v1693 = vld [vmem:[#allocation2 + $0xf8] sm:$0xff]
      %v1694 = vpack.c.bf16 %v1662, %v1662
      %v1695 = vpack.c.bf16 %v1663, %v1663
      %v1696 = vpack.c.bf16 %v1664, %v1664
      %v1697 = vpack.c.bf16 %v1665, %v1665
      %v1698 = vpack.c.bf16 %v1666, %v1666
      %v1699 = vpack.c.bf16 %v1667, %v1667
      %v1700 = vpack.c.bf16 %v1668, %v1668
      %v1701 = vpack.c.bf16 %v1669, %v1669
      %v1702 = vpack.c.bf16 %v1670, %v1670
      %v1703 = vpack.c.bf16 %v1671, %v1671
      %v1704 = vpack.c.bf16 %v1672, %v1672
      %v1705 = vpack.c.bf16 %v1673, %v1673
      %v1706 = vpack.c.bf16 %v1674, %v1674
      %v1707 = vpack.c.bf16 %v1675, %v1675
      %v1708 = vpack.c.bf16 %v1676, %v1676
      %v1709 = vpack.c.bf16 %v1677, %v1677
      %v1710 = vpack.c.bf16 %v1678, %v1678
      %v1711 = vpack.c.bf16 %v1679, %v1679
      %v1712 = vpack.c.bf16 %v1680, %v1680
      %v1713 = vpack.c.bf16 %v1681, %v1681
      %v1714 = vpack.c.bf16 %v1682, %v1682
      %v1715 = vpack.c.bf16 %v1683, %v1683
      %v1716 = vpack.c.bf16 %v1684, %v1684
      %v1717 = vpack.c.bf16 %v1685, %v1685
      %v1718 = vpack.c.bf16 %v1686, %v1686
      %v1719 = vpack.c.bf16 %v1687, %v1687
      %v1720 = vpack.c.bf16 %v1688, %v1688
      %v1721 = vpack.c.bf16 %v1689, %v1689
      %v1722 = vpack.c.bf16 %v1690, %v1690
      %v1723 = vpack.c.bf16 %v1691, %v1691
      %v1724 = vpack.c.bf16 %v1692, %v1692
      %v1725 = vpack.c.bf16 %v1693, %v1693
      %v1726 = vld [vmem:[#allocation2 + $0x1] sm:$0xff]
      %v1727 = vld [vmem:[#allocation2 + $0x9] sm:$0xff]
      %v1728 = vld [vmem:[#allocation2 + $0x11] sm:$0xff]
      %v1729 = vld [vmem:[#allocation2 + $0x19] sm:$0xff]
      %v1730 = vld [vmem:[#allocation2 + $0x21] sm:$0xff]
      %v1731 = vld [vmem:[#allocation2 + $0x29] sm:$0xff]
      %v1732 = vld [vmem:[#allocation2 + $0x31] sm:$0xff]
      %v1733 = vld [vmem:[#allocation2 + $0x39] sm:$0xff]
      %v1734 = vld [vmem:[#allocation2 + $0x41] sm:$0xff]
      %v1735 = vld [vmem:[#allocation2 + $0x49] sm:$0xff]
      %v1736 = vld [vmem:[#allocation2 + $0x51] sm:$0xff]
      %v1737 = vld [vmem:[#allocation2 + $0x59] sm:$0xff]
      %v1738 = vld [vmem:[#allocation2 + $0x61] sm:$0xff]
      %v1739 = vld [vmem:[#allocation2 + $0x69] sm:$0xff]
      %v1740 = vld [vmem:[#allocation2 + $0x71] sm:$0xff]
      %v1741 = vld [vmem:[#allocation2 + $0x79] sm:$0xff]
      %v1742 = vld [vmem:[#allocation2 + $0x81] sm:$0xff]
      %v1743 = vld [vmem:[#allocation2 + $0x89] sm:$0xff]
      %v1744 = vld [vmem:[#allocation2 + $0x91] sm:$0xff]
      %v1745 = vld [vmem:[#allocation2 + $0x99] sm:$0xff]
      %v1746 = vld [vmem:[#allocation2 + $0xa1] sm:$0xff]
      %v1747 = vld [vmem:[#allocation2 + $0xa9] sm:$0xff]
      %v1748 = vld [vmem:[#allocation2 + $0xb1] sm:$0xff]
      %v1749 = vld [vmem:[#allocation2 + $0xb9] sm:$0xff]
      %v1750 = vld [vmem:[#allocation2 + $0xc1] sm:$0xff]
      %v1751 = vld [vmem:[#allocation2 + $0xc9] sm:$0xff]
      %v1752 = vld [vmem:[#allocation2 + $0xd1] sm:$0xff]
      %v1753 = vld [vmem:[#allocation2 + $0xd9] sm:$0xff]
      %v1754 = vld [vmem:[#allocation2 + $0xe1] sm:$0xff]
      %v1755 = vld [vmem:[#allocation2 + $0xe9] sm:$0xff]
      %v1756 = vld [vmem:[#allocation2 + $0xf1] sm:$0xff]
      %v1757 = vld [vmem:[#allocation2 + $0xf9] sm:$0xff]
      %v1758 = vpack.c.bf16 %v1726, %v1726
      %v1759 = vpack.c.bf16 %v1727, %v1727
      %v1760 = vpack.c.bf16 %v1728, %v1728
      %v1761 = vpack.c.bf16 %v1729, %v1729
      %v1762 = vpack.c.bf16 %v1730, %v1730
      %v1763 = vpack.c.bf16 %v1731, %v1731
      %v1764 = vpack.c.bf16 %v1732, %v1732
      %v1765 = vpack.c.bf16 %v1733, %v1733
      %v1766 = vpack.c.bf16 %v1734, %v1734
      %v1767 = vpack.c.bf16 %v1735, %v1735
      %v1768 = vpack.c.bf16 %v1736, %v1736
      %v1769 = vpack.c.bf16 %v1737, %v1737
      %v1770 = vpack.c.bf16 %v1738, %v1738
      %v1771 = vpack.c.bf16 %v1739, %v1739
      %v1772 = vpack.c.bf16 %v1740, %v1740
      %v1773 = vpack.c.bf16 %v1741, %v1741
      %v1774 = vpack.c.bf16 %v1742, %v1742
      %v1775 = vpack.c.bf16 %v1743, %v1743
      %v1776 = vpack.c.bf16 %v1744, %v1744
      %v1777 = vpack.c.bf16 %v1745, %v1745
      %v1778 = vpack.c.bf16 %v1746, %v1746
      %v1779 = vpack.c.bf16 %v1747, %v1747
      %v1780 = vpack.c.bf16 %v1748, %v1748
      %v1781 = vpack.c.bf16 %v1749, %v1749
      %v1782 = vpack.c.bf16 %v1750, %v1750
      %v1783 = vpack.c.bf16 %v1751, %v1751
      %v1784 = vpack.c.bf16 %v1752, %v1752
      %v1785 = vpack.c.bf16 %v1753, %v1753
      %v1786 = vpack.c.bf16 %v1754, %v1754
      %v1787 = vpack.c.bf16 %v1755, %v1755
      %v1788 = vpack.c.bf16 %v1756, %v1756
      %v1789 = vpack.c.bf16 %v1757, %v1757
      %v1822 = vunpack.c.l.b16 %v1694
      %v1823 = vunpack.c.l.b16 %v1695
      %v1824 = vunpack.c.l.b16 %v1696
      %v1825 = vunpack.c.l.b16 %v1697
      %v1826 = vunpack.c.l.b16 %v1698
      %v1827 = vunpack.c.l.b16 %v1699
      %v1828 = vunpack.c.l.b16 %v1700
      %v1829 = vunpack.c.l.b16 %v1701
      %v1830 = vunpack.c.l.b16 %v1702
      %v1831 = vunpack.c.l.b16 %v1703
      %v1832 = vunpack.c.l.b16 %v1704
      %v1833 = vunpack.c.l.b16 %v1705
      %v1834 = vunpack.c.l.b16 %v1706
      %v1835 = vunpack.c.l.b16 %v1707
      %v1836 = vunpack.c.l.b16 %v1708
      %v1837 = vunpack.c.l.b16 %v1709
      %v1838 = vunpack.c.l.b16 %v1710
      %v1839 = vunpack.c.l.b16 %v1711
      %v1840 = vunpack.c.l.b16 %v1712
      %v1841 = vunpack.c.l.b16 %v1713
      %v1842 = vunpack.c.l.b16 %v1714
      %v1843 = vunpack.c.l.b16 %v1715
      %v1844 = vunpack.c.l.b16 %v1716
      %v1845 = vunpack.c.l.b16 %v1717
      %v1846 = vunpack.c.l.b16 %v1718
      %v1847 = vunpack.c.l.b16 %v1719
      %v1848 = vunpack.c.l.b16 %v1720
      %v1849 = vunpack.c.l.b16 %v1721
      %v1850 = vunpack.c.l.b16 %v1722
      %v1851 = vunpack.c.l.b16 %v1723
      %v1852 = vunpack.c.l.b16 %v1724
      %v1853 = vunpack.c.l.b16 %v1725
      %v1854 = vpack.c.b16 %v1823, %v1822
      %v1855 = vpack.c.b16 %v1825, %v1824
      %v1856 = vpack.c.b16 %v1827, %v1826
      %v1857 = vpack.c.b16 %v1829, %v1828
      %v1858 = vpack.c.b16 %v1831, %v1830
      %v1859 = vpack.c.b16 %v1833, %v1832
      %v1860 = vpack.c.b16 %v1835, %v1834
      %v1861 = vpack.c.b16 %v1837, %v1836
      %v1862 = vpack.c.b16 %v1839, %v1838
      %v1863 = vpack.c.b16 %v1841, %v1840
      %v1864 = vpack.c.b16 %v1843, %v1842
      %v1865 = vpack.c.b16 %v1845, %v1844
      %v1866 = vpack.c.b16 %v1847, %v1846
      %v1867 = vpack.c.b16 %v1849, %v1848
      %v1868 = vpack.c.b16 %v1851, %v1850
      %v1869 = vpack.c.b16 %v1853, %v1852
      %v1902 = vunpack.c.l.b16 %v1758
      %v1903 = vunpack.c.l.b16 %v1759
      %v1904 = vunpack.c.l.b16 %v1760
      %v1905 = vunpack.c.l.b16 %v1761
      %v1906 = vunpack.c.l.b16 %v1762
      %v1907 = vunpack.c.l.b16 %v1763
      %v1908 = vunpack.c.l.b16 %v1764
      %v1909 = vunpack.c.l.b16 %v1765
      %v1910 = vunpack.c.l.b16 %v1766
      %v1911 = vunpack.c.l.b16 %v1767
      %v1912 = vunpack.c.l.b16 %v1768
      %v1913 = vunpack.c.l.b16 %v1769
      %v1914 = vunpack.c.l.b16 %v1770
      %v1915 = vunpack.c.l.b16 %v1771
      %v1916 = vunpack.c.l.b16 %v1772
      %v1917 = vunpack.c.l.b16 %v1773
      %v1918 = vunpack.c.l.b16 %v1774
      %v1919 = vunpack.c.l.b16 %v1775
      %v1920 = vunpack.c.l.b16 %v1776
      %v1921 = vunpack.c.l.b16 %v1777
      %v1922 = vunpack.c.l.b16 %v1778
      %v1923 = vunpack.c.l.b16 %v1779
      %v1924 = vunpack.c.l.b16 %v1780
      %v1925 = vunpack.c.l.b16 %v1781
      %v1926 = vunpack.c.l.b16 %v1782
      %v1927 = vunpack.c.l.b16 %v1783
      %v1928 = vunpack.c.l.b16 %v1784
      %v1929 = vunpack.c.l.b16 %v1785
      %v1930 = vunpack.c.l.b16 %v1786
      %v1931 = vunpack.c.l.b16 %v1787
      %v1932 = vunpack.c.l.b16 %v1788
      %v1933 = vunpack.c.l.b16 %v1789
      %v1934 = vpack.c.b16 %v1903, %v1902
      %v1935 = vpack.c.b16 %v1905, %v1904
      %v1936 = vpack.c.b16 %v1907, %v1906
      %v1937 = vpack.c.b16 %v1909, %v1908
      %v1938 = vpack.c.b16 %v1911, %v1910
      %v1939 = vpack.c.b16 %v1913, %v1912
      %v1940 = vpack.c.b16 %v1915, %v1914
      %v1941 = vpack.c.b16 %v1917, %v1916
      %v1942 = vpack.c.b16 %v1919, %v1918
      %v1943 = vpack.c.b16 %v1921, %v1920
      %v1944 = vpack.c.b16 %v1923, %v1922
      %v1945 = vpack.c.b16 %v1925, %v1924
      %v1946 = vpack.c.b16 %v1927, %v1926
      %v1947 = vpack.c.b16 %v1929, %v1928
      %v1948 = vpack.c.b16 %v1931, %v1930
      %v1949 = vpack.c.b16 %v1933, %v1932
      %1950 = vrot.lane.b32.xlu0 %v1934, 64
      %v1951 = vpop.permute.xlu0 %1950
      %1952 = vrot.lane.b32.xlu0 %v1935, 64
      %v1953 = vpop.permute.xlu0 %1952
      %1954 = vrot.lane.b32.xlu0 %v1936, 64
      %v1955 = vpop.permute.xlu0 %1954
      %1956 = vrot.lane.b32.xlu0 %v1937, 64
      %v1957 = vpop.permute.xlu0 %1956
      %1958 = vrot.lane.b32.xlu0 %v1938, 64
      %v1959 = vpop.permute.xlu0 %1958
      %1960 = vrot.lane.b32.xlu0 %v1939, 64
      %v1961 = vpop.permute.xlu0 %1960
      %1962 = vrot.lane.b32.xlu0 %v1940, 64
      %v1963 = vpop.permute.xlu0 %1962
      %1964 = vrot.lane.b32.xlu0 %v1941, 64
      %v1965 = vpop.permute.xlu0 %1964
      %1966 = vrot.lane.b32.xlu0 %v1942, 64
      %v1967 = vpop.permute.xlu0 %1966
      %1968 = vrot.lane.b32.xlu0 %v1943, 64
      %v1969 = vpop.permute.xlu0 %1968
      %1970 = vrot.lane.b32.xlu0 %v1944, 64
      %v1971 = vpop.permute.xlu0 %1970
      %1972 = vrot.lane.b32.xlu0 %v1945, 64
      %v1973 = vpop.permute.xlu0 %1972
      %1974 = vrot.lane.b32.xlu0 %v1946, 64
      %v1975 = vpop.permute.xlu0 %1974
      %1976 = vrot.lane.b32.xlu0 %v1947, 64
      %v1977 = vpop.permute.xlu0 %1976
      %1978 = vrot.lane.b32.xlu0 %v1948, 64
      %v1979 = vpop.permute.xlu0 %1978
      %1980 = vrot.lane.b32.xlu0 %v1949, 64
      %v1981 = vpop.permute.xlu0 %1980
      %v1984 = vsel %vm1599, %v1854, %v1951
      %v1987 = vsel %vm1599, %v1855, %v1953
      %v1990 = vsel %vm1599, %v1856, %v1955
      %v1993 = vsel %vm1599, %v1857, %v1957
      %v1996 = vsel %vm1599, %v1858, %v1959
      %v1999 = vsel %vm1599, %v1859, %v1961
      %v2002 = vsel %vm1599, %v1860, %v1963
      %v2005 = vsel %vm1599, %v1861, %v1965
      %v2008 = vsel %vm1599, %v1862, %v1967
      %v2011 = vsel %vm1599, %v1863, %v1969
      %v2014 = vsel %vm1599, %v1864, %v1971
      %v2017 = vsel %vm1599, %v1865, %v1973
      %v2020 = vsel %vm1599, %v1866, %v1975
      %v2023 = vsel %vm1599, %v1867, %v1977
      %v2026 = vsel %vm1599, %v1868, %v1979
      %v2029 = vsel %vm1599, %v1869, %v1981
      %v2046 = vunpack.c.l.b16 %v1984
      %v2047 = vunpack.c.h.b16 %v1984
      %v2048 = vunpack.c.l.b16 %v1987
      %v2049 = vunpack.c.h.b16 %v1987
      %v2050 = vunpack.c.l.b16 %v1990
      %v2051 = vunpack.c.h.b16 %v1990
      %v2052 = vunpack.c.l.b16 %v1993
      %v2053 = vunpack.c.h.b16 %v1993
      %v2054 = vunpack.c.l.b16 %v1996
      %v2055 = vunpack.c.h.b16 %v1996
      %v2056 = vunpack.c.l.b16 %v1999
      %v2057 = vunpack.c.h.b16 %v1999
      %v2058 = vunpack.c.l.b16 %v2002
      %v2059 = vunpack.c.h.b16 %v2002
      %v2060 = vunpack.c.l.b16 %v2005
      %v2061 = vunpack.c.h.b16 %v2005
      %v2062 = vunpack.c.l.b16 %v2008
      %v2063 = vunpack.c.h.b16 %v2008
      %v2064 = vunpack.c.l.b16 %v2011
      %v2065 = vunpack.c.h.b16 %v2011
      %v2066 = vunpack.c.l.b16 %v2014
      %v2067 = vunpack.c.h.b16 %v2014
      %v2068 = vunpack.c.l.b16 %v2017
      %v2069 = vunpack.c.h.b16 %v2017
      %v2070 = vunpack.c.l.b16 %v2020
      %v2071 = vunpack.c.h.b16 %v2020
      %v2072 = vunpack.c.l.b16 %v2023
      %v2073 = vunpack.c.h.b16 %v2023
      %v2074 = vunpack.c.l.b16 %v2026
      %v2075 = vunpack.c.h.b16 %v2026
      %v2076 = vunpack.c.l.b16 %v2029
      %v2077 = vunpack.c.h.b16 %v2029
      %v2078 = vpack.c.b16 %v2046, %v2046
      %v2079 = vpack.c.b16 %v2047, %v2047
      %v2080 = vpack.c.b16 %v2048, %v2048
      %v2081 = vpack.c.b16 %v2049, %v2049
      %v2082 = vpack.c.b16 %v2050, %v2050
      %v2083 = vpack.c.b16 %v2051, %v2051
      %v2084 = vpack.c.b16 %v2052, %v2052
      %v2085 = vpack.c.b16 %v2053, %v2053
      %v2086 = vpack.c.b16 %v2054, %v2054
      %v2087 = vpack.c.b16 %v2055, %v2055
      %v2088 = vpack.c.b16 %v2056, %v2056
      %v2089 = vpack.c.b16 %v2057, %v2057
      %v2090 = vpack.c.b16 %v2058, %v2058
      %v2091 = vpack.c.b16 %v2059, %v2059
      %v2092 = vpack.c.b16 %v2060, %v2060
      %v2093 = vpack.c.b16 %v2061, %v2061
      %v2094 = vpack.c.b16 %v2062, %v2062
      %v2095 = vpack.c.b16 %v2063, %v2063
      %v2096 = vpack.c.b16 %v2064, %v2064
      %v2097 = vpack.c.b16 %v2065, %v2065
      %v2098 = vpack.c.b16 %v2066, %v2066
      %v2099 = vpack.c.b16 %v2067, %v2067
      %v2100 = vpack.c.b16 %v2068, %v2068
      %v2101 = vpack.c.b16 %v2069, %v2069
      %v2102 = vpack.c.b16 %v2070, %v2070
      %v2103 = vpack.c.b16 %v2071, %v2071
      %v2104 = vpack.c.b16 %v2072, %v2072
      %v2105 = vpack.c.b16 %v2073, %v2073
      %v2106 = vpack.c.b16 %v2074, %v2074
      %v2107 = vpack.c.b16 %v2075, %v2075
      %v2108 = vpack.c.b16 %v2076, %v2076
      %v2109 = vpack.c.b16 %v2077, %v2077
      %2142 = vst [vmem:[#allocation3] sm:$0xf] %v2078
      %2143 = vst [vmem:[#allocation3 + $0x8] sm:$0xf] %v2079
      %2144 = vst [vmem:[#allocation3 + $0x10] sm:$0xf] %v2080
      %2145 = vst [vmem:[#allocation3 + $0x18] sm:$0xf] %v2081
      %2146 = vst [vmem:[#allocation3 + $0x20] sm:$0xf] %v2082
      %2147 = vst [vmem:[#allocation3 + $0x28] sm:$0xf] %v2083
      %2148 = vst [vmem:[#allocation3 + $0x30] sm:$0xf] %v2084
      %2149 = vst [vmem:[#allocation3 + $0x38] sm:$0xf] %v2085
      %2150 = vst [vmem:[#allocation3 + $0x40] sm:$0xf] %v2086
      %2151 = vst [vmem:[#allocation3 + $0x48] sm:$0xf] %v2087
      %2152 = vst [vmem:[#allocation3 + $0x50] sm:$0xf] %v2088
      %2153 = vst [vmem:[#allocation3 + $0x58] sm:$0xf] %v2089
      %2154 = vst [vmem:[#allocation3 + $0x60] sm:$0xf] %v2090
      %2155 = vst [vmem:[#allocation3 + $0x68] sm:$0xf] %v2091
      %2156 = vst [vmem:[#allocation3 + $0x70] sm:$0xf] %v2092
      %2157 = vst [vmem:[#allocation3 + $0x78] sm:$0xf] %v2093
      %2158 = vst [vmem:[#allocation3 + $0x80] sm:$0xf] %v2094
      %2159 = vst [vmem:[#allocation3 + $0x88] sm:$0xf] %v2095
      %2160 = vst [vmem:[#allocation3 + $0x90] sm:$0xf] %v2096
      %2161 = vst [vmem:[#allocation3 + $0x98] sm:$0xf] %v2097
      %2162 = vst [vmem:[#allocation3 + $0xa0] sm:$0xf] %v2098
      %2163 = vst [vmem:[#allocation3 + $0xa8] sm:$0xf] %v2099
      %2164 = vst [vmem:[#allocation3 + $0xb0] sm:$0xf] %v2100
      %2165 = vst [vmem:[#allocation3 + $0xb8] sm:$0xf] %v2101
      %2166 = vst [vmem:[#allocation3 + $0xc0] sm:$0xf] %v2102
      %2167 = vst [vmem:[#allocation3 + $0xc8] sm:$0xf] %v2103
      %2168 = vst [vmem:[#allocation3 + $0xd0] sm:$0xf] %v2104
      %2169 = vst [vmem:[#allocation3 + $0xd8] sm:$0xf] %v2105
      %2170 = vst [vmem:[#allocation3 + $0xe0] sm:$0xf] %v2106
      %2171 = vst [vmem:[#allocation3 + $0xe8] sm:$0xf] %v2107
      %2172 = vst [vmem:[#allocation3 + $0xf0] sm:$0xf] %v2108
      %2173 = vst [vmem:[#allocation3 + $0xf8] sm:$0xf] %v2109
      %v2174 = vld [vmem:[#allocation2 + $0x2] sm:$0xff]
      %v2175 = vld [vmem:[#allocation2 + $0xa] sm:$0xff]
      %v2176 = vld [vmem:[#allocation2 + $0x12] sm:$0xff]
      %v2177 = vld [vmem:[#allocation2 + $0x1a] sm:$0xff]
      %v2178 = vld [vmem:[#allocation2 + $0x22] sm:$0xff]
      %v2179 = vld [vmem:[#allocation2 + $0x2a] sm:$0xff]
      %v2180 = vld [vmem:[#allocation2 + $0x32] sm:$0xff]
      %v2181 = vld [vmem:[#allocation2 + $0x3a] sm:$0xff]
      %v2182 = vld [vmem:[#allocation2 + $0x42] sm:$0xff]
      %v2183 = vld [vmem:[#allocation2 + $0x4a] sm:$0xff]
      %v2184 = vld [vmem:[#allocation2 + $0x52] sm:$0xff]
      %v2185 = vld [vmem:[#allocation2 + $0x5a] sm:$0xff]
      %v2186 = vld [vmem:[#allocation2 + $0x62] sm:$0xff]
      %v2187 = vld [vmem:[#allocation2 + $0x6a] sm:$0xff]
      %v2188 = vld [vmem:[#allocation2 + $0x72] sm:$0xff]
      %v2189 = vld [vmem:[#allocation2 + $0x7a] sm:$0xff]
      %v2190 = vld [vmem:[#allocation2 + $0x82] sm:$0xff]
      %v2191 = vld [vmem:[#allocation2 + $0x8a] sm:$0xff]
      %v2192 = vld [vmem:[#allocation2 + $0x92] sm:$0xff]
      %v2193 = vld [vmem:[#allocation2 + $0x9a] sm:$0xff]
      %v2194 = vld [vmem:[#allocation2 + $0xa2] sm:$0xff]
      %v2195 = vld [vmem:[#allocation2 + $0xaa] sm:$0xff]
      %v2196 = vld [vmem:[#allocation2 + $0xb2] sm:$0xff]
      %v2197 = vld [vmem:[#allocation2 + $0xba] sm:$0xff]
      %v2198 = vld [vmem:[#allocation2 + $0xc2] sm:$0xff]
      %v2199 = vld [vmem:[#allocation2 + $0xca] sm:$0xff]
      %v2200 = vld [vmem:[#allocation2 + $0xd2] sm:$0xff]
      %v2201 = vld [vmem:[#allocation2 + $0xda] sm:$0xff]
      %v2202 = vld [vmem:[#allocation2 + $0xe2] sm:$0xff]
      %v2203 = vld [vmem:[#allocation2 + $0xea] sm:$0xff]
      %v2204 = vld [vmem:[#allocation2 + $0xf2] sm:$0xff]
      %v2205 = vld [vmem:[#allocation2 + $0xfa] sm:$0xff]
      %v2206 = vpack.c.bf16 %v2174, %v2174
      %v2207 = vpack.c.bf16 %v2175, %v2175
      %v2208 = vpack.c.bf16 %v2176, %v2176
      %v2209 = vpack.c.bf16 %v2177, %v2177
      %v2210 = vpack.c.bf16 %v2178, %v2178
      %v2211 = vpack.c.bf16 %v2179, %v2179
      %v2212 = vpack.c.bf16 %v2180, %v2180
      %v2213 = vpack.c.bf16 %v2181, %v2181
      %v2214 = vpack.c.bf16 %v2182, %v2182
      %v2215 = vpack.c.bf16 %v2183, %v2183
      %v2216 = vpack.c.bf16 %v2184, %v2184
      %v2217 = vpack.c.bf16 %v2185, %v2185
      %v2218 = vpack.c.bf16 %v2186, %v2186
      %v2219 = vpack.c.bf16 %v2187, %v2187
      %v2220 = vpack.c.bf16 %v2188, %v2188
      %v2221 = vpack.c.bf16 %v2189, %v2189
      %v2222 = vpack.c.bf16 %v2190, %v2190
      %v2223 = vpack.c.bf16 %v2191, %v2191
      %v2224 = vpack.c.bf16 %v2192, %v2192
      %v2225 = vpack.c.bf16 %v2193, %v2193
      %v2226 = vpack.c.bf16 %v2194, %v2194
      %v2227 = vpack.c.bf16 %v2195, %v2195
      %v2228 = vpack.c.bf16 %v2196, %v2196
      %v2229 = vpack.c.bf16 %v2197, %v2197
      %v2230 = vpack.c.bf16 %v2198, %v2198
      %v2231 = vpack.c.bf16 %v2199, %v2199
      %v2232 = vpack.c.bf16 %v2200, %v2200
      %v2233 = vpack.c.bf16 %v2201, %v2201
      %v2234 = vpack.c.bf16 %v2202, %v2202
      %v2235 = vpack.c.bf16 %v2203, %v2203
      %v2236 = vpack.c.bf16 %v2204, %v2204
      %v2237 = vpack.c.bf16 %v2205, %v2205
      %v2238 = vld [vmem:[#allocation2 + $0x3] sm:$0xff]
      %v2239 = vld [vmem:[#allocation2 + $0xb] sm:$0xff]
      %v2240 = vld [vmem:[#allocation2 + $0x13] sm:$0xff]
      %v2241 = vld [vmem:[#allocation2 + $0x1b] sm:$0xff]
      %v2242 = vld [vmem:[#allocation2 + $0x23] sm:$0xff]
      %v2243 = vld [vmem:[#allocation2 + $0x2b] sm:$0xff]
      %v2244 = vld [vmem:[#allocation2 + $0x33] sm:$0xff]
      %v2245 = vld [vmem:[#allocation2 + $0x3b] sm:$0xff]
      %v2246 = vld [vmem:[#allocation2 + $0x43] sm:$0xff]
      %v2247 = vld [vmem:[#allocation2 + $0x4b] sm:$0xff]
      %v2248 = vld [vmem:[#allocation2 + $0x53] sm:$0xff]
      %v2249 = vld [vmem:[#allocation2 + $0x5b] sm:$0xff]
      %v2250 = vld [vmem:[#allocation2 + $0x63] sm:$0xff]
      %v2251 = vld [vmem:[#allocation2 + $0x6b] sm:$0xff]
      %v2252 = vld [vmem:[#allocation2 + $0x73] sm:$0xff]
      %v2253 = vld [vmem:[#allocation2 + $0x7b] sm:$0xff]
      %v2254 = vld [vmem:[#allocation2 + $0x83] sm:$0xff]
      %v2255 = vld [vmem:[#allocation2 + $0x8b] sm:$0xff]
      %v2256 = vld [vmem:[#allocation2 + $0x93] sm:$0xff]
      %v2257 = vld [vmem:[#allocation2 + $0x9b] sm:$0xff]
      %v2258 = vld [vmem:[#allocation2 + $0xa3] sm:$0xff]
      %v2259 = vld [vmem:[#allocation2 + $0xab] sm:$0xff]
      %v2260 = vld [vmem:[#allocation2 + $0xb3] sm:$0xff]
      %v2261 = vld [vmem:[#allocation2 + $0xbb] sm:$0xff]
      %v2262 = vld [vmem:[#allocation2 + $0xc3] sm:$0xff]
      %v2263 = vld [vmem:[#allocation2 + $0xcb] sm:$0xff]
      %v2264 = vld [vmem:[#allocation2 + $0xd3] sm:$0xff]
      %v2265 = vld [vmem:[#allocation2 + $0xdb] sm:$0xff]
      %v2266 = vld [vmem:[#allocation2 + $0xe3] sm:$0xff]
      %v2267 = vld [vmem:[#allocation2 + $0xeb] sm:$0xff]
      %v2268 = vld [vmem:[#allocation2 + $0xf3] sm:$0xff]
      %v2269 = vld [vmem:[#allocation2 + $0xfb] sm:$0xff]
      %v2270 = vpack.c.bf16 %v2238, %v2238
      %v2271 = vpack.c.bf16 %v2239, %v2239
      %v2272 = vpack.c.bf16 %v2240, %v2240
      %v2273 = vpack.c.bf16 %v2241, %v2241
      %v2274 = vpack.c.bf16 %v2242, %v2242
      %v2275 = vpack.c.bf16 %v2243, %v2243
      %v2276 = vpack.c.bf16 %v2244, %v2244
      %v2277 = vpack.c.bf16 %v2245, %v2245
      %v2278 = vpack.c.bf16 %v2246, %v2246
      %v2279 = vpack.c.bf16 %v2247, %v2247
      %v2280 = vpack.c.bf16 %v2248, %v2248
      %v2281 = vpack.c.bf16 %v2249, %v2249
      %v2282 = vpack.c.bf16 %v2250, %v2250
      %v2283 = vpack.c.bf16 %v2251, %v2251
      %v2284 = vpack.c.bf16 %v2252, %v2252
      %v2285 = vpack.c.bf16 %v2253, %v2253
      %v2286 = vpack.c.bf16 %v2254, %v2254
      %v2287 = vpack.c.bf16 %v2255, %v2255
      %v2288 = vpack.c.bf16 %v2256, %v2256
      %v2289 = vpack.c.bf16 %v2257, %v2257
      %v2290 = vpack.c.bf16 %v2258, %v2258
      %v2291 = vpack.c.bf16 %v2259, %v2259
      %v2292 = vpack.c.bf16 %v2260, %v2260
      %v2293 = vpack.c.bf16 %v2261, %v2261
      %v2294 = vpack.c.bf16 %v2262, %v2262
      %v2295 = vpack.c.bf16 %v2263, %v2263
      %v2296 = vpack.c.bf16 %v2264, %v2264
      %v2297 = vpack.c.bf16 %v2265, %v2265
      %v2298 = vpack.c.bf16 %v2266, %v2266
      %v2299 = vpack.c.bf16 %v2267, %v2267
      %v2300 = vpack.c.bf16 %v2268, %v2268
      %v2301 = vpack.c.bf16 %v2269, %v2269
      %v2334 = vunpack.c.l.b16 %v2206
      %v2335 = vunpack.c.l.b16 %v2207
      %v2336 = vunpack.c.l.b16 %v2208
      %v2337 = vunpack.c.l.b16 %v2209
      %v2338 = vunpack.c.l.b16 %v2210
      %v2339 = vunpack.c.l.b16 %v2211
      %v2340 = vunpack.c.l.b16 %v2212
      %v2341 = vunpack.c.l.b16 %v2213
      %v2342 = vunpack.c.l.b16 %v2214
      %v2343 = vunpack.c.l.b16 %v2215
      %v2344 = vunpack.c.l.b16 %v2216
      %v2345 = vunpack.c.l.b16 %v2217
      %v2346 = vunpack.c.l.b16 %v2218
      %v2347 = vunpack.c.l.b16 %v2219
      %v2348 = vunpack.c.l.b16 %v2220
      %v2349 = vunpack.c.l.b16 %v2221
      %v2350 = vunpack.c.l.b16 %v2222
      %v2351 = vunpack.c.l.b16 %v2223
      %v2352 = vunpack.c.l.b16 %v2224
      %v2353 = vunpack.c.l.b16 %v2225
      %v2354 = vunpack.c.l.b16 %v2226
      %v2355 = vunpack.c.l.b16 %v2227
      %v2356 = vunpack.c.l.b16 %v2228
      %v2357 = vunpack.c.l.b16 %v2229
      %v2358 = vunpack.c.l.b16 %v2230
      %v2359 = vunpack.c.l.b16 %v2231
      %v2360 = vunpack.c.l.b16 %v2232
      %v2361 = vunpack.c.l.b16 %v2233
      %v2362 = vunpack.c.l.b16 %v2234
      %v2363 = vunpack.c.l.b16 %v2235
      %v2364 = vunpack.c.l.b16 %v2236
      %v2365 = vunpack.c.l.b16 %v2237
      %v2366 = vpack.c.b16 %v2335, %v2334
      %v2367 = vpack.c.b16 %v2337, %v2336
      %v2368 = vpack.c.b16 %v2339, %v2338
      %v2369 = vpack.c.b16 %v2341, %v2340
      %v2370 = vpack.c.b16 %v2343, %v2342
      %v2371 = vpack.c.b16 %v2345, %v2344
      %v2372 = vpack.c.b16 %v2347, %v2346
      %v2373 = vpack.c.b16 %v2349, %v2348
      %v2374 = vpack.c.b16 %v2351, %v2350
      %v2375 = vpack.c.b16 %v2353, %v2352
      %v2376 = vpack.c.b16 %v2355, %v2354
      %v2377 = vpack.c.b16 %v2357, %v2356
      %v2378 = vpack.c.b16 %v2359, %v2358
      %v2379 = vpack.c.b16 %v2361, %v2360
      %v2380 = vpack.c.b16 %v2363, %v2362
      %v2381 = vpack.c.b16 %v2365, %v2364
      %v2414 = vunpack.c.l.b16 %v2270
      %v2415 = vunpack.c.l.b16 %v2271
      %v2416 = vunpack.c.l.b16 %v2272
      %v2417 = vunpack.c.l.b16 %v2273
      %v2418 = vunpack.c.l.b16 %v2274
      %v2419 = vunpack.c.l.b16 %v2275
      %v2420 = vunpack.c.l.b16 %v2276
      %v2421 = vunpack.c.l.b16 %v2277
      %v2422 = vunpack.c.l.b16 %v2278
      %v2423 = vunpack.c.l.b16 %v2279
      %v2424 = vunpack.c.l.b16 %v2280
      %v2425 = vunpack.c.l.b16 %v2281
      %v2426 = vunpack.c.l.b16 %v2282
      %v2427 = vunpack.c.l.b16 %v2283
      %v2428 = vunpack.c.l.b16 %v2284
      %v2429 = vunpack.c.l.b16 %v2285
      %v2430 = vunpack.c.l.b16 %v2286
      %v2431 = vunpack.c.l.b16 %v2287
      %v2432 = vunpack.c.l.b16 %v2288
      %v2433 = vunpack.c.l.b16 %v2289
      %v2434 = vunpack.c.l.b16 %v2290
      %v2435 = vunpack.c.l.b16 %v2291
      %v2436 = vunpack.c.l.b16 %v2292
      %v2437 = vunpack.c.l.b16 %v2293
      %v2438 = vunpack.c.l.b16 %v2294
      %v2439 = vunpack.c.l.b16 %v2295
      %v2440 = vunpack.c.l.b16 %v2296
      %v2441 = vunpack.c.l.b16 %v2297
      %v2442 = vunpack.c.l.b16 %v2298
      %v2443 = vunpack.c.l.b16 %v2299
      %v2444 = vunpack.c.l.b16 %v2300
      %v2445 = vunpack.c.l.b16 %v2301
      %v2446 = vpack.c.b16 %v2415, %v2414
      %v2447 = vpack.c.b16 %v2417, %v2416
      %v2448 = vpack.c.b16 %v2419, %v2418
      %v2449 = vpack.c.b16 %v2421, %v2420
      %v2450 = vpack.c.b16 %v2423, %v2422
      %v2451 = vpack.c.b16 %v2425, %v2424
      %v2452 = vpack.c.b16 %v2427, %v2426
      %v2453 = vpack.c.b16 %v2429, %v2428
      %v2454 = vpack.c.b16 %v2431, %v2430
      %v2455 = vpack.c.b16 %v2433, %v2432
      %v2456 = vpack.c.b16 %v2435, %v2434
      %v2457 = vpack.c.b16 %v2437, %v2436
      %v2458 = vpack.c.b16 %v2439, %v2438
      %v2459 = vpack.c.b16 %v2441, %v2440
      %v2460 = vpack.c.b16 %v2443, %v2442
      %v2461 = vpack.c.b16 %v2445, %v2444
      %2462 = vrot.lane.b32.xlu0 %v2446, 64
      %v2463 = vpop.permute.xlu0 %2462
      %2464 = vrot.lane.b32.xlu0 %v2447, 64
      %v2465 = vpop.permute.xlu0 %2464
      %2466 = vrot.lane.b32.xlu0 %v2448, 64
      %v2467 = vpop.permute.xlu0 %2466
      %2468 = vrot.lane.b32.xlu0 %v2449, 64
      %v2469 = vpop.permute.xlu0 %2468
      %2470 = vrot.lane.b32.xlu0 %v2450, 64
      %v2471 = vpop.permute.xlu0 %2470
      %2472 = vrot.lane.b32.xlu0 %v2451, 64
      %v2473 = vpop.permute.xlu0 %2472
      %2474 = vrot.lane.b32.xlu0 %v2452, 64
      %v2475 = vpop.permute.xlu0 %2474
      %2476 = vrot.lane.b32.xlu0 %v2453, 64
      %v2477 = vpop.permute.xlu0 %2476
      %2478 = vrot.lane.b32.xlu0 %v2454, 64
      %v2479 = vpop.permute.xlu0 %2478
      %2480 = vrot.lane.b32.xlu0 %v2455, 64
      %v2481 = vpop.permute.xlu0 %2480
      %2482 = vrot.lane.b32.xlu0 %v2456, 64
      %v2483 = vpop.permute.xlu0 %2482
      %2484 = vrot.lane.b32.xlu0 %v2457, 64
      %v2485 = vpop.permute.xlu0 %2484
      %2486 = vrot.lane.b32.xlu0 %v2458, 64
      %v2487 = vpop.permute.xlu0 %2486
      %2488 = vrot.lane.b32.xlu0 %v2459, 64
      %v2489 = vpop.permute.xlu0 %2488
      %2490 = vrot.lane.b32.xlu0 %v2460, 64
      %v2491 = vpop.permute.xlu0 %2490
      %2492 = vrot.lane.b32.xlu0 %v2461, 64
      %v2493 = vpop.permute.xlu0 %2492
      %v2496 = vsel %vm1599, %v2366, %v2463
      %v2499 = vsel %vm1599, %v2367, %v2465
      %v2502 = vsel %vm1599, %v2368, %v2467
      %v2505 = vsel %vm1599, %v2369, %v2469
      %v2508 = vsel %vm1599, %v2370, %v2471
      %v2511 = vsel %vm1599, %v2371, %v2473
      %v2514 = vsel %vm1599, %v2372, %v2475
      %v2517 = vsel %vm1599, %v2373, %v2477
      %v2520 = vsel %vm1599, %v2374, %v2479
      %v2523 = vsel %vm1599, %v2375, %v2481
      %v2526 = vsel %vm1599, %v2376, %v2483
      %v2529 = vsel %vm1599, %v2377, %v2485
      %v2532 = vsel %vm1599, %v2378, %v2487
      %v2535 = vsel %vm1599, %v2379, %v2489
      %v2538 = vsel %vm1599, %v2380, %v2491
      %v2541 = vsel %vm1599, %v2381, %v2493
      %v2558 = vunpack.c.l.b16 %v2496
      %v2559 = vunpack.c.h.b16 %v2496
      %v2560 = vunpack.c.l.b16 %v2499
      %v2561 = vunpack.c.h.b16 %v2499
      %v2562 = vunpack.c.l.b16 %v2502
      %v2563 = vunpack.c.h.b16 %v2502
      %v2564 = vunpack.c.l.b16 %v2505
      %v2565 = vunpack.c.h.b16 %v2505
      %v2566 = vunpack.c.l.b16 %v2508
      %v2567 = vunpack.c.h.b16 %v2508
      %v2568 = vunpack.c.l.b16 %v2511
      %v2569 = vunpack.c.h.b16 %v2511
      %v2570 = vunpack.c.l.b16 %v2514
      %v2571 = vunpack.c.h.b16 %v2514
      %v2572 = vunpack.c.l.b16 %v2517
      %v2573 = vunpack.c.h.b16 %v2517
      %v2574 = vunpack.c.l.b16 %v2520
      %v2575 = vunpack.c.h.b16 %v2520
      %v2576 = vunpack.c.l.b16 %v2523
      %v2577 = vunpack.c.h.b16 %v2523
      %v2578 = vunpack.c.l.b16 %v2526
      %v2579 = vunpack.c.h.b16 %v2526
      %v2580 = vunpack.c.l.b16 %v2529
      %v2581 = vunpack.c.h.b16 %v2529
      %v2582 = vunpack.c.l.b16 %v2532
      %v2583 = vunpack.c.h.b16 %v2532
      %v2584 = vunpack.c.l.b16 %v2535
      %v2585 = vunpack.c.h.b16 %v2535
      %v2586 = vunpack.c.l.b16 %v2538
      %v2587 = vunpack.c.h.b16 %v2538
      %v2588 = vunpack.c.l.b16 %v2541
      %v2589 = vunpack.c.h.b16 %v2541
      %v2590 = vpack.c.b16 %v2558, %v2558
      %v2591 = vpack.c.b16 %v2559, %v2559
      %v2592 = vpack.c.b16 %v2560, %v2560
      %v2593 = vpack.c.b16 %v2561, %v2561
      %v2594 = vpack.c.b16 %v2562, %v2562
      %v2595 = vpack.c.b16 %v2563, %v2563
      %v2596 = vpack.c.b16 %v2564, %v2564
      %v2597 = vpack.c.b16 %v2565, %v2565
      %v2598 = vpack.c.b16 %v2566, %v2566
      %v2599 = vpack.c.b16 %v2567, %v2567
      %v2600 = vpack.c.b16 %v2568, %v2568
      %v2601 = vpack.c.b16 %v2569, %v2569
      %v2602 = vpack.c.b16 %v2570, %v2570
      %v2603 = vpack.c.b16 %v2571, %v2571
      %v2604 = vpack.c.b16 %v2572, %v2572
      %v2605 = vpack.c.b16 %v2573, %v2573
      %v2606 = vpack.c.b16 %v2574, %v2574
      %v2607 = vpack.c.b16 %v2575, %v2575
      %v2608 = vpack.c.b16 %v2576, %v2576
      %v2609 = vpack.c.b16 %v2577, %v2577
      %v2610 = vpack.c.b16 %v2578, %v2578
      %v2611 = vpack.c.b16 %v2579, %v2579
      %v2612 = vpack.c.b16 %v2580, %v2580
      %v2613 = vpack.c.b16 %v2581, %v2581
      %v2614 = vpack.c.b16 %v2582, %v2582
      %v2615 = vpack.c.b16 %v2583, %v2583
      %v2616 = vpack.c.b16 %v2584, %v2584
      %v2617 = vpack.c.b16 %v2585, %v2585
      %v2618 = vpack.c.b16 %v2586, %v2586
      %v2619 = vpack.c.b16 %v2587, %v2587
      %v2620 = vpack.c.b16 %v2588, %v2588
      %v2621 = vpack.c.b16 %v2589, %v2589
      %2654 = vst [vmem:[#allocation3 + $0x4] sm:$0xf] %v2590
      %2655 = vst [vmem:[#allocation3 + $0xc] sm:$0xf] %v2591
      %2656 = vst [vmem:[#allocation3 + $0x14] sm:$0xf] %v2592
      %2657 = vst [vmem:[#allocation3 + $0x1c] sm:$0xf] %v2593
      %2658 = vst [vmem:[#allocation3 + $0x24] sm:$0xf] %v2594
      %2659 = vst [vmem:[#allocation3 + $0x2c] sm:$0xf] %v2595
      %2660 = vst [vmem:[#allocation3 + $0x34] sm:$0xf] %v2596
      %2661 = vst [vmem:[#allocation3 + $0x3c] sm:$0xf] %v2597
      %2662 = vst [vmem:[#allocation3 + $0x44] sm:$0xf] %v2598
      %2663 = vst [vmem:[#allocation3 + $0x4c] sm:$0xf] %v2599
      %2664 = vst [vmem:[#allocation3 + $0x54] sm:$0xf] %v2600
      %2665 = vst [vmem:[#allocation3 + $0x5c] sm:$0xf] %v2601
      %2666 = vst [vmem:[#allocation3 + $0x64] sm:$0xf] %v2602
      %2667 = vst [vmem:[#allocation3 + $0x6c] sm:$0xf] %v2603
      %2668 = vst [vmem:[#allocation3 + $0x74] sm:$0xf] %v2604
      %2669 = vst [vmem:[#allocation3 + $0x7c] sm:$0xf] %v2605
      %2670 = vst [vmem:[#allocation3 + $0x84] sm:$0xf] %v2606
      %2671 = vst [vmem:[#allocation3 + $0x8c] sm:$0xf] %v2607
      %2672 = vst [vmem:[#allocation3 + $0x94] sm:$0xf] %v2608
      %2673 = vst [vmem:[#allocation3 + $0x9c] sm:$0xf] %v2609
      %2674 = vst [vmem:[#allocation3 + $0xa4] sm:$0xf] %v2610
      %2675 = vst [vmem:[#allocation3 + $0xac] sm:$0xf] %v2611
      %2676 = vst [vmem:[#allocation3 + $0xb4] sm:$0xf] %v2612
      %2677 = vst [vmem:[#allocation3 + $0xbc] sm:$0xf] %v2613
      %2678 = vst [vmem:[#allocation3 + $0xc4] sm:$0xf] %v2614
      %2679 = vst [vmem:[#allocation3 + $0xcc] sm:$0xf] %v2615
      %2680 = vst [vmem:[#allocation3 + $0xd4] sm:$0xf] %v2616
      %2681 = vst [vmem:[#allocation3 + $0xdc] sm:$0xf] %v2617
      %2682 = vst [vmem:[#allocation3 + $0xe4] sm:$0xf] %v2618
      %2683 = vst [vmem:[#allocation3 + $0xec] sm:$0xf] %v2619
      %2684 = vst [vmem:[#allocation3 + $0xf4] sm:$0xf] %v2620
      %2685 = vst [vmem:[#allocation3 + $0xfc] sm:$0xf] %v2621
      %v2686 = vld [vmem:[#allocation3] sm:$0xff]
      %v2687 = vld [vmem:[#allocation3 + $0x8] sm:$0xff]
      %v2688 = vld [vmem:[#allocation3 + $0x10] sm:$0xff]
      %v2689 = vld [vmem:[#allocation3 + $0x18] sm:$0xff]
      %v2690 = vld [vmem:[#allocation3 + $0x20] sm:$0xff]
      %v2691 = vld [vmem:[#allocation3 + $0x28] sm:$0xff]
      %v2692 = vld [vmem:[#allocation3 + $0x30] sm:$0xff]
      %v2693 = vld [vmem:[#allocation3 + $0x38] sm:$0xff]
      %v2694 = vld [vmem:[#allocation3 + $0x40] sm:$0xff]
      %v2695 = vld [vmem:[#allocation3 + $0x48] sm:$0xff]
      %v2696 = vld [vmem:[#allocation3 + $0x50] sm:$0xff]
      %v2697 = vld [vmem:[#allocation3 + $0x58] sm:$0xff]
      %v2698 = vld [vmem:[#allocation3 + $0x60] sm:$0xff]
      %v2699 = vld [vmem:[#allocation3 + $0x68] sm:$0xff]
      %v2700 = vld [vmem:[#allocation3 + $0x70] sm:$0xff]
      %v2701 = vld [vmem:[#allocation3 + $0x78] sm:$0xff]
      %v2702 = vld [vmem:[#allocation3 + $0x80] sm:$0xff]
      %v2703 = vld [vmem:[#allocation3 + $0x88] sm:$0xff]
      %v2704 = vld [vmem:[#allocation3 + $0x90] sm:$0xff]
      %v2705 = vld [vmem:[#allocation3 + $0x98] sm:$0xff]
      %v2706 = vld [vmem:[#allocation3 + $0xa0] sm:$0xff]
      %v2707 = vld [vmem:[#allocation3 + $0xa8] sm:$0xff]
      %v2708 = vld [vmem:[#allocation3 + $0xb0] sm:$0xff]
      %v2709 = vld [vmem:[#allocation3 + $0xb8] sm:$0xff]
      %v2710 = vld [vmem:[#allocation3 + $0xc0] sm:$0xff]
      %v2711 = vld [vmem:[#allocation3 + $0xc8] sm:$0xff]
      %v2712 = vld [vmem:[%s4] sm:$0xf]
      %v2713 = vld [vmem:[%s4 + $0x4] sm:$0xf]
      %v2714 = vld [vmem:[%s4 + $0x8] sm:$0xf]
      %v2715 = vld [vmem:[%s4 + $0xc] sm:$0xf]
      %v2716 = vld [vmem:[%s4 + $0x10] sm:$0xf]
      %v2717 = vld [vmem:[%s4 + $0x14] sm:$0xf]
      %v2718 = vld [vmem:[%s4 + $0x18] sm:$0xf]
      %v2719 = vld [vmem:[%s4 + $0x1c] sm:$0xf]
      %v2720 = vld [vmem:[%s4 + $0x20] sm:$0xf]
      %v2721 = vld [vmem:[%s4 + $0x24] sm:$0xf]
      %v2722 = vld [vmem:[%s4 + $0x28] sm:$0xf]
      %v2723 = vld [vmem:[%s4 + $0x2c] sm:$0xf]
      %v2724 = vld [vmem:[%s4 + $0x30] sm:$0xf]
      %v2725 = vld [vmem:[%s4 + $0x34] sm:$0xf]
      %v2726 = vld [vmem:[%s4 + $0x38] sm:$0xf]
      %v2727 = vld [vmem:[%s4 + $0x3c] sm:$0xf]
      %v2728 = vld [vmem:[%s4 + $0x40] sm:$0xf]
      %v2729 = vld [vmem:[%s4 + $0x44] sm:$0xf]
      %v2730 = vld [vmem:[%s4 + $0x48] sm:$0xf]
      %v2731 = vld [vmem:[%s4 + $0x4c] sm:$0xf]
      %v2732 = vld [vmem:[%s4 + $0x50] sm:$0xf]
      %v2733 = vld [vmem:[%s4 + $0x54] sm:$0xf]
      %v2734 = vld [vmem:[%s4 + $0x58] sm:$0xf]
      %v2735 = vld [vmem:[%s4 + $0x5c] sm:$0xf]
      %v2736 = vld [vmem:[%s4 + $0x60] sm:$0xf]
      %v2737 = vld [vmem:[%s4 + $0x64] sm:$0xf]
      %v2738 = vld [vmem:[%s4 + $0x68] sm:$0xf]
      %v2739 = vld [vmem:[%s4 + $0x6c] sm:$0xf]
      %v2740 = vld [vmem:[%s4 + $0x70] sm:$0xf]
      %v2741 = vld [vmem:[%s4 + $0x74] sm:$0xf]
      %v2742 = vld [vmem:[%s4 + $0x78] sm:$0xf]
      %v2743 = vld [vmem:[%s4 + $0x7c] sm:$0xf]
      %v2744 = vld [vmem:[#allocation3 + $0xd0] sm:$0xff]
      %v2745 = vld [vmem:[#allocation3 + $0xd8] sm:$0xff]
      %s2746 = scalar_lea.vmem %s4, 128
      %v2747 = vld [vmem:[%s2746] sm:$0xf]
      %v2748 = vld [vmem:[%s2746 + $0x4] sm:$0xf]
      %v2749 = vld [vmem:[%s2746 + $0x8] sm:$0xf]
      %v2750 = vld [vmem:[%s2746 + $0xc] sm:$0xf]
      %v2751 = vld [vmem:[%s2746 + $0x10] sm:$0xf]
      %v2752 = vld [vmem:[%s2746 + $0x14] sm:$0xf]
      %v2753 = vld [vmem:[%s2746 + $0x18] sm:$0xf]
      %v2754 = vld [vmem:[%s2746 + $0x1c] sm:$0xf]
      %v2755 = vld [vmem:[%s2746 + $0x20] sm:$0xf]
      %v2756 = vld [vmem:[%s2746 + $0x24] sm:$0xf]
      %v2757 = vld [vmem:[%s2746 + $0x28] sm:$0xf]
      %v2758 = vld [vmem:[%s2746 + $0x2c] sm:$0xf]
      %v2759 = vld [vmem:[%s2746 + $0x30] sm:$0xf]
      %v2760 = vld [vmem:[%s2746 + $0x34] sm:$0xf]
      %v2761 = vld [vmem:[%s2746 + $0x38] sm:$0xf]
      %v2762 = vld [vmem:[%s2746 + $0x3c] sm:$0xf]
      %v2763 = vld [vmem:[%s2746 + $0x40] sm:$0xf]
      %v2764 = vld [vmem:[%s2746 + $0x44] sm:$0xf]
      %v2765 = vld [vmem:[%s2746 + $0x48] sm:$0xf]
      %v2766 = vld [vmem:[%s2746 + $0x4c] sm:$0xf]
      %v2767 = vld [vmem:[%s2746 + $0x50] sm:$0xf]
      %v2768 = vld [vmem:[%s2746 + $0x54] sm:$0xf]
      %v2769 = vld [vmem:[%s2746 + $0x58] sm:$0xf]
      %v2770 = vld [vmem:[%s2746 + $0x5c] sm:$0xf]
      %v2771 = vld [vmem:[%s2746 + $0x60] sm:$0xf]
      %v2772 = vld [vmem:[%s2746 + $0x64] sm:$0xf]
      %v2773 = vld [vmem:[%s2746 + $0x68] sm:$0xf]
      %v2774 = vld [vmem:[%s2746 + $0x6c] sm:$0xf]
      %v2775 = vld [vmem:[%s2746 + $0x70] sm:$0xf]
      %v2776 = vld [vmem:[%s2746 + $0x74] sm:$0xf]
      %v2777 = vld [vmem:[%s2746 + $0x78] sm:$0xf]
      %v2778 = vld [vmem:[%s2746 + $0x7c] sm:$0xf]
      %v2805 = vunpack.c.l.b16 %v2688
      %v2806 = vunpack.c.h.b16 %v2688
      %v2807 = vunpack.c.l.b16 %v2689
      %v2808 = vunpack.c.h.b16 %v2689
      %v2809 = vunpack.c.l.b16 %v2690
      %v2810 = vunpack.c.h.b16 %v2690
      %v2811 = vunpack.c.l.b16 %v2691
      %v2812 = vunpack.c.h.b16 %v2691
      %v2813 = vunpack.c.l.b16 %v2692
      %v2814 = vunpack.c.h.b16 %v2692
      %v2815 = vunpack.c.l.b16 %v2693
      %v2816 = vunpack.c.h.b16 %v2693
      %v2817 = vunpack.c.l.b16 %v2694
      %v2818 = vunpack.c.h.b16 %v2694
      %v2819 = vunpack.c.l.b16 %v2695
      %v2820 = vunpack.c.h.b16 %v2695
      %v2821 = vunpack.c.l.b16 %v2696
      %v2822 = vunpack.c.h.b16 %v2696
      %v2823 = vunpack.c.l.b16 %v2697
      %v2824 = vunpack.c.h.b16 %v2697
      %v2825 = vunpack.c.l.b16 %v2698
      %v2826 = vunpack.c.h.b16 %v2698
      %v2827 = vunpack.c.l.b16 %v2699
      %v2828 = vunpack.c.h.b16 %v2699
      %v2829 = vunpack.c.l.b16 %v2700
      %v2830 = vunpack.c.h.b16 %v2700
      %v2831 = vunpack.c.l.b16 %v2701
      %v2832 = vunpack.c.h.b16 %v2701
      %v2833 = vunpack.c.l.b16 %v2702
      %v2834 = vunpack.c.h.b16 %v2702
      %v2835 = vunpack.c.l.b16 %v2703
      %v2836 = vunpack.c.h.b16 %v2703
      %v2837 = vunpack.c.l.b16 %v2704
      %v2838 = vunpack.c.h.b16 %v2704
      %v2839 = vunpack.c.l.b16 %v2705
      %v2840 = vunpack.c.h.b16 %v2705
      %v2841 = vunpack.c.l.b16 %v2706
      %v2842 = vunpack.c.h.b16 %v2706
      %v2843 = vunpack.c.l.b16 %v2707
      %v2844 = vunpack.c.h.b16 %v2707
      %v2845 = vunpack.c.l.b16 %v2708
      %v2846 = vunpack.c.h.b16 %v2708
      %v2847 = vunpack.c.l.b16 %v2709
      %v2848 = vunpack.c.h.b16 %v2709
      %v2849 = vunpack.c.l.b16 %v2710
      %v2850 = vunpack.c.h.b16 %v2710
      %v2851 = vunpack.c.l.b16 %v2711
      %v2852 = vunpack.c.h.b16 %v2711
      %v2853 = vunpack.c.l.b16 %v2744
      %v2854 = vunpack.c.h.b16 %v2744
      %v2855 = vunpack.c.l.b16 %v2745
      %v2856 = vunpack.c.h.b16 %v2745
      %v2857 = vpack.c.b16 %v2807, %v2805
      %v2858 = vpack.c.b16 %v2808, %v2806
      %v2859 = vpack.c.b16 %v2811, %v2809
      %v2860 = vpack.c.b16 %v2812, %v2810
      %v2861 = vpack.c.b16 %v2815, %v2813
      %v2862 = vpack.c.b16 %v2816, %v2814
      %v2863 = vpack.c.b16 %v2819, %v2817
      %v2864 = vpack.c.b16 %v2820, %v2818
      %v2865 = vpack.c.b16 %v2823, %v2821
      %v2866 = vpack.c.b16 %v2824, %v2822
      %v2867 = vpack.c.b16 %v2827, %v2825
      %v2868 = vpack.c.b16 %v2828, %v2826
      %v2869 = vpack.c.b16 %v2831, %v2829
      %v2870 = vpack.c.b16 %v2832, %v2830
      %v2871 = vpack.c.b16 %v2835, %v2833
      %v2872 = vpack.c.b16 %v2836, %v2834
      %v2873 = vpack.c.b16 %v2839, %v2837
      %v2874 = vpack.c.b16 %v2840, %v2838
      %v2875 = vpack.c.b16 %v2843, %v2841
      %v2876 = vpack.c.b16 %v2844, %v2842
      %v2877 = vpack.c.b16 %v2847, %v2845
      %v2878 = vpack.c.b16 %v2848, %v2846
      %v2879 = vpack.c.b16 %v2851, %v2849
      %v2880 = vpack.c.b16 %v2852, %v2850
      %v2881 = vpack.c.b16 %v2855, %v2853
      %v2882 = vpack.c.b16 %v2856, %v2854
      %v2941 = vunpack.c.l.b16 %v2747
      %v2942 = vunpack.c.l.b16 %v2748
      %v2943 = vunpack.c.l.b16 %v2749
      %v2944 = vunpack.c.l.b16 %v2750
      %v2945 = vunpack.c.l.b16 %v2751
      %v2946 = vunpack.c.l.b16 %v2752
      %v2947 = vunpack.c.l.b16 %v2753
      %v2948 = vunpack.c.l.b16 %v2754
      %v2949 = vunpack.c.l.b16 %v2755
      %v2950 = vunpack.c.l.b16 %v2756
      %v2951 = vunpack.c.l.b16 %v2757
      %v2952 = vunpack.c.l.b16 %v2758
      %v2953 = vunpack.c.l.b16 %v2759
      %v2954 = vunpack.c.l.b16 %v2760
      %v2955 = vunpack.c.l.b16 %v2761
      %v2956 = vunpack.c.l.b16 %v2762
      %v2957 = vunpack.c.l.b16 %v2763
      %v2958 = vunpack.c.l.b16 %v2764
      %v2959 = vunpack.c.l.b16 %v2765
      %v2960 = vunpack.c.l.b16 %v2766
      %v2961 = vunpack.c.l.b16 %v2767
      %v2962 = vunpack.c.l.b16 %v2768
      %v2963 = vunpack.c.l.b16 %v2769
      %v2964 = vunpack.c.l.b16 %v2770
      %v2965 = vunpack.c.l.b16 %v2771
      %v2966 = vunpack.c.l.b16 %v2772
      %v2967 = vunpack.c.l.b16 %v2773
      %v2968 = vunpack.c.l.b16 %v2774
      %v2969 = vunpack.c.l.b16 %v2775
      %v2970 = vunpack.c.l.b16 %v2776
      %v2971 = vunpack.c.l.b16 %v2777
      %v2972 = vunpack.c.l.b16 %v2778
      %v2973 = vpack.c.b16 %v2942, %v2941
      %v2974 = vpack.c.b16 %v2944, %v2943
      %v2975 = vpack.c.b16 %v2946, %v2945
      %v2976 = vpack.c.b16 %v2948, %v2947
      %v2977 = vpack.c.b16 %v2950, %v2949
      %v2978 = vpack.c.b16 %v2952, %v2951
      %v2979 = vpack.c.b16 %v2954, %v2953
      %v2980 = vpack.c.b16 %v2956, %v2955
      %v2981 = vpack.c.b16 %v2958, %v2957
      %v2982 = vpack.c.b16 %v2960, %v2959
      %v2983 = vpack.c.b16 %v2962, %v2961
      %v2984 = vpack.c.b16 %v2964, %v2963
      %v2985 = vpack.c.b16 %v2966, %v2965
      %v2986 = vpack.c.b16 %v2968, %v2967
      %v2987 = vpack.c.b16 %v2970, %v2969
      %v2988 = vpack.c.b16 %v2972, %v2971
      %3005 = vmatpush.bf16.msra.mxu0 %v2980
      %3006 = vmatpush.bf16.msra.mxu0 %v2979
      %3007 = vmatpush.bf16.msra.mxu0 %v2978
      %3008 = vmatpush.bf16.msra.mxu0 %v2977
      %3009 = vmatpush.bf16.msra.mxu0 %v2976
      %3010 = vmatpush.bf16.msra.mxu0 %v2975
      %3011 = vmatpush.bf16.msra.mxu0 %v2974
      %3012 = vmatpush.bf16.msra.mxu0 %v2973
      %3013 = vmatmul.bf16.gmra.mxu0 %v2857
      %v3014 = vpop.f32.mrf.mxu0
      %v3015 = vadd.f32 0.0, %v3014
      %v3016 = vpop.f32.mrf.mxu0
      %v3017 = vadd.f32 0.0, %v3016
      %3018 = vmatmul.bf16.gmra.mxu0 %v2859
      %v3019 = vpop.f32.mrf.mxu0
      %v3020 = vadd.f32 0.0, %v3019
      %v3021 = vpop.f32.mrf.mxu0
      %v3022 = vadd.f32 0.0, %v3021
      %3023 = vmatmul.bf16.gmra.mxu0 %v2861
      %v3024 = vpop.f32.mrf.mxu0
      %v3025 = vadd.f32 0.0, %v3024
      %v3026 = vpop.f32.mrf.mxu0
      %v3027 = vadd.f32 0.0, %v3026
      %3028 = vmatmul.bf16.gmra.mxu0 %v2863
      %v3029 = vpop.f32.mrf.mxu0
      %v3030 = vadd.f32 0.0, %v3029
      %v3031 = vpop.f32.mrf.mxu0
      %v3032 = vadd.f32 0.0, %v3031
      %3033 = vmatmul.bf16.gmra.mxu0 %v2865
      %v3034 = vpop.f32.mrf.mxu0
      %v3035 = vadd.f32 0.0, %v3034
      %v3036 = vpop.f32.mrf.mxu0
      %v3037 = vadd.f32 0.0, %v3036
      %3038 = vmatmul.bf16.gmra.mxu0 %v2867
      %v3039 = vpop.f32.mrf.mxu0
      %v3040 = vadd.f32 0.0, %v3039
      %v3041 = vpop.f32.mrf.mxu0
      %v3042 = vadd.f32 0.0, %v3041
      %3043 = vmatmul.bf16.gmra.mxu0 %v2869
      %v3044 = vpop.f32.mrf.mxu0
      %v3045 = vadd.f32 0.0, %v3044
      %v3046 = vpop.f32.mrf.mxu0
      %v3047 = vadd.f32 0.0, %v3046
      %3048 = vmatmul.bf16.gmra.mxu0 %v2871
      %v3049 = vpop.f32.mrf.mxu0
      %v3050 = vadd.f32 0.0, %v3049
      %v3051 = vpop.f32.mrf.mxu0
      %v3052 = vadd.f32 0.0, %v3051
      %3053 = vmatmul.bf16.gmra.mxu0 %v2873
      %v3054 = vpop.f32.mrf.mxu0
      %v3055 = vadd.f32 0.0, %v3054
      %v3056 = vpop.f32.mrf.mxu0
      %v3057 = vadd.f32 0.0, %v3056
      %3058 = vmatmul.bf16.gmra.mxu0 %v2875
      %v3059 = vpop.f32.mrf.mxu0
      %v3060 = vadd.f32 0.0, %v3059
      %v3061 = vpop.f32.mrf.mxu0
      %v3062 = vadd.f32 0.0, %v3061
      %3063 = vmatmul.bf16.gmra.mxu0 %v2877
      %v3064 = vpop.f32.mrf.mxu0
      %v3065 = vadd.f32 0.0, %v3064
      %v3066 = vpop.f32.mrf.mxu0
      %v3067 = vadd.f32 0.0, %v3066
      %3068 = vmatmul.bf16.gmra.mxu0 %v2879
      %v3069 = vpop.f32.mrf.mxu0
      %v3070 = vadd.f32 0.0, %v3069
      %v3071 = vpop.f32.mrf.mxu0
      %v3072 = vadd.f32 0.0, %v3071
      %3073 = vmatmul.bf16.gmra.mxu0 %v2881
      %v3074 = vpop.f32.mrf.mxu0
      %v3075 = vadd.f32 0.0, %v3074
      %v3076 = vpop.f32.mrf.mxu0
      %v3077 = vadd.f32 0.0, %v3076
      %3078 = vdwg.mxu0
      %3079 = vmatpush.bf16.msra.mxu0 %v2988
      %3080 = vmatpush.bf16.msra.mxu0 %v2987
      %3081 = vmatpush.bf16.msra.mxu0 %v2986
      %3082 = vmatpush.bf16.msra.mxu0 %v2985
      %3083 = vmatpush.bf16.msra.mxu0 %v2984
      %3084 = vmatpush.bf16.msra.mxu0 %v2983
      %3085 = vmatpush.bf16.msra.mxu0 %v2982
      %3086 = vmatpush.bf16.msra.mxu0 %v2981
      %3087 = vmatmul.bf16.gmra.mxu0 %v2858
      %v3088 = vpop.f32.mrf.mxu0
      %v3089 = vadd.f32 %v3015, %v3088
      %v3090 = vpop.f32.mrf.mxu0
      %v3091 = vadd.f32 %v3017, %v3090
      %3092 = vmatmul.bf16.gmra.mxu0 %v2860
      %v3093 = vpop.f32.mrf.mxu0
      %v3094 = vadd.f32 %v3020, %v3093
      %v3095 = vpop.f32.mrf.mxu0
      %v3096 = vadd.f32 %v3022, %v3095
      %3097 = vmatmul.bf16.gmra.mxu0 %v2862
      %v3098 = vpop.f32.mrf.mxu0
      %v3099 = vadd.f32 %v3025, %v3098
      %v3100 = vpop.f32.mrf.mxu0
      %v3101 = vadd.f32 %v3027, %v3100
      %3102 = vmatmul.bf16.gmra.mxu0 %v2864
      %v3103 = vpop.f32.mrf.mxu0
      %v3104 = vadd.f32 %v3030, %v3103
      %v3105 = vpop.f32.mrf.mxu0
      %v3106 = vadd.f32 %v3032, %v3105
      %3107 = vmatmul.bf16.gmra.mxu0 %v2866
      %v3108 = vpop.f32.mrf.mxu0
      %v3109 = vadd.f32 %v3035, %v3108
      %v3110 = vpop.f32.mrf.mxu0
      %v3111 = vadd.f32 %v3037, %v3110
      %3112 = vmatmul.bf16.gmra.mxu0 %v2868
      %v3113 = vpop.f32.mrf.mxu0
      %v3114 = vadd.f32 %v3040, %v3113
      %v3115 = vpop.f32.mrf.mxu0
      %v3116 = vadd.f32 %v3042, %v3115
      %3117 = vmatmul.bf16.gmra.mxu0 %v2870
      %v3118 = vpop.f32.mrf.mxu0
      %v3119 = vadd.f32 %v3045, %v3118
      %v3120 = vpop.f32.mrf.mxu0
      %v3121 = vadd.f32 %v3047, %v3120
      %3122 = vmatmul.bf16.gmra.mxu0 %v2872
      %v3123 = vpop.f32.mrf.mxu0
      %v3124 = vadd.f32 %v3050, %v3123
      %v3125 = vpop.f32.mrf.mxu0
      %v3126 = vadd.f32 %v3052, %v3125
      %3127 = vmatmul.bf16.gmra.mxu0 %v2874
      %v3128 = vpop.f32.mrf.mxu0
      %v3129 = vadd.f32 %v3055, %v3128
      %v3130 = vpop.f32.mrf.mxu0
      %v3131 = vadd.f32 %v3057, %v3130
      %3132 = vmatmul.bf16.gmra.mxu0 %v2876
      %v3133 = vpop.f32.mrf.mxu0
      %v3134 = vadd.f32 %v3060, %v3133
      %v3135 = vpop.f32.mrf.mxu0
      %v3136 = vadd.f32 %v3062, %v3135
      %3137 = vmatmul.bf16.gmra.mxu0 %v2878
      %v3138 = vpop.f32.mrf.mxu0
      %v3139 = vadd.f32 %v3065, %v3138
      %v3140 = vpop.f32.mrf.mxu0
      %v3141 = vadd.f32 %v3067, %v3140
      %3142 = vmatmul.bf16.gmra.mxu0 %v2880
      %v3143 = vpop.f32.mrf.mxu0
      %v3144 = vadd.f32 %v3070, %v3143
      %v3145 = vpop.f32.mrf.mxu0
      %v3146 = vadd.f32 %v3072, %v3145
      %3147 = vmatmul.bf16.gmra.mxu0 %v2882
      %v3148 = vpop.f32.mrf.mxu0
      %v3149 = vadd.f32 %v3075, %v3148
      %v3150 = vpop.f32.mrf.mxu0
      %v3151 = vadd.f32 %v3077, %v3150
      %3152 = vdwg.mxu0
      %v3155 = vunpack.c.l.b16 %v2686
      %v3156 = vunpack.c.h.b16 %v2686
      %v3157 = vunpack.c.l.b16 %v2687
      %v3158 = vunpack.c.h.b16 %v2687
      %v3159 = vpack.c.b16 %v3157, %v3155
      %v3160 = vpack.c.b16 %v3158, %v3156
      %v3195 = vunpack.c.l.b16 %v2712
      %v3196 = vunpack.c.l.b16 %v2713
      %v3197 = vunpack.c.l.b16 %v2714
      %v3198 = vunpack.c.l.b16 %v2715
      %v3199 = vunpack.c.l.b16 %v2716
      %v3200 = vunpack.c.l.b16 %v2717
      %v3201 = vunpack.c.l.b16 %v2718
      %v3202 = vunpack.c.l.b16 %v2719
      %v3203 = vunpack.c.l.b16 %v2720
      %v3204 = vunpack.c.l.b16 %v2721
      %v3205 = vunpack.c.l.b16 %v2722
      %v3206 = vunpack.c.l.b16 %v2723
      %v3207 = vunpack.c.l.b16 %v2724
      %v3208 = vunpack.c.l.b16 %v2725
      %v3209 = vunpack.c.l.b16 %v2726
      %v3210 = vunpack.c.l.b16 %v2727
      %v3211 = vunpack.c.l.b16 %v2728
      %v3212 = vunpack.c.l.b16 %v2729
      %v3213 = vunpack.c.l.b16 %v2730
      %v3214 = vunpack.c.l.b16 %v2731
      %v3215 = vunpack.c.l.b16 %v2732
      %v3216 = vunpack.c.l.b16 %v2733
      %v3217 = vunpack.c.l.b16 %v2734
      %v3218 = vunpack.c.l.b16 %v2735
      %v3219 = vunpack.c.l.b16 %v2736
      %v3220 = vunpack.c.l.b16 %v2737
      %v3221 = vunpack.c.l.b16 %v2738
      %v3222 = vunpack.c.l.b16 %v2739
      %v3223 = vunpack.c.l.b16 %v2740
      %v3224 = vunpack.c.l.b16 %v2741
      %v3225 = vunpack.c.l.b16 %v2742
      %v3226 = vunpack.c.l.b16 %v2743
      %v3227 = vpack.c.b16 %v3196, %v3195
      %v3228 = vpack.c.b16 %v3198, %v3197
      %v3229 = vpack.c.b16 %v3200, %v3199
      %v3230 = vpack.c.b16 %v3202, %v3201
      %v3231 = vpack.c.b16 %v3204, %v3203
      %v3232 = vpack.c.b16 %v3206, %v3205
      %v3233 = vpack.c.b16 %v3208, %v3207
      %v3234 = vpack.c.b16 %v3210, %v3209
      %v3235 = vpack.c.b16 %v3212, %v3211
      %v3236 = vpack.c.b16 %v3214, %v3213
      %v3237 = vpack.c.b16 %v3216, %v3215
      %v3238 = vpack.c.b16 %v3218, %v3217
      %v3239 = vpack.c.b16 %v3220, %v3219
      %v3240 = vpack.c.b16 %v3222, %v3221
      %v3241 = vpack.c.b16 %v3224, %v3223
      %v3242 = vpack.c.b16 %v3226, %v3225
      %3259 = vmatpush.bf16.msra.mxu0 %v3234
      %3260 = vmatpush.bf16.msra.mxu0 %v3233
      %3261 = vmatpush.bf16.msra.mxu0 %v3232
      %3262 = vmatpush.bf16.msra.mxu0 %v3231
      %3263 = vmatpush.bf16.msra.mxu0 %v3230
      %3264 = vmatpush.bf16.msra.mxu0 %v3229
      %3265 = vmatpush.bf16.msra.mxu0 %v3228
      %3266 = vmatpush.bf16.msra.mxu0 %v3227
      %3267 = vmatmul.bf16.gmra.mxu0 %v3159
      %v3268 = vpop.f32.mrf.mxu0
      %v3269 = vadd.f32 %v3089, %v3268
      %v3270 = vpop.f32.mrf.mxu0
      %v3271 = vadd.f32 %v3091, %v3270
      %3272 = vmatmul.bf16.gmra.mxu0 %v2857
      %v3273 = vpop.f32.mrf.mxu0
      %v3274 = vadd.f32 %v3094, %v3273
      %v3275 = vpop.f32.mrf.mxu0
      %v3276 = vadd.f32 %v3096, %v3275
      %3277 = vmatmul.bf16.gmra.mxu0 %v2859
      %v3278 = vpop.f32.mrf.mxu0
      %v3279 = vadd.f32 %v3099, %v3278
      %v3280 = vpop.f32.mrf.mxu0
      %v3281 = vadd.f32 %v3101, %v3280
      %3282 = vmatmul.bf16.gmra.mxu0 %v2861
      %v3283 = vpop.f32.mrf.mxu0
      %v3284 = vadd.f32 %v3104, %v3283
      %v3285 = vpop.f32.mrf.mxu0
      %v3286 = vadd.f32 %v3106, %v3285
      %3287 = vmatmul.bf16.gmra.mxu0 %v2863
      %v3288 = vpop.f32.mrf.mxu0
      %v3289 = vadd.f32 %v3109, %v3288
      %v3290 = vpop.f32.mrf.mxu0
      %v3291 = vadd.f32 %v3111, %v3290
      %3292 = vmatmul.bf16.gmra.mxu0 %v2865
      %v3293 = vpop.f32.mrf.mxu0
      %v3294 = vadd.f32 %v3114, %v3293
      %v3295 = vpop.f32.mrf.mxu0
      %v3296 = vadd.f32 %v3116, %v3295
      %3297 = vmatmul.bf16.gmra.mxu0 %v2867
      %v3298 = vpop.f32.mrf.mxu0
      %v3299 = vadd.f32 %v3119, %v3298
      %v3300 = vpop.f32.mrf.mxu0
      %v3301 = vadd.f32 %v3121, %v3300
      %3302 = vmatmul.bf16.gmra.mxu0 %v2869
      %v3303 = vpop.f32.mrf.mxu0
      %v3304 = vadd.f32 %v3124, %v3303
      %v3305 = vpop.f32.mrf.mxu0
      %v3306 = vadd.f32 %v3126, %v3305
      %3307 = vmatmul.bf16.gmra.mxu0 %v2871
      %v3308 = vpop.f32.mrf.mxu0
      %v3309 = vadd.f32 %v3129, %v3308
      %v3310 = vpop.f32.mrf.mxu0
      %v3311 = vadd.f32 %v3131, %v3310
      %3312 = vmatmul.bf16.gmra.mxu0 %v2873
      %v3313 = vpop.f32.mrf.mxu0
      %v3314 = vadd.f32 %v3134, %v3313
      %v3315 = vpop.f32.mrf.mxu0
      %v3316 = vadd.f32 %v3136, %v3315
      %3317 = vmatmul.bf16.gmra.mxu0 %v2875
      %v3318 = vpop.f32.mrf.mxu0
      %v3319 = vadd.f32 %v3139, %v3318
      %v3320 = vpop.f32.mrf.mxu0
      %v3321 = vadd.f32 %v3141, %v3320
      %3322 = vmatmul.bf16.gmra.mxu0 %v2877
      %v3323 = vpop.f32.mrf.mxu0
      %v3324 = vadd.f32 %v3144, %v3323
      %v3325 = vpop.f32.mrf.mxu0
      %v3326 = vadd.f32 %v3146, %v3325
      %3327 = vmatmul.bf16.gmra.mxu0 %v2879
      %v3328 = vpop.f32.mrf.mxu0
      %v3329 = vadd.f32 %v3149, %v3328
      %v3330 = vpop.f32.mrf.mxu0
      %v3331 = vadd.f32 %v3151, %v3330
      %3332 = vdwg.mxu0
      %3333 = vmatpush.bf16.msra.mxu0 %v3242
      %3334 = vmatpush.bf16.msra.mxu0 %v3241
      %3335 = vmatpush.bf16.msra.mxu0 %v3240
      %3336 = vmatpush.bf16.msra.mxu0 %v3239
      %3337 = vmatpush.bf16.msra.mxu0 %v3238
      %3338 = vmatpush.bf16.msra.mxu0 %v3237
      %3339 = vmatpush.bf16.msra.mxu0 %v3236
      %3340 = vmatpush.bf16.msra.mxu0 %v3235
      %3341 = vmatmul.bf16.gmra.mxu0 %v3160
      %v3342 = vpop.f32.mrf.mxu0
      %v3343 = vadd.f32 %v3269, %v3342
      %v3344 = vpop.f32.mrf.mxu0
      %v3345 = vadd.f32 %v3271, %v3344
      %3346 = vmatmul.bf16.gmra.mxu0 %v2858
      %v3347 = vpop.f32.mrf.mxu0
      %v3348 = vadd.f32 %v3274, %v3347
      %v3349 = vpop.f32.mrf.mxu0
      %v3350 = vadd.f32 %v3276, %v3349
      %3351 = vmatmul.bf16.gmra.mxu0 %v2860
      %v3352 = vpop.f32.mrf.mxu0
      %v3353 = vadd.f32 %v3279, %v3352
      %v3354 = vpop.f32.mrf.mxu0
      %v3355 = vadd.f32 %v3281, %v3354
      %3356 = vmatmul.bf16.gmra.mxu0 %v2862
      %v3357 = vpop.f32.mrf.mxu0
      %v3358 = vadd.f32 %v3284, %v3357
      %v3359 = vpop.f32.mrf.mxu0
      %v3360 = vadd.f32 %v3286, %v3359
      %3361 = vmatmul.bf16.gmra.mxu0 %v2864
      %v3362 = vpop.f32.mrf.mxu0
      %v3363 = vadd.f32 %v3289, %v3362
      %v3364 = vpop.f32.mrf.mxu0
      %v3365 = vadd.f32 %v3291, %v3364
      %3366 = vmatmul.bf16.gmra.mxu0 %v2866
      %v3367 = vpop.f32.mrf.mxu0
      %v3368 = vadd.f32 %v3294, %v3367
      %v3369 = vpop.f32.mrf.mxu0
      %v3370 = vadd.f32 %v3296, %v3369
      %3371 = vmatmul.bf16.gmra.mxu0 %v2868
      %v3372 = vpop.f32.mrf.mxu0
      %v3373 = vadd.f32 %v3299, %v3372
      %v3374 = vpop.f32.mrf.mxu0
      %v3375 = vadd.f32 %v3301, %v3374
      %3376 = vmatmul.bf16.gmra.mxu0 %v2870
      %v3377 = vpop.f32.mrf.mxu0
      %v3378 = vadd.f32 %v3304, %v3377
      %v3379 = vpop.f32.mrf.mxu0
      %v3380 = vadd.f32 %v3306, %v3379
      %3381 = vmatmul.bf16.gmra.mxu0 %v2872
      %v3382 = vpop.f32.mrf.mxu0
      %v3383 = vadd.f32 %v3309, %v3382
      %v3384 = vpop.f32.mrf.mxu0
      %v3385 = vadd.f32 %v3311, %v3384
      %3386 = vmatmul.bf16.gmra.mxu0 %v2874
      %v3387 = vpop.f32.mrf.mxu0
      %v3388 = vadd.f32 %v3314, %v3387
      %v3389 = vpop.f32.mrf.mxu0
      %v3390 = vadd.f32 %v3316, %v3389
      %3391 = vmatmul.bf16.gmra.mxu0 %v2876
      %v3392 = vpop.f32.mrf.mxu0
      %v3393 = vadd.f32 %v3319, %v3392
      %v3394 = vpop.f32.mrf.mxu0
      %v3395 = vadd.f32 %v3321, %v3394
      %3396 = vmatmul.bf16.gmra.mxu0 %v2878
      %v3397 = vpop.f32.mrf.mxu0
      %v3398 = vadd.f32 %v3324, %v3397
      %v3399 = vpop.f32.mrf.mxu0
      %v3400 = vadd.f32 %v3326, %v3399
      %3401 = vmatmul.bf16.gmra.mxu0 %v2880
      %v3402 = vpop.f32.mrf.mxu0
      %v3403 = vadd.f32 %v3329, %v3402
      %v3404 = vpop.f32.mrf.mxu0
      %v3405 = vadd.f32 %v3331, %v3404
      %3406 = vdwg.mxu0
      %v3407 = vld [vmem:[#allocation3 + $0x20] sm:$0xff]
      %v3408 = vld [vmem:[#allocation3 + $0x28] sm:$0xff]
      %v3409 = vld [vmem:[#allocation3 + $0x30] sm:$0xff]
      %v3410 = vld [vmem:[#allocation3 + $0x38] sm:$0xff]
      %v3411 = vld [vmem:[#allocation3 + $0x40] sm:$0xff]
      %v3412 = vld [vmem:[#allocation3 + $0x48] sm:$0xff]
      %v3413 = vld [vmem:[#allocation3 + $0x50] sm:$0xff]
      %v3414 = vld [vmem:[#allocation3 + $0x58] sm:$0xff]
      %v3415 = vld [vmem:[#allocation3 + $0x60] sm:$0xff]
      %v3416 = vld [vmem:[#allocation3 + $0x68] sm:$0xff]
      %v3417 = vld [vmem:[#allocation3 + $0x70] sm:$0xff]
      %v3418 = vld [vmem:[#allocation3 + $0x78] sm:$0xff]
      %v3419 = vld [vmem:[#allocation3 + $0x80] sm:$0xff]
      %v3420 = vld [vmem:[#allocation3 + $0x88] sm:$0xff]
      %v3421 = vld [vmem:[#allocation3 + $0x90] sm:$0xff]
      %v3422 = vld [vmem:[#allocation3 + $0x98] sm:$0xff]
      %v3423 = vld [vmem:[#allocation3 + $0xa0] sm:$0xff]
      %v3424 = vld [vmem:[#allocation3 + $0xa8] sm:$0xff]
      %v3425 = vld [vmem:[#allocation3 + $0xb0] sm:$0xff]
      %v3426 = vld [vmem:[#allocation3 + $0xb8] sm:$0xff]
      %v3427 = vld [vmem:[#allocation3 + $0xc0] sm:$0xff]
      %v3428 = vld [vmem:[#allocation3 + $0xc8] sm:$0xff]
      %v3429 = vld [vmem:[#allocation3 + $0xd0] sm:$0xff]
      %v3430 = vld [vmem:[#allocation3 + $0xd8] sm:$0xff]
      %v3431 = vld [vmem:[#allocation3 + $0xe0] sm:$0xff]
      %v3432 = vld [vmem:[#allocation3 + $0xe8] sm:$0xff]
      %s3433 = scalar_lea.vmem %s4, 256
      %v3434 = vld [vmem:[%s3433] sm:$0xf]
      %v3435 = vld [vmem:[%s3433 + $0x4] sm:$0xf]
      %v3436 = vld [vmem:[%s3433 + $0x8] sm:$0xf]
      %v3437 = vld [vmem:[%s3433 + $0xc] sm:$0xf]
      %v3438 = vld [vmem:[%s3433 + $0x10] sm:$0xf]
      %v3439 = vld [vmem:[%s3433 + $0x14] sm:$0xf]
      %v3440 = vld [vmem:[%s3433 + $0x18] sm:$0xf]
      %v3441 = vld [vmem:[%s3433 + $0x1c] sm:$0xf]
      %v3442 = vld [vmem:[%s3433 + $0x20] sm:$0xf]
      %v3443 = vld [vmem:[%s3433 + $0x24] sm:$0xf]
      %v3444 = vld [vmem:[%s3433 + $0x28] sm:$0xf]
      %v3445 = vld [vmem:[%s3433 + $0x2c] sm:$0xf]
      %v3446 = vld [vmem:[%s3433 + $0x30] sm:$0xf]
      %v3447 = vld [vmem:[%s3433 + $0x34] sm:$0xf]
      %v3448 = vld [vmem:[%s3433 + $0x38] sm:$0xf]
      %v3449 = vld [vmem:[%s3433 + $0x3c] sm:$0xf]
      %v3450 = vld [vmem:[%s3433 + $0x40] sm:$0xf]
      %v3451 = vld [vmem:[%s3433 + $0x44] sm:$0xf]
      %v3452 = vld [vmem:[%s3433 + $0x48] sm:$0xf]
      %v3453 = vld [vmem:[%s3433 + $0x4c] sm:$0xf]
      %v3454 = vld [vmem:[%s3433 + $0x50] sm:$0xf]
      %v3455 = vld [vmem:[%s3433 + $0x54] sm:$0xf]
      %v3456 = vld [vmem:[%s3433 + $0x58] sm:$0xf]
      %v3457 = vld [vmem:[%s3433 + $0x5c] sm:$0xf]
      %v3458 = vld [vmem:[%s3433 + $0x60] sm:$0xf]
      %v3459 = vld [vmem:[%s3433 + $0x64] sm:$0xf]
      %v3460 = vld [vmem:[%s3433 + $0x68] sm:$0xf]
      %v3461 = vld [vmem:[%s3433 + $0x6c] sm:$0xf]
      %v3462 = vld [vmem:[%s3433 + $0x70] sm:$0xf]
      %v3463 = vld [vmem:[%s3433 + $0x74] sm:$0xf]
      %v3464 = vld [vmem:[%s3433 + $0x78] sm:$0xf]
      %v3465 = vld [vmem:[%s3433 + $0x7c] sm:$0xf]
      %v3492 = vunpack.c.l.b16 %v3407
      %v3493 = vunpack.c.h.b16 %v3407
      %v3494 = vunpack.c.l.b16 %v3408
      %v3495 = vunpack.c.h.b16 %v3408
      %v3496 = vunpack.c.l.b16 %v3409
      %v3497 = vunpack.c.h.b16 %v3409
      %v3498 = vunpack.c.l.b16 %v3410
      %v3499 = vunpack.c.h.b16 %v3410
      %v3500 = vunpack.c.l.b16 %v3411
      %v3501 = vunpack.c.h.b16 %v3411
      %v3502 = vunpack.c.l.b16 %v3412
      %v3503 = vunpack.c.h.b16 %v3412
      %v3504 = vunpack.c.l.b16 %v3413
      %v3505 = vunpack.c.h.b16 %v3413
      %v3506 = vunpack.c.l.b16 %v3414
      %v3507 = vunpack.c.h.b16 %v3414
      %v3508 = vunpack.c.l.b16 %v3415
      %v3509 = vunpack.c.h.b16 %v3415
      %v3510 = vunpack.c.l.b16 %v3416
      %v3511 = vunpack.c.h.b16 %v3416
      %v3512 = vunpack.c.l.b16 %v3417
      %v3513 = vunpack.c.h.b16 %v3417
      %v3514 = vunpack.c.l.b16 %v3418
      %v3515 = vunpack.c.h.b16 %v3418
      %v3516 = vunpack.c.l.b16 %v3419
      %v3517 = vunpack.c.h.b16 %v3419
      %v3518 = vunpack.c.l.b16 %v3420
      %v3519 = vunpack.c.h.b16 %v3420
      %v3520 = vunpack.c.l.b16 %v3421
      %v3521 = vunpack.c.h.b16 %v3421
      %v3522 = vunpack.c.l.b16 %v3422
      %v3523 = vunpack.c.h.b16 %v3422
      %v3524 = vunpack.c.l.b16 %v3423
      %v3525 = vunpack.c.h.b16 %v3423
      %v3526 = vunpack.c.l.b16 %v3424
      %v3527 = vunpack.c.h.b16 %v3424
      %v3528 = vunpack.c.l.b16 %v3425
      %v3529 = vunpack.c.h.b16 %v3425
      %v3530 = vunpack.c.l.b16 %v3426
      %v3531 = vunpack.c.h.b16 %v3426
      %v3532 = vunpack.c.l.b16 %v3427
      %v3533 = vunpack.c.h.b16 %v3427
      %v3534 = vunpack.c.l.b16 %v3428
      %v3535 = vunpack.c.h.b16 %v3428
      %v3536 = vunpack.c.l.b16 %v3429
      %v3537 = vunpack.c.h.b16 %v3429
      %v3538 = vunpack.c.l.b16 %v3430
      %v3539 = vunpack.c.h.b16 %v3430
      %v3540 = vunpack.c.l.b16 %v3431
      %v3541 = vunpack.c.h.b16 %v3431
      %v3542 = vunpack.c.l.b16 %v3432
      %v3543 = vunpack.c.h.b16 %v3432
      %v3544 = vpack.c.b16 %v3494, %v3492
      %v3545 = vpack.c.b16 %v3495, %v3493
      %v3546 = vpack.c.b16 %v3498, %v3496
      %v3547 = vpack.c.b16 %v3499, %v3497
      %v3548 = vpack.c.b16 %v3502, %v3500
      %v3549 = vpack.c.b16 %v3503, %v3501
      %v3550 = vpack.c.b16 %v3506, %v3504
      %v3551 = vpack.c.b16 %v3507, %v3505
      %v3552 = vpack.c.b16 %v3510, %v3508
      %v3553 = vpack.c.b16 %v3511, %v3509
      %v3554 = vpack.c.b16 %v3514, %v3512
      %v3555 = vpack.c.b16 %v3515, %v3513
      %v3556 = vpack.c.b16 %v3518, %v3516
      %v3557 = vpack.c.b16 %v3519, %v3517
      %v3558 = vpack.c.b16 %v3522, %v3520
      %v3559 = vpack.c.b16 %v3523, %v3521
      %v3560 = vpack.c.b16 %v3526, %v3524
      %v3561 = vpack.c.b16 %v3527, %v3525
      %v3562 = vpack.c.b16 %v3530, %v3528
      %v3563 = vpack.c.b16 %v3531, %v3529
      %v3564 = vpack.c.b16 %v3534, %v3532
      %v3565 = vpack.c.b16 %v3535, %v3533
      %v3566 = vpack.c.b16 %v3538, %v3536
      %v3567 = vpack.c.b16 %v3539, %v3537
      %v3568 = vpack.c.b16 %v3542, %v3540
      %v3569 = vpack.c.b16 %v3543, %v3541
      %v3628 = vunpack.c.l.b16 %v3434
      %v3629 = vunpack.c.l.b16 %v3435
      %v3630 = vunpack.c.l.b16 %v3436
      %v3631 = vunpack.c.l.b16 %v3437
      %v3632 = vunpack.c.l.b16 %v3438
      %v3633 = vunpack.c.l.b16 %v3439
      %v3634 = vunpack.c.l.b16 %v3440
      %v3635 = vunpack.c.l.b16 %v3441
      %v3636 = vunpack.c.l.b16 %v3442
      %v3637 = vunpack.c.l.b16 %v3443
      %v3638 = vunpack.c.l.b16 %v3444
      %v3639 = vunpack.c.l.b16 %v3445
      %v3640 = vunpack.c.l.b16 %v3446
      %v3641 = vunpack.c.l.b16 %v3447
      %v3642 = vunpack.c.l.b16 %v3448
      %v3643 = vunpack.c.l.b16 %v3449
      %v3644 = vunpack.c.l.b16 %v3450
      %v3645 = vunpack.c.l.b16 %v3451
      %v3646 = vunpack.c.l.b16 %v3452
      %v3647 = vunpack.c.l.b16 %v3453
      %v3648 = vunpack.c.l.b16 %v3454
      %v3649 = vunpack.c.l.b16 %v3455
      %v3650 = vunpack.c.l.b16 %v3456
      %v3651 = vunpack.c.l.b16 %v3457
      %v3652 = vunpack.c.l.b16 %v3458
      %v3653 = vunpack.c.l.b16 %v3459
      %v3654 = vunpack.c.l.b16 %v3460
      %v3655 = vunpack.c.l.b16 %v3461
      %v3656 = vunpack.c.l.b16 %v3462
      %v3657 = vunpack.c.l.b16 %v3463
      %v3658 = vunpack.c.l.b16 %v3464
      %v3659 = vunpack.c.l.b16 %v3465
      %v3660 = vpack.c.b16 %v3629, %v3628
      %v3661 = vpack.c.b16 %v3631, %v3630
      %v3662 = vpack.c.b16 %v3633, %v3632
      %v3663 = vpack.c.b16 %v3635, %v3634
      %v3664 = vpack.c.b16 %v3637, %v3636
      %v3665 = vpack.c.b16 %v3639, %v3638
      %v3666 = vpack.c.b16 %v3641, %v3640
      %v3667 = vpack.c.b16 %v3643, %v3642
      %v3668 = vpack.c.b16 %v3645, %v3644
      %v3669 = vpack.c.b16 %v3647, %v3646
      %v3670 = vpack.c.b16 %v3649, %v3648
      %v3671 = vpack.c.b16 %v3651, %v3650
      %v3672 = vpack.c.b16 %v3653, %v3652
      %v3673 = vpack.c.b16 %v3655, %v3654
      %v3674 = vpack.c.b16 %v3657, %v3656
      %v3675 = vpack.c.b16 %v3659, %v3658
      %3692 = vmatpush.bf16.msra.mxu0 %v3667
      %3693 = vmatpush.bf16.msra.mxu0 %v3666
      %3694 = vmatpush.bf16.msra.mxu0 %v3665
      %3695 = vmatpush.bf16.msra.mxu0 %v3664
      %3696 = vmatpush.bf16.msra.mxu0 %v3663
      %3697 = vmatpush.bf16.msra.mxu0 %v3662
      %3698 = vmatpush.bf16.msra.mxu0 %v3661
      %3699 = vmatpush.bf16.msra.mxu0 %v3660
      %3700 = vmatmul.bf16.gmra.mxu0 %v3544
      %v3701 = vpop.f32.mrf.mxu0
      %v3702 = vadd.f32 0.0, %v3701
      %v3703 = vpop.f32.mrf.mxu0
      %v3704 = vadd.f32 0.0, %v3703
      %3705 = vmatmul.bf16.gmra.mxu0 %v3546
      %v3706 = vpop.f32.mrf.mxu0
      %v3707 = vadd.f32 0.0, %v3706
      %v3708 = vpop.f32.mrf.mxu0
      %v3709 = vadd.f32 0.0, %v3708
      %3710 = vmatmul.bf16.gmra.mxu0 %v3548
      %v3711 = vpop.f32.mrf.mxu0
      %v3712 = vadd.f32 0.0, %v3711
      %v3713 = vpop.f32.mrf.mxu0
      %v3714 = vadd.f32 0.0, %v3713
      %3715 = vmatmul.bf16.gmra.mxu0 %v3550
      %v3716 = vpop.f32.mrf.mxu0
      %v3717 = vadd.f32 0.0, %v3716
      %v3718 = vpop.f32.mrf.mxu0
      %v3719 = vadd.f32 0.0, %v3718
      %3720 = vmatmul.bf16.gmra.mxu0 %v3552
      %v3721 = vpop.f32.mrf.mxu0
      %v3722 = vadd.f32 0.0, %v3721
      %v3723 = vpop.f32.mrf.mxu0
      %v3724 = vadd.f32 0.0, %v3723
      %3725 = vmatmul.bf16.gmra.mxu0 %v3554
      %v3726 = vpop.f32.mrf.mxu0
      %v3727 = vadd.f32 0.0, %v3726
      %v3728 = vpop.f32.mrf.mxu0
      %v3729 = vadd.f32 0.0, %v3728
      %3730 = vmatmul.bf16.gmra.mxu0 %v3556
      %v3731 = vpop.f32.mrf.mxu0
      %v3732 = vadd.f32 0.0, %v3731
      %v3733 = vpop.f32.mrf.mxu0
      %v3734 = vadd.f32 0.0, %v3733
      %3735 = vmatmul.bf16.gmra.mxu0 %v3558
      %v3736 = vpop.f32.mrf.mxu0
      %v3737 = vadd.f32 0.0, %v3736
      %v3738 = vpop.f32.mrf.mxu0
      %v3739 = vadd.f32 0.0, %v3738
      %3740 = vmatmul.bf16.gmra.mxu0 %v3560
      %v3741 = vpop.f32.mrf.mxu0
      %v3742 = vadd.f32 0.0, %v3741
      %v3743 = vpop.f32.mrf.mxu0
      %v3744 = vadd.f32 0.0, %v3743
      %3745 = vmatmul.bf16.gmra.mxu0 %v3562
      %v3746 = vpop.f32.mrf.mxu0
      %v3747 = vadd.f32 0.0, %v3746
      %v3748 = vpop.f32.mrf.mxu0
      %v3749 = vadd.f32 0.0, %v3748
      %3750 = vmatmul.bf16.gmra.mxu0 %v3564
      %v3751 = vpop.f32.mrf.mxu0
      %v3752 = vadd.f32 0.0, %v3751
      %v3753 = vpop.f32.mrf.mxu0
      %v3754 = vadd.f32 0.0, %v3753
      %3755 = vmatmul.bf16.gmra.mxu0 %v3566
      %v3756 = vpop.f32.mrf.mxu0
      %v3757 = vadd.f32 0.0, %v3756
      %v3758 = vpop.f32.mrf.mxu0
      %v3759 = vadd.f32 0.0, %v3758
      %3760 = vmatmul.bf16.gmra.mxu0 %v3568
      %v3761 = vpop.f32.mrf.mxu0
      %v3762 = vadd.f32 0.0, %v3761
      %v3763 = vpop.f32.mrf.mxu0
      %v3764 = vadd.f32 0.0, %v3763
      %3765 = vdwg.mxu0
      %3766 = vmatpush.bf16.msra.mxu0 %v3675
      %3767 = vmatpush.bf16.msra.mxu0 %v3674
      %3768 = vmatpush.bf16.msra.mxu0 %v3673
      %3769 = vmatpush.bf16.msra.mxu0 %v3672
      %3770 = vmatpush.bf16.msra.mxu0 %v3671
      %3771 = vmatpush.bf16.msra.mxu0 %v3670
      %3772 = vmatpush.bf16.msra.mxu0 %v3669
      %3773 = vmatpush.bf16.msra.mxu0 %v3668
      %3774 = vmatmul.bf16.gmra.mxu0 %v3545
      %v3775 = vpop.f32.mrf.mxu0
      %v3776 = vadd.f32 %v3702, %v3775
      %v3777 = vpop.f32.mrf.mxu0
      %v3778 = vadd.f32 %v3704, %v3777
      %3779 = vmatmul.bf16.gmra.mxu0 %v3547
      %v3780 = vpop.f32.mrf.mxu0
      %v3781 = vadd.f32 %v3707, %v3780
      %v3782 = vpop.f32.mrf.mxu0
      %v3783 = vadd.f32 %v3709, %v3782
      %3784 = vmatmul.bf16.gmra.mxu0 %v3549
      %v3785 = vpop.f32.mrf.mxu0
      %v3786 = vadd.f32 %v3712, %v3785
      %v3787 = vpop.f32.mrf.mxu0
      %v3788 = vadd.f32 %v3714, %v3787
      %3789 = vmatmul.bf16.gmra.mxu0 %v3551
      %v3790 = vpop.f32.mrf.mxu0
      %v3791 = vadd.f32 %v3717, %v3790
      %v3792 = vpop.f32.mrf.mxu0
      %v3793 = vadd.f32 %v3719, %v3792
      %3794 = vmatmul.bf16.gmra.mxu0 %v3553
      %v3795 = vpop.f32.mrf.mxu0
      %v3796 = vadd.f32 %v3722, %v3795
      %v3797 = vpop.f32.mrf.mxu0
      %v3798 = vadd.f32 %v3724, %v3797
      %3799 = vmatmul.bf16.gmra.mxu0 %v3555
      %v3800 = vpop.f32.mrf.mxu0
      %v3801 = vadd.f32 %v3727, %v3800
      %v3802 = vpop.f32.mrf.mxu0
      %v3803 = vadd.f32 %v3729, %v3802
      %3804 = vmatmul.bf16.gmra.mxu0 %v3557
      %v3805 = vpop.f32.mrf.mxu0
      %v3806 = vadd.f32 %v3732, %v3805
      %v3807 = vpop.f32.mrf.mxu0
      %v3808 = vadd.f32 %v3734, %v3807
      %3809 = vmatmul.bf16.gmra.mxu0 %v3559
      %v3810 = vpop.f32.mrf.mxu0
      %v3811 = vadd.f32 %v3737, %v3810
      %v3812 = vpop.f32.mrf.mxu0
      %v3813 = vadd.f32 %v3739, %v3812
      %3814 = vmatmul.bf16.gmra.mxu0 %v3561
      %v3815 = vpop.f32.mrf.mxu0
      %v3816 = vadd.f32 %v3742, %v3815
      %v3817 = vpop.f32.mrf.mxu0
      %v3818 = vadd.f32 %v3744, %v3817
      %3819 = vmatmul.bf16.gmra.mxu0 %v3563
      %v3820 = vpop.f32.mrf.mxu0
      %v3821 = vadd.f32 %v3747, %v3820
      %v3822 = vpop.f32.mrf.mxu0
      %v3823 = vadd.f32 %v3749, %v3822
      %3824 = vmatmul.bf16.gmra.mxu0 %v3565
      %v3825 = vpop.f32.mrf.mxu0
      %v3826 = vadd.f32 %v3752, %v3825
      %v3827 = vpop.f32.mrf.mxu0
      %v3828 = vadd.f32 %v3754, %v3827
      %3829 = vmatmul.bf16.gmra.mxu0 %v3567
      %v3830 = vpop.f32.mrf.mxu0
      %v3831 = vadd.f32 %v3757, %v3830
      %v3832 = vpop.f32.mrf.mxu0
      %v3833 = vadd.f32 %v3759, %v3832
      %3834 = vmatmul.bf16.gmra.mxu0 %v3569
      %v3835 = vpop.f32.mrf.mxu0
      %v3836 = vadd.f32 %v3762, %v3835
      %v3837 = vpop.f32.mrf.mxu0
      %v3838 = vadd.f32 %v3764, %v3837
      %3839 = vdwg.mxu0
      %v3840 = vadd.f32 %v3343, %v3776
      %v3841 = vadd.f32 %v3345, %v3778
      %v3842 = vadd.f32 %v3348, %v3781
      %v3843 = vadd.f32 %v3350, %v3783
      %v3844 = vadd.f32 %v3353, %v3786
      %v3845 = vadd.f32 %v3355, %v3788
      %v3846 = vadd.f32 %v3358, %v3791
      %v3847 = vadd.f32 %v3360, %v3793
      %v3848 = vadd.f32 %v3363, %v3796
      %v3849 = vadd.f32 %v3365, %v3798
      %v3850 = vadd.f32 %v3368, %v3801
      %v3851 = vadd.f32 %v3370, %v3803
      %v3852 = vadd.f32 %v3373, %v3806
      %v3853 = vadd.f32 %v3375, %v3808
      %v3854 = vadd.f32 %v3378, %v3811
      %v3855 = vadd.f32 %v3380, %v3813
      %v3856 = vadd.f32 %v3383, %v3816
      %v3857 = vadd.f32 %v3385, %v3818
      %v3858 = vadd.f32 %v3388, %v3821
      %v3859 = vadd.f32 %v3390, %v3823
      %v3860 = vadd.f32 %v3393, %v3826
      %v3861 = vadd.f32 %v3395, %v3828
      %v3862 = vadd.f32 %v3398, %v3831
      %v3863 = vadd.f32 %v3400, %v3833
      %v3864 = vadd.f32 %v3403, %v3836
      %v3865 = vadd.f32 %v3405, %v3838
      %v3866 = vld [vmem:[#allocation3 + $0x30] sm:$0xff]
      %v3867 = vld [vmem:[#allocation3 + $0x38] sm:$0xff]
      %v3868 = vld [vmem:[#allocation3 + $0x40] sm:$0xff]
      %v3869 = vld [vmem:[#allocation3 + $0x48] sm:$0xff]
      %v3870 = vld [vmem:[#allocation3 + $0x50] sm:$0xff]
      %v3871 = vld [vmem:[#allocation3 + $0x58] sm:$0xff]
      %v3872 = vld [vmem:[#allocation3 + $0x60] sm:$0xff]
      %v3873 = vld [vmem:[#allocation3 + $0x68] sm:$0xff]
      %v3874 = vld [vmem:[#allocation3 + $0x70] sm:$0xff]
      %v3875 = vld [vmem:[#allocation3 + $0x78] sm:$0xff]
      %v3876 = vld [vmem:[#allocation3 + $0x80] sm:$0xff]
      %v3877 = vld [vmem:[#allocation3 + $0x88] sm:$0xff]
      %v3878 = vld [vmem:[#allocation3 + $0x90] sm:$0xff]
      %v3879 = vld [vmem:[#allocation3 + $0x98] sm:$0xff]
      %v3880 = vld [vmem:[#allocation3 + $0xa0] sm:$0xff]
      %v3881 = vld [vmem:[#allocation3 + $0xa8] sm:$0xff]
      %v3882 = vld [vmem:[#allocation3 + $0xb0] sm:$0xff]
      %v3883 = vld [vmem:[#allocation3 + $0xb8] sm:$0xff]
      %v3884 = vld [vmem:[#allocation3 + $0xc0] sm:$0xff]
      %v3885 = vld [vmem:[#allocation3 + $0xc8] sm:$0xff]
      %v3886 = vld [vmem:[#allocation3 + $0xd0] sm:$0xff]
      %v3887 = vld [vmem:[#allocation3 + $0xd8] sm:$0xff]
      %v3888 = vld [vmem:[#allocation3 + $0xe0] sm:$0xff]
      %v3889 = vld [vmem:[#allocation3 + $0xe8] sm:$0xff]
      %v3890 = vld [vmem:[#allocation3 + $0xf0] sm:$0xff]
      %v3891 = vld [vmem:[#allocation3 + $0xf8] sm:$0xff]
      %s3892 = scalar_lea.vmem %s4, 384
      %v3893 = vld [vmem:[%s3892] sm:$0xf]
      %v3894 = vld [vmem:[%s3892 + $0x4] sm:$0xf]
      %v3895 = vld [vmem:[%s3892 + $0x8] sm:$0xf]
      %v3896 = vld [vmem:[%s3892 + $0xc] sm:$0xf]
      %v3897 = vld [vmem:[%s3892 + $0x10] sm:$0xf]
      %v3898 = vld [vmem:[%s3892 + $0x14] sm:$0xf]
      %v3899 = vld [vmem:[%s3892 + $0x18] sm:$0xf]
      %v3900 = vld [vmem:[%s3892 + $0x1c] sm:$0xf]
      %v3901 = vld [vmem:[%s3892 + $0x20] sm:$0xf]
      %v3902 = vld [vmem:[%s3892 + $0x24] sm:$0xf]
      %v3903 = vld [vmem:[%s3892 + $0x28] sm:$0xf]
      %v3904 = vld [vmem:[%s3892 + $0x2c] sm:$0xf]
      %v3905 = vld [vmem:[%s3892 + $0x30] sm:$0xf]
      %v3906 = vld [vmem:[%s3892 + $0x34] sm:$0xf]
      %v3907 = vld [vmem:[%s3892 + $0x38] sm:$0xf]
      %v3908 = vld [vmem:[%s3892 + $0x3c] sm:$0xf]
      %v3909 = vld [vmem:[%s3892 + $0x40] sm:$0xf]
      %v3910 = vld [vmem:[%s3892 + $0x44] sm:$0xf]
      %v3911 = vld [vmem:[%s3892 + $0x48] sm:$0xf]
      %v3912 = vld [vmem:[%s3892 + $0x4c] sm:$0xf]
      %v3913 = vld [vmem:[%s3892 + $0x50] sm:$0xf]
      %v3914 = vld [vmem:[%s3892 + $0x54] sm:$0xf]
      %v3915 = vld [vmem:[%s3892 + $0x58] sm:$0xf]
      %v3916 = vld [vmem:[%s3892 + $0x5c] sm:$0xf]
      %v3917 = vld [vmem:[%s3892 + $0x60] sm:$0xf]
      %v3918 = vld [vmem:[%s3892 + $0x64] sm:$0xf]
      %v3919 = vld [vmem:[%s3892 + $0x68] sm:$0xf]
      %v3920 = vld [vmem:[%s3892 + $0x6c] sm:$0xf]
      %v3921 = vld [vmem:[%s3892 + $0x70] sm:$0xf]
      %v3922 = vld [vmem:[%s3892 + $0x74] sm:$0xf]
      %v3923 = vld [vmem:[%s3892 + $0x78] sm:$0xf]
      %v3924 = vld [vmem:[%s3892 + $0x7c] sm:$0xf]
      %v3951 = vunpack.c.l.b16 %v3866
      %v3952 = vunpack.c.h.b16 %v3866
      %v3953 = vunpack.c.l.b16 %v3867
      %v3954 = vunpack.c.h.b16 %v3867
      %v3955 = vunpack.c.l.b16 %v3868
      %v3956 = vunpack.c.h.b16 %v3868
      %v3957 = vunpack.c.l.b16 %v3869
      %v3958 = vunpack.c.h.b16 %v3869
      %v3959 = vunpack.c.l.b16 %v3870
      %v3960 = vunpack.c.h.b16 %v3870
      %v3961 = vunpack.c.l.b16 %v3871
      %v3962 = vunpack.c.h.b16 %v3871
      %v3963 = vunpack.c.l.b16 %v3872
      %v3964 = vunpack.c.h.b16 %v3872
      %v3965 = vunpack.c.l.b16 %v3873
      %v3966 = vunpack.c.h.b16 %v3873
      %v3967 = vunpack.c.l.b16 %v3874
      %v3968 = vunpack.c.h.b16 %v3874
      %v3969 = vunpack.c.l.b16 %v3875
      %v3970 = vunpack.c.h.b16 %v3875
      %v3971 = vunpack.c.l.b16 %v3876
      %v3972 = vunpack.c.h.b16 %v3876
      %v3973 = vunpack.c.l.b16 %v3877
      %v3974 = vunpack.c.h.b16 %v3877
      %v3975 = vunpack.c.l.b16 %v3878
      %v3976 = vunpack.c.h.b16 %v3878
      %v3977 = vunpack.c.l.b16 %v3879
      %v3978 = vunpack.c.h.b16 %v3879
      %v3979 = vunpack.c.l.b16 %v3880
      %v3980 = vunpack.c.h.b16 %v3880
      %v3981 = vunpack.c.l.b16 %v3881
      %v3982 = vunpack.c.h.b16 %v3881
      %v3983 = vunpack.c.l.b16 %v3882
      %v3984 = vunpack.c.h.b16 %v3882
      %v3985 = vunpack.c.l.b16 %v3883
      %v3986 = vunpack.c.h.b16 %v3883
      %v3987 = vunpack.c.l.b16 %v3884
      %v3988 = vunpack.c.h.b16 %v3884
      %v3989 = vunpack.c.l.b16 %v3885
      %v3990 = vunpack.c.h.b16 %v3885
      %v3991 = vunpack.c.l.b16 %v3886
      %v3992 = vunpack.c.h.b16 %v3886
      %v3993 = vunpack.c.l.b16 %v3887
      %v3994 = vunpack.c.h.b16 %v3887
      %v3995 = vunpack.c.l.b16 %v3888
      %v3996 = vunpack.c.h.b16 %v3888
      %v3997 = vunpack.c.l.b16 %v3889
      %v3998 = vunpack.c.h.b16 %v3889
      %v3999 = vunpack.c.l.b16 %v3890
      %v4000 = vunpack.c.h.b16 %v3890
      %v4001 = vunpack.c.l.b16 %v3891
      %v4002 = vunpack.c.h.b16 %v3891
      %v4003 = vpack.c.b16 %v3953, %v3951
      %v4004 = vpack.c.b16 %v3954, %v3952
      %v4005 = vpack.c.b16 %v3957, %v3955
      %v4006 = vpack.c.b16 %v3958, %v3956
      %v4007 = vpack.c.b16 %v3961, %v3959
      %v4008 = vpack.c.b16 %v3962, %v3960
      %v4009 = vpack.c.b16 %v3965, %v3963
      %v4010 = vpack.c.b16 %v3966, %v3964
      %v4011 = vpack.c.b16 %v3969, %v3967
      %v4012 = vpack.c.b16 %v3970, %v3968
      %v4013 = vpack.c.b16 %v3973, %v3971
      %v4014 = vpack.c.b16 %v3974, %v3972
      %v4015 = vpack.c.b16 %v3977, %v3975
      %v4016 = vpack.c.b16 %v3978, %v3976
      %v4017 = vpack.c.b16 %v3981, %v3979
      %v4018 = vpack.c.b16 %v3982, %v3980
      %v4019 = vpack.c.b16 %v3985, %v3983
      %v4020 = vpack.c.b16 %v3986, %v3984
      %v4021 = vpack.c.b16 %v3989, %v3987
      %v4022 = vpack.c.b16 %v3990, %v3988
      %v4023 = vpack.c.b16 %v3993, %v3991
      %v4024 = vpack.c.b16 %v3994, %v3992
      %v4025 = vpack.c.b16 %v3997, %v3995
      %v4026 = vpack.c.b16 %v3998, %v3996
      %v4027 = vpack.c.b16 %v4001, %v3999
      %v4028 = vpack.c.b16 %v4002, %v4000
      %v4087 = vunpack.c.l.b16 %v3893
      %v4088 = vunpack.c.l.b16 %v3894
      %v4089 = vunpack.c.l.b16 %v3895
      %v4090 = vunpack.c.l.b16 %v3896
      %v4091 = vunpack.c.l.b16 %v3897
      %v4092 = vunpack.c.l.b16 %v3898
      %v4093 = vunpack.c.l.b16 %v3899
      %v4094 = vunpack.c.l.b16 %v3900
      %v4095 = vunpack.c.l.b16 %v3901
      %v4096 = vunpack.c.l.b16 %v3902
      %v4097 = vunpack.c.l.b16 %v3903
      %v4098 = vunpack.c.l.b16 %v3904
      %v4099 = vunpack.c.l.b16 %v3905
      %v4100 = vunpack.c.l.b16 %v3906
      %v4101 = vunpack.c.l.b16 %v3907
      %v4102 = vunpack.c.l.b16 %v3908
      %v4103 = vunpack.c.l.b16 %v3909
      %v4104 = vunpack.c.l.b16 %v3910
      %v4105 = vunpack.c.l.b16 %v3911
      %v4106 = vunpack.c.l.b16 %v3912
      %v4107 = vunpack.c.l.b16 %v3913
      %v4108 = vunpack.c.l.b16 %v3914
      %v4109 = vunpack.c.l.b16 %v3915
      %v4110 = vunpack.c.l.b16 %v3916
      %v4111 = vunpack.c.l.b16 %v3917
      %v4112 = vunpack.c.l.b16 %v3918
      %v4113 = vunpack.c.l.b16 %v3919
      %v4114 = vunpack.c.l.b16 %v3920
      %v4115 = vunpack.c.l.b16 %v3921
      %v4116 = vunpack.c.l.b16 %v3922
      %v4117 = vunpack.c.l.b16 %v3923
      %v4118 = vunpack.c.l.b16 %v3924
      %v4119 = vpack.c.b16 %v4088, %v4087
      %v4120 = vpack.c.b16 %v4090, %v4089
      %v4121 = vpack.c.b16 %v4092, %v4091
      %v4122 = vpack.c.b16 %v4094, %v4093
      %v4123 = vpack.c.b16 %v4096, %v4095
      %v4124 = vpack.c.b16 %v4098, %v4097
      %v4125 = vpack.c.b16 %v4100, %v4099
      %v4126 = vpack.c.b16 %v4102, %v4101
      %v4127 = vpack.c.b16 %v4104, %v4103
      %v4128 = vpack.c.b16 %v4106, %v4105
      %v4129 = vpack.c.b16 %v4108, %v4107
      %v4130 = vpack.c.b16 %v4110, %v4109
      %v4131 = vpack.c.b16 %v4112, %v4111
      %v4132 = vpack.c.b16 %v4114, %v4113
      %v4133 = vpack.c.b16 %v4116, %v4115
      %v4134 = vpack.c.b16 %v4118, %v4117
      %4151 = vmatpush.bf16.msra.mxu0 %v4126
      %4152 = vmatpush.bf16.msra.mxu0 %v4125
      %4153 = vmatpush.bf16.msra.mxu0 %v4124
      %4154 = vmatpush.bf16.msra.mxu0 %v4123
      %4155 = vmatpush.bf16.msra.mxu0 %v4122
      %4156 = vmatpush.bf16.msra.mxu0 %v4121
      %4157 = vmatpush.bf16.msra.mxu0 %v4120
      %4158 = vmatpush.bf16.msra.mxu0 %v4119
      %4159 = vmatmul.bf16.gmra.mxu0 %v4003
      %v4160 = vpop.f32.mrf.mxu0
      %v4161 = vadd.f32 0.0, %v4160
      %v4162 = vpop.f32.mrf.mxu0
      %v4163 = vadd.f32 0.0, %v4162
      %4164 = vmatmul.bf16.gmra.mxu0 %v4005
      %v4165 = vpop.f32.mrf.mxu0
      %v4166 = vadd.f32 0.0, %v4165
      %v4167 = vpop.f32.mrf.mxu0
      %v4168 = vadd.f32 0.0, %v4167
      %4169 = vmatmul.bf16.gmra.mxu0 %v4007
      %v4170 = vpop.f32.mrf.mxu0
      %v4171 = vadd.f32 0.0, %v4170
      %v4172 = vpop.f32.mrf.mxu0
      %v4173 = vadd.f32 0.0, %v4172
      %4174 = vmatmul.bf16.gmra.mxu0 %v4009
      %v4175 = vpop.f32.mrf.mxu0
      %v4176 = vadd.f32 0.0, %v4175
      %v4177 = vpop.f32.mrf.mxu0
      %v4178 = vadd.f32 0.0, %v4177
      %4179 = vmatmul.bf16.gmra.mxu0 %v4011
      %v4180 = vpop.f32.mrf.mxu0
      %v4181 = vadd.f32 0.0, %v4180
      %v4182 = vpop.f32.mrf.mxu0
      %v4183 = vadd.f32 0.0, %v4182
      %4184 = vmatmul.bf16.gmra.mxu0 %v4013
      %v4185 = vpop.f32.mrf.mxu0
      %v4186 = vadd.f32 0.0, %v4185
      %v4187 = vpop.f32.mrf.mxu0
      %v4188 = vadd.f32 0.0, %v4187
      %4189 = vmatmul.bf16.gmra.mxu0 %v4015
      %v4190 = vpop.f32.mrf.mxu0
      %v4191 = vadd.f32 0.0, %v4190
      %v4192 = vpop.f32.mrf.mxu0
      %v4193 = vadd.f32 0.0, %v4192
      %4194 = vmatmul.bf16.gmra.mxu0 %v4017
      %v4195 = vpop.f32.mrf.mxu0
      %v4196 = vadd.f32 0.0, %v4195
      %v4197 = vpop.f32.mrf.mxu0
      %v4198 = vadd.f32 0.0, %v4197
      %4199 = vmatmul.bf16.gmra.mxu0 %v4019
      %v4200 = vpop.f32.mrf.mxu0
      %v4201 = vadd.f32 0.0, %v4200
      %v4202 = vpop.f32.mrf.mxu0
      %v4203 = vadd.f32 0.0, %v4202
      %4204 = vmatmul.bf16.gmra.mxu0 %v4021
      %v4205 = vpop.f32.mrf.mxu0
      %v4206 = vadd.f32 0.0, %v4205
      %v4207 = vpop.f32.mrf.mxu0
      %v4208 = vadd.f32 0.0, %v4207
      %4209 = vmatmul.bf16.gmra.mxu0 %v4023
      %v4210 = vpop.f32.mrf.mxu0
      %v4211 = vadd.f32 0.0, %v4210
      %v4212 = vpop.f32.mrf.mxu0
      %v4213 = vadd.f32 0.0, %v4212
      %4214 = vmatmul.bf16.gmra.mxu0 %v4025
      %v4215 = vpop.f32.mrf.mxu0
      %v4216 = vadd.f32 0.0, %v4215
      %v4217 = vpop.f32.mrf.mxu0
      %v4218 = vadd.f32 0.0, %v4217
      %4219 = vmatmul.bf16.gmra.mxu0 %v4027
      %v4220 = vpop.f32.mrf.mxu0
      %v4221 = vadd.f32 0.0, %v4220
      %v4222 = vpop.f32.mrf.mxu0
      %v4223 = vadd.f32 0.0, %v4222
      %4224 = vdwg.mxu0
      %4225 = vmatpush.bf16.msra.mxu0 %v4134
      %4226 = vmatpush.bf16.msra.mxu0 %v4133
      %4227 = vmatpush.bf16.msra.mxu0 %v4132
      %4228 = vmatpush.bf16.msra.mxu0 %v4131
      %4229 = vmatpush.bf16.msra.mxu0 %v4130
      %4230 = vmatpush.bf16.msra.mxu0 %v4129
      %4231 = vmatpush.bf16.msra.mxu0 %v4128
      %4232 = vmatpush.bf16.msra.mxu0 %v4127
      %4233 = vmatmul.bf16.gmra.mxu0 %v4004
      %v4234 = vpop.f32.mrf.mxu0
      %v4235 = vadd.f32 %v4161, %v4234
      %v4236 = vpop.f32.mrf.mxu0
      %v4237 = vadd.f32 %v4163, %v4236
      %4238 = vmatmul.bf16.gmra.mxu0 %v4006
      %v4239 = vpop.f32.mrf.mxu0
      %v4240 = vadd.f32 %v4166, %v4239
      %v4241 = vpop.f32.mrf.mxu0
      %v4242 = vadd.f32 %v4168, %v4241
      %4243 = vmatmul.bf16.gmra.mxu0 %v4008
      %v4244 = vpop.f32.mrf.mxu0
      %v4245 = vadd.f32 %v4171, %v4244
      %v4246 = vpop.f32.mrf.mxu0
      %v4247 = vadd.f32 %v4173, %v4246
      %4248 = vmatmul.bf16.gmra.mxu0 %v4010
      %v4249 = vpop.f32.mrf.mxu0
      %v4250 = vadd.f32 %v4176, %v4249
      %v4251 = vpop.f32.mrf.mxu0
      %v4252 = vadd.f32 %v4178, %v4251
      %4253 = vmatmul.bf16.gmra.mxu0 %v4012
      %v4254 = vpop.f32.mrf.mxu0
      %v4255 = vadd.f32 %v4181, %v4254
      %v4256 = vpop.f32.mrf.mxu0
      %v4257 = vadd.f32 %v4183, %v4256
      %4258 = vmatmul.bf16.gmra.mxu0 %v4014
      %v4259 = vpop.f32.mrf.mxu0
      %v4260 = vadd.f32 %v4186, %v4259
      %v4261 = vpop.f32.mrf.mxu0
      %v4262 = vadd.f32 %v4188, %v4261
      %4263 = vmatmul.bf16.gmra.mxu0 %v4016
      %v4264 = vpop.f32.mrf.mxu0
      %v4265 = vadd.f32 %v4191, %v4264
      %v4266 = vpop.f32.mrf.mxu0
      %v4267 = vadd.f32 %v4193, %v4266
      %4268 = vmatmul.bf16.gmra.mxu0 %v4018
      %v4269 = vpop.f32.mrf.mxu0
      %v4270 = vadd.f32 %v4196, %v4269
      %v4271 = vpop.f32.mrf.mxu0
      %v4272 = vadd.f32 %v4198, %v4271
      %4273 = vmatmul.bf16.gmra.mxu0 %v4020
      %v4274 = vpop.f32.mrf.mxu0
      %v4275 = vadd.f32 %v4201, %v4274
      %v4276 = vpop.f32.mrf.mxu0
      %v4277 = vadd.f32 %v4203, %v4276
      %4278 = vmatmul.bf16.gmra.mxu0 %v4022
      %v4279 = vpop.f32.mrf.mxu0
      %v4280 = vadd.f32 %v4206, %v4279
      %v4281 = vpop.f32.mrf.mxu0
      %v4282 = vadd.f32 %v4208, %v4281
      %4283 = vmatmul.bf16.gmra.mxu0 %v4024
      %v4284 = vpop.f32.mrf.mxu0
      %v4285 = vadd.f32 %v4211, %v4284
      %v4286 = vpop.f32.mrf.mxu0
      %v4287 = vadd.f32 %v4213, %v4286
      %4288 = vmatmul.bf16.gmra.mxu0 %v4026
      %v4289 = vpop.f32.mrf.mxu0
      %v4290 = vadd.f32 %v4216, %v4289
      %v4291 = vpop.f32.mrf.mxu0
      %v4292 = vadd.f32 %v4218, %v4291
      %4293 = vmatmul.bf16.gmra.mxu0 %v4028
      %v4294 = vpop.f32.mrf.mxu0
      %v4295 = vadd.f32 %v4221, %v4294
      %v4296 = vpop.f32.mrf.mxu0
      %v4297 = vadd.f32 %v4223, %v4296
      %4298 = vdwg.mxu0
      %v4299 = vadd.f32 %v3840, %v4235
      %v4300 = vadd.f32 %v3841, %v4237
      %v4301 = vadd.f32 %v3842, %v4240
      %v4302 = vadd.f32 %v3843, %v4242
      %v4303 = vadd.f32 %v3844, %v4245
      %v4304 = vadd.f32 %v3845, %v4247
      %v4305 = vadd.f32 %v3846, %v4250
      %v4306 = vadd.f32 %v3847, %v4252
      %v4307 = vadd.f32 %v3848, %v4255
      %v4308 = vadd.f32 %v3849, %v4257
      %v4309 = vadd.f32 %v3850, %v4260
      %v4310 = vadd.f32 %v3851, %v4262
      %v4311 = vadd.f32 %v3852, %v4265
      %v4312 = vadd.f32 %v3853, %v4267
      %v4313 = vadd.f32 %v3854, %v4270
      %v4314 = vadd.f32 %v3855, %v4272
      %v4315 = vadd.f32 %v3856, %v4275
      %v4316 = vadd.f32 %v3857, %v4277
      %v4317 = vadd.f32 %v3858, %v4280
      %v4318 = vadd.f32 %v3859, %v4282
      %v4319 = vadd.f32 %v3860, %v4285
      %v4320 = vadd.f32 %v3861, %v4287
      %v4321 = vadd.f32 %v3862, %v4290
      %v4322 = vadd.f32 %v3863, %v4292
      %v4323 = vadd.f32 %v3864, %v4295
      %v4324 = vadd.f32 %v3865, %v4297
      %v4325 = vld [vmem:[%s5] sm:$0x1]
      %v4327 = vperm.slane %v4325, 0
      %v4329 = vadd.f32 %v4299, %v4327
      %v4330 = vadd.f32 %v4300, %v4327
      %v4331 = vadd.f32 %v4301, %v4327
      %v4332 = vadd.f32 %v4302, %v4327
      %v4333 = vadd.f32 %v4303, %v4327
      %v4334 = vadd.f32 %v4304, %v4327
      %v4335 = vadd.f32 %v4305, %v4327
      %v4336 = vadd.f32 %v4306, %v4327
      %v4337 = vadd.f32 %v4307, %v4327
      %v4338 = vadd.f32 %v4308, %v4327
      %v4339 = vadd.f32 %v4309, %v4327
      %v4340 = vadd.f32 %v4310, %v4327
      %v4341 = vadd.f32 %v4311, %v4327
      %v4342 = vadd.f32 %v4312, %v4327
      %v4343 = vadd.f32 %v4313, %v4327
      %v4344 = vadd.f32 %v4314, %v4327
      %v4345 = vadd.f32 %v4315, %v4327
      %v4346 = vadd.f32 %v4316, %v4327
      %v4347 = vadd.f32 %v4317, %v4327
      %v4348 = vadd.f32 %v4318, %v4327
      %v4349 = vadd.f32 %v4319, %v4327
      %v4350 = vadd.f32 %v4320, %v4327
      %v4351 = vadd.f32 %v4321, %v4327
      %v4352 = vadd.f32 %v4322, %v4327
      %v4353 = vadd.f32 %v4323, %v4327
      %v4354 = vadd.f32 %v4324, %v4327
      %vm4355 = vcmp.ge.f32.partialorder %v4329, 0.0
      %vm4356 = vcmp.ge.f32.partialorder %v4330, 0.0
      %vm4357 = vcmp.ge.f32.partialorder %v4331, 0.0
      %vm4358 = vcmp.ge.f32.partialorder %v4332, 0.0
      %vm4359 = vcmp.ge.f32.partialorder %v4333, 0.0
      %vm4360 = vcmp.ge.f32.partialorder %v4334, 0.0
      %vm4361 = vcmp.ge.f32.partialorder %v4335, 0.0
      %vm4362 = vcmp.ge.f32.partialorder %v4336, 0.0
      %vm4363 = vcmp.ge.f32.partialorder %v4337, 0.0
      %vm4364 = vcmp.ge.f32.partialorder %v4338, 0.0
      %vm4365 = vcmp.ge.f32.partialorder %v4339, 0.0
      %vm4366 = vcmp.ge.f32.partialorder %v4340, 0.0
      %vm4367 = vcmp.ge.f32.partialorder %v4341, 0.0
      %vm4368 = vcmp.ge.f32.partialorder %v4342, 0.0
      %vm4369 = vcmp.ge.f32.partialorder %v4343, 0.0
      %vm4370 = vcmp.ge.f32.partialorder %v4344, 0.0
      %vm4371 = vcmp.ge.f32.partialorder %v4345, 0.0
      %vm4372 = vcmp.ge.f32.partialorder %v4346, 0.0
      %vm4373 = vcmp.ge.f32.partialorder %v4347, 0.0
      %vm4374 = vcmp.ge.f32.partialorder %v4348, 0.0
      %vm4375 = vcmp.ge.f32.partialorder %v4349, 0.0
      %vm4376 = vcmp.ge.f32.partialorder %v4350, 0.0
      %vm4377 = vcmp.ge.f32.partialorder %v4351, 0.0
      %vm4378 = vcmp.ge.f32.partialorder %v4352, 0.0
      %vm4379 = vcmp.ge.f32.partialorder %v4353, 0.0
      %vm4380 = vcmp.ge.f32.partialorder %v4354, 0.0
      %v4381 = vld [vmem:[%s6] sm:$0x1]
      %v4383 = vperm.slane %v4381, 0
      %v4385 = vmul.f32 %v4383, %v4329
      %v4386 = vmul.f32 %v4383, %v4330
      %v4387 = vmul.f32 %v4383, %v4331
      %v4388 = vmul.f32 %v4383, %v4332
      %v4389 = vmul.f32 %v4383, %v4333
      %v4390 = vmul.f32 %v4383, %v4334
      %v4391 = vmul.f32 %v4383, %v4335
      %v4392 = vmul.f32 %v4383, %v4336
      %v4393 = vmul.f32 %v4383, %v4337
      %v4394 = vmul.f32 %v4383, %v4338
      %v4395 = vmul.f32 %v4383, %v4339
      %v4396 = vmul.f32 %v4383, %v4340
      %v4397 = vmul.f32 %v4383, %v4341
      %v4398 = vmul.f32 %v4383, %v4342
      %v4399 = vmul.f32 %v4383, %v4343
      %v4400 = vmul.f32 %v4383, %v4344
      %v4401 = vmul.f32 %v4383, %v4345
      %v4402 = vmul.f32 %v4383, %v4346
      %v4403 = vmul.f32 %v4383, %v4347
      %v4404 = vmul.f32 %v4383, %v4348
      %v4405 = vmul.f32 %v4383, %v4349
      %v4406 = vmul.f32 %v4383, %v4350
      %v4407 = vmul.f32 %v4383, %v4351
      %v4408 = vmul.f32 %v4383, %v4352
      %v4409 = vmul.f32 %v4383, %v4353
      %v4410 = vmul.f32 %v4383, %v4354
      %v4411 = vsel %vm4355, %v4329, %v4385
      %v4412 = vsel %vm4356, %v4330, %v4386
      %v4413 = vsel %vm4357, %v4331, %v4387
      %v4414 = vsel %vm4358, %v4332, %v4388
      %v4415 = vsel %vm4359, %v4333, %v4389
      %v4416 = vsel %vm4360, %v4334, %v4390
      %v4417 = vsel %vm4361, %v4335, %v4391
      %v4418 = vsel %vm4362, %v4336, %v4392
      %v4419 = vsel %vm4363, %v4337, %v4393
      %v4420 = vsel %vm4364, %v4338, %v4394
      %v4421 = vsel %vm4365, %v4339, %v4395
      %v4422 = vsel %vm4366, %v4340, %v4396
      %v4423 = vsel %vm4367, %v4341, %v4397
      %v4424 = vsel %vm4368, %v4342, %v4398
      %v4425 = vsel %vm4369, %v4343, %v4399
      %v4426 = vsel %vm4370, %v4344, %v4400
      %v4427 = vsel %vm4371, %v4345, %v4401
      %v4428 = vsel %vm4372, %v4346, %v4402
      %v4429 = vsel %vm4373, %v4347, %v4403
      %v4430 = vsel %vm4374, %v4348, %v4404
      %v4431 = vsel %vm4375, %v4349, %v4405
      %v4432 = vsel %vm4376, %v4350, %v4406
      %v4433 = vsel %vm4377, %v4351, %v4407
      %v4434 = vsel %vm4378, %v4352, %v4408
      %v4435 = vsel %vm4379, %v4353, %v4409
      %v4436 = vsel %vm4380, %v4354, %v4410
      %4450 = vrot.lane.b32.xlu0 %v4424, 64
      %v4451 = vpop.permute.xlu0 %4450
      %4452 = vrot.lane.b32.xlu0 %v4425, 64
      %v4453 = vpop.permute.xlu0 %4452
      %4454 = vrot.lane.b32.xlu0 %v4426, 64
      %v4455 = vpop.permute.xlu0 %4454
      %4456 = vrot.lane.b32.xlu0 %v4427, 64
      %v4457 = vpop.permute.xlu0 %4456
      %4458 = vrot.lane.b32.xlu0 %v4428, 64
      %v4459 = vpop.permute.xlu0 %4458
      %4460 = vrot.lane.b32.xlu0 %v4429, 64
      %v4461 = vpop.permute.xlu0 %4460
      %4462 = vrot.lane.b32.xlu0 %v4430, 64
      %v4463 = vpop.permute.xlu0 %4462
      %4464 = vrot.lane.b32.xlu0 %v4431, 64
      %v4465 = vpop.permute.xlu0 %4464
      %4466 = vrot.lane.b32.xlu0 %v4432, 64
      %v4467 = vpop.permute.xlu0 %4466
      %4468 = vrot.lane.b32.xlu0 %v4433, 64
      %v4469 = vpop.permute.xlu0 %4468
      %4470 = vrot.lane.b32.xlu0 %v4434, 64
      %v4471 = vpop.permute.xlu0 %4470
      %4472 = vrot.lane.b32.xlu0 %v4435, 64
      %v4473 = vpop.permute.xlu0 %4472
      %4474 = vrot.lane.b32.xlu0 %v4436, 64
      %v4475 = vpop.permute.xlu0 %4474
      %v4489 = vsel %vm1599, %v4411, %v4451
      %v4490 = vsel %vm1599, %v4412, %v4453
      %v4491 = vsel %vm1599, %v4413, %v4455
      %v4492 = vsel %vm1599, %v4414, %v4457
      %v4493 = vsel %vm1599, %v4415, %v4459
      %v4494 = vsel %vm1599, %v4416, %v4461
      %v4495 = vsel %vm1599, %v4417, %v4463
      %v4496 = vsel %vm1599, %v4418, %v4465
      %v4497 = vsel %vm1599, %v4419, %v4467
      %v4498 = vsel %vm1599, %v4420, %v4469
      %v4499 = vsel %vm1599, %v4421, %v4471
      %v4500 = vsel %vm1599, %v4422, %v4473
      %v4501 = vsel %vm1599, %v4423, %v4475
      %4502 = vst [vmem:[%s278] sm:$0xff] %v4489
      %4503 = vst [vmem:[%s278 + $0x8] sm:$0xff] %v4490
      %4504 = vst [vmem:[%s278 + $0x10] sm:$0xff] %v4491
      %4505 = vst [vmem:[%s278 + $0x18] sm:$0xff] %v4492
      %4506 = vst [vmem:[%s278 + $0x20] sm:$0xff] %v4493
      %4507 = vst [vmem:[%s278 + $0x28] sm:$0xff] %v4494
      %4508 = vst [vmem:[%s278 + $0x30] sm:$0xff] %v4495
      %4509 = vst [vmem:[%s278 + $0x38] sm:$0xff] %v4496
      %4510 = vst [vmem:[%s278 + $0x40] sm:$0xff] %v4497
      %4511 = vst [vmem:[%s278 + $0x48] sm:$0xff] %v4498
      %4512 = vst [vmem:[%s278 + $0x50] sm:$0xff] %v4499
      %4513 = vst [vmem:[%s278 + $0x58] sm:$0xff] %v4500
      %4514 = vst [vmem:[%s278 + $0x60] sm:$0xff] %v4501
      %p4515 = scmp.lt.s32.totalorder %s18, 1
      %s4516 = scalar_select %p4515, %s18, 1
      %s4517 = smul.addr %s4516, 13
      %s4518 = smul.addr %s4517, 8
      %s4519 = scalar_lea.vmem %s7, %s4518
      // Predicated region
      $region49: #{feature_forward.1} parent=47 // pred_check
        %p4520 = pneg %p188
      $region50: #{feature_forward.1} parent=47 // pred_check_branch
        %4522 = sbr.rel (%p4520) target = $region52
      $region51: #{feature_forward.1} parent=47 // pred_region
        _
      $region52: #{feature_forward.1} parent=47 // pred_fallthru
        _
    $region48: #{feature_forward.1} parent=5 // pred_fallthru
      _
    %p4523 = scmp.le.s32.totalorder 2, %s13
    // Predicated region
    $region53: #{feature_forward.1} parent=5 // pred_check
      %p4524 = pneg %p4523
    $region54: #{feature_forward.1} parent=5 // pred_check_branch
      %4526 = sbr.rel (%p4524) target = $region56
    $region55: #{feature_forward.1} parent=5 // pred_region
      %s4527 = ssub.s32 %s13, 2
      // Predicated region
      $region57: #{feature_forward.1} parent=55 // pred_check
        %p4528 = pneg %p194
      $region58: #{feature_forward.1} parent=55 // pred_check_branch
        %4530 = sbr.rel (%p4528) target = $region60
      $region59: #{feature_forward.1} parent=55 // pred_region
        %p4531 = scmp.lt.s32.totalorder %s19, 1
        %s4532 = scalar_select %p4531, %s19, 1
        %s4533 = smul.addr %s4532, 13
        %s4534 = smul.addr %s4533, 8
        %s4535 = scalar_lea.vmem %s7, %s4534
      $region60: #{feature_forward.1} parent=55 // pred_fallthru
        _
    $region56: #{feature_forward.1} parent=5 // pred_fallthru
      _
  $region6: #{feature_forward.1} parent=0 // loop_footer
    %s17 = sadd.s32 1, %s13
  $region7: #{feature_forward.1} parent=0 // loop_footer_branch
    %12 = sbr.rel target = $region3
  $region8: #{feature_forward.1} parent=0 // loop_exit
    _

</llo_original>
